<compile_context>
chip_gen: v7x
topology: tpu7x:2x2x1
jax: 0.10.0
libtpu: 0.0.40
codegen_flags: <defaults>
</compile_context>

<pallas_src>
import functools

import jax
import jax.numpy as jnp
from jax.experimental import pallas as pl
from jax.experimental.pallas import tpu as pltpu


# ----------------------------------------------------------------------------
# Kernel: full ResnetPointnet encoder for Bt point clouds of T points each.
# Ref order:
#   p_ref (Bt*T, D_pad),
#   w_pos, b_pos,
#   w0_0, b0_0, w1_0, b1_0, ws_0,                       (block_0, full 2H in)
#   [w0_net, w0_pool, b0, w1, b1, ws_net, ws_pool] * 4, (blocks 1..4, split)
#   w_c, b_c,
#   o_ref (Bt, c_half)
# ----------------------------------------------------------------------------
def _resnet_pointnet_kernel(Bt, T, H, *refs):
    p_ref = refs[0]
    w_pos, b_pos = refs[1], refs[2]
    w0_0, b0_0, w1_0, b1_0, ws_0 = refs[3:8]
    pool_blocks = [refs[8 + 7 * i: 8 + 7 * (i + 1)] for i in range(4)]
    w_c, b_c = refs[36], refs[37]
    o_ref = refs[38]

    M = Bt * T

    def mm(a, w_ref, b_ref=None):
        # MXU matmul; weights arrive pre-cast (f32 or bf16), accumulate in f32.
        out = jnp.dot(a.astype(w_ref.dtype), w_ref[...],
                      preferred_element_type=jnp.float32)
        if b_ref is not None:
            out = out + b_ref[...]              # (M, N) + (1, N)
        return out

    def relu(v):
        return jnp.maximum(v, 0.0)

    def pool(v):                                # (M, H) -> (Bt, H) max over T
        return jnp.max(v.reshape(Bt, T, H), axis=1)

    def per_point(v):                           # (Bt, H) -> (M, H) broadcast
        return jnp.broadcast_to(v[:, None, :], (Bt, T, H)).reshape(M, H)

    x = p_ref[...]                              # (M, D_pad) f32

    # fc_pos (K padded to a full sublane tile in the wrapper).
    net = mm(x, w_pos, b_pos)                   # (M, 2H)

    # block_0 : ResnetBlockFC(2H -> H) on the raw fc_pos output.
    h = mm(relu(net), w0_0, b0_0)
    dx = mm(relu(h), w1_0, b1_0)
    net = mm(net, ws_0) + dx                    # (M, H)

    # blocks 1..4 : cat([net, pooled]) folded into split (net / pooled) weights.
    for w0n, w0p, b0, w1, b1, wsn, wsp in pool_blocks:
        pooled = pool(net)                      # (Bt, H), pooled BEFORE block
        h = mm(relu(net), w0n, b0) + per_point(mm(relu(pooled), w0p))
        dx = mm(relu(h), w1, b1)
        net = mm(net, wsn) + per_point(mm(pooled, wsp)) + dx

    # final pool over points + batched fc_c.
    pooled = pool(net)                          # (Bt, H)
    c = mm(relu(pooled), w_c, b_c)              # (Bt, c_half)
    o_ref[...] = c.astype(o_ref.dtype)


# ----------------------------------------------------------------------------
# Wrapper: (N, T, D) point clouds -> (N, c_half) latent codes, one pallas_call.
# ----------------------------------------------------------------------------
def _run_resnet_pointnet(p, params, *, compute_dtype=jnp.float32, batch_tile=32):
    N, T, D = p.shape
    H = params["w_c"].shape[0]
    c_half = params["w_c"].shape[1]

    # Pad the point axis to a multiple of 8 (sublane tile) by duplicating a
    # point; duplicates never change the max-pooled code, so this is exact.
    T_pad = ((T + 7) // 8) * 8
    if T_pad != T:
        p = jnp.concatenate(
            [p, jnp.broadcast_to(p[:, -1:, :], (N, T_pad - T, D))], axis=1)

    # Pad the tiny point dimension (D=3) to K=8 with zeros (exact, aligns the
    # fc_pos contraction to a full sublane tile instead of a 3-deep MXU pass).
    D_pad = D if D >= 8 else 8
    w_pos = params["w_pos"]
    if D_pad != D:
        p = jnp.pad(p, ((0, 0), (0, 0), (0, D_pad - D)))
        w_pos = jnp.pad(w_pos, ((0, D_pad - D), (0, 0)))

    # Batch tile: aim for Bt*T_pad >= 256 matmul rows per grid step
    # (saturates the 128/256-wide MXU; grid steps are a sequential loop).
    if N <= batch_tile:
        Bt, N_pad = N, N
    else:
        Bt = batch_tile
        N_pad = ((N + Bt - 1) // Bt) * Bt
        if N_pad != N:
            p = jnp.concatenate(
                [p, jnp.zeros((N_pad - N, T_pad, D_pad), p.dtype)], axis=0)

    p_flat = p.reshape(N_pad * T_pad, D_pad)

    # Flatten weights; split fc_0 / shortcut of blocks 1..4 into (net, pooled)
    # halves; cast matmul weights to compute_dtype (biases stay f32).
    cd = compute_dtype
    w = lambda a: a.astype(cd)
    flat = [w(w_pos), params["b_pos"]]
    blk0 = params["blocks"][0]
    flat += [w(blk0["w0"]), blk0["b0"], w(blk0["w1"]), blk0["b1"], w(blk0["ws"])]
    for bi in range(1, 5):
        blk = params["blocks"][bi]
        flat += [w(blk["w0"][:H]), w(blk["w0"][H:]), blk["b0"],
                 w(blk["w1"]), blk["b1"],
                 w(blk["ws"][:H]), w(blk["ws"][H:])]
    flat += [w(params["w_c"]), params["b_c"]]

    def const_spec(a):
        return pl.BlockSpec(a.shape, lambda i, _n=a.ndim: (0,) * _n)

    # NOTE: weight specs have constant index maps; at realistic hidden_dim
    # (128-512) on v7x (64 MiB VMEM) consider single-buffering them
    # (pipeline_mode=pl.Buffered(1)) / setting vmem_limit_bytes with headroom.
    # TODO(synk): single-buffer constant weight BlockSpecs when hidden_dim is large.
    in_specs = [pl.BlockSpec((Bt * T_pad, D_pad), lambda i: (i, 0))]
    in_specs += [const_spec(a) for a in flat]
    out_spec = pl.BlockSpec((Bt, c_half), lambda i: (i, 0))

    out = pl.pallas_call(
        functools.partial(_resnet_pointnet_kernel, Bt, T_pad, H),
        out_shape=jax.ShapeDtypeStruct((N_pad, c_half), jnp.float32),
        grid=(N_pad // Bt,),
        in_specs=in_specs,
        out_specs=out_spec,
        compiler_params=pltpu.CompilerParams(
            dimension_semantics=("parallel",)),
    )(p_flat, *flat)
    return out[:N]


# ----------------------------------------------------------------------------
# ResnetPointnet2Stream: shared-weight encoder on both streams, concat codes.
# Streams are fused into the batch axis -> single kernel launch, single weight DMA.
# ----------------------------------------------------------------------------
def resnet_pointnet_2stream(x, params, **kwargs):
    """x: (B, 2, T, D) -> (B, c_dim) with c_dim = 2 * c_half."""
    B, S, T, D = x.shape
    c = _run_resnet_pointnet(x.reshape(B * S, T, D), params, **kwargs)
    # rows are ordered (b, stream) so this reshape == concat([c1, c2], -1).
    return c.reshape(B, S * c.shape[-1])


# ----------------------------------------------------------------------------
# Parameters (deterministic, PyTorch-default-like uniform init).
# Weights stored pre-transposed as (in, out); biases as (1, out).
# ----------------------------------------------------------------------------
def _make_linear(key, fan_in, fan_out, bias=True):
    kw, kb = jax.random.split(key)
    bound = 1.0 / jnp.sqrt(jnp.float32(fan_in))
    w = jax.random.uniform(kw, (fan_in, fan_out), jnp.float32, -bound, bound)
    if bias:
        b = jax.random.uniform(kb, (1, fan_out), jnp.float32, -bound, bound)
        return w, b
    return w


def make_resnet_pointnet_params(key, c_dim, dim, hidden_dim):
    H = hidden_dim
    keys = jax.random.split(key, 2 + 5 * 3)
    w_pos, b_pos = _make_linear(keys[0], dim, 2 * H)
    blocks = []
    for bi in range(5):
        k0, k1, ks = keys[2 + 3 * bi], keys[3 + 3 * bi], keys[4 + 3 * bi]
        w0, b0 = _make_linear(k0, 2 * H, H)
        # NOTE: reference ResnetBlockFC zero-inits fc_1.weight; we use small
        # random values so the kernel exercises the full compute path.
        w1, b1 = _make_linear(k1, H, H)
        ws = _make_linear(ks, 2 * H, H, bias=False)
        blocks.append(dict(w0=w0, b0=b0, w1=w1, b1=b1, ws=ws))
    w_c, b_c = _make_linear(keys[1], H, c_dim)
    return dict(w_pos=w_pos, b_pos=b_pos, blocks=blocks, w_c=w_c, b_c=b_c)


# ----------------------------------------------------------------------------
# Pure-JAX reference (un-split weights, explicit concat) for validation.
# ----------------------------------------------------------------------------
def _ref_resnet_pointnet(p, params, compute_dtype=jnp.float32):
    def mm(a, w_):
        return jnp.dot(a.astype(compute_dtype), w_.astype(compute_dtype),
                       preferred_element_type=jnp.float32)

    def lin(a, w_, b=None):
        out = mm(a, w_)
        return out + b if b is not None else out

    def block(v, blk):
        h = lin(jnp.maximum(v, 0.0), blk["w0"], blk["b0"])
        dx = lin(jnp.maximum(h, 0.0), blk["w1"], blk["b1"])
        return lin(v, blk["ws"]) + dx

    net = lin(p, params["w_pos"], params["b_pos"])
    net = block(net, params["blocks"][0])
    for bi in range(1, 5):
        pooled = jnp.max(net, axis=1, keepdims=True)
        pooled = jnp.broadcast_to(pooled, net.shape)
        net = block(jnp.concatenate([net, pooled], axis=-1),
                    params["blocks"][bi])
    net = jnp.max(net, axis=1)
    return lin(jnp.maximum(net, 0.0), params["w_c"], params["b_c"])


def _ref_2stream(x, params, compute_dtype=jnp.float32):
    c1 = _ref_resnet_pointnet(x[:, 0], params, compute_dtype)
    c2 = _ref_resnet_pointnet(x[:, 1], params, compute_dtype)
    return jnp.concatenate([c1, c2], axis=-1)


if __name__ == "__main__":
    # Small shapes consistent with the module's forward:
    # batch=2, two streams, T=8 points, dim=3, hidden_dim=32, c_dim=16.
    B, T, D, HIDDEN, C_DIM = 2, 8, 3, 32, 16
    c_half = C_DIM // 2

    key = jax.random.PRNGKey(0)
    k_param, k_x = jax.random.split(key)
    params = make_resnet_pointnet_params(k_param, c_half, D, HIDDEN)
    x = jax.random.normal(k_x, (B, 2, T, D), jnp.float32)

    # f32 MXU path: strict check against the pure-JAX reference.
    out = jax.block_until_ready(resnet_pointnet_2stream(x, params))
    assert out.shape == (B, C_DIM), out.shape
    ref = _ref_2stream(x, params)
    assert jnp.allclose(out, ref, atol=1e-4, rtol=1e-4), "f32 mismatch vs reference"

    # bf16 MXU inputs with f32 accumulation (v6e/v7x fast path), checked
    # against a reference using the same casts.
    out_bf = jax.block_until_ready(
        resnet_pointnet_2stream(x, params, compute_dtype=jnp.bfloat16))
    ref_bf = _ref_2stream(x, params, compute_dtype=jnp.bfloat16)
    assert jnp.allclose(out_bf, ref_bf, atol=5e-2, rtol=5e-2), "bf16 mismatch vs reference"

    print("KERNEL_OK")
</pallas_src>

<mosaic_0001>
module attributes {stable_mosaic.version = 11 : i64} {
  func.func @_resnet_pointnet_kernel(%arg0: i32, %arg1: memref<32x8xf32, #tpu.memory_space<vmem>>, %arg2: memref<8x64xf32, #tpu.memory_space<vmem>>, %arg3: memref<1x64xf32, #tpu.memory_space<vmem>>, %arg4: memref<64x32xf32, #tpu.memory_space<vmem>>, %arg5: memref<1x32xf32, #tpu.memory_space<vmem>>, %arg6: memref<32x32xf32, #tpu.memory_space<vmem>>, %arg7: memref<1x32xf32, #tpu.memory_space<vmem>>, %arg8: memref<64x32xf32, #tpu.memory_space<vmem>>, %arg9: memref<32x32xf32, #tpu.memory_space<vmem>>, %arg10: memref<32x32xf32, #tpu.memory_space<vmem>>, %arg11: memref<1x32xf32, #tpu.memory_space<vmem>>, %arg12: memref<32x32xf32, #tpu.memory_space<vmem>>, %arg13: memref<1x32xf32, #tpu.memory_space<vmem>>, %arg14: memref<32x32xf32, #tpu.memory_space<vmem>>, %arg15: memref<32x32xf32, #tpu.memory_space<vmem>>, %arg16: memref<32x32xf32, #tpu.memory_space<vmem>>, %arg17: memref<32x32xf32, #tpu.memory_space<vmem>>, %arg18: memref<1x32xf32, #tpu.memory_space<vmem>>, %arg19: memref<32x32xf32, #tpu.memory_space<vmem>>, %arg20: memref<1x32xf32, #tpu.memory_space<vmem>>, %arg21: memref<32x32xf32, #tpu.memory_space<vmem>>, %arg22: memref<32x32xf32, #tpu.memory_space<vmem>>, %arg23: memref<32x32xf32, #tpu.memory_space<vmem>>, %arg24: memref<32x32xf32, #tpu.memory_space<vmem>>, %arg25: memref<1x32xf32, #tpu.memory_space<vmem>>, %arg26: memref<32x32xf32, #tpu.memory_space<vmem>>, %arg27: memref<1x32xf32, #tpu.memory_space<vmem>>, %arg28: memref<32x32xf32, #tpu.memory_space<vmem>>, %arg29: memref<32x32xf32, #tpu.memory_space<vmem>>, %arg30: memref<32x32xf32, #tpu.memory_space<vmem>>, %arg31: memref<32x32xf32, #tpu.memory_space<vmem>>, %arg32: memref<1x32xf32, #tpu.memory_space<vmem>>, %arg33: memref<32x32xf32, #tpu.memory_space<vmem>>, %arg34: memref<1x32xf32, #tpu.memory_space<vmem>>, %arg35: memref<32x32xf32, #tpu.memory_space<vmem>>, %arg36: memref<32x32xf32, #tpu.memory_space<vmem>>, %arg37: memref<32x8xf32, #tpu.memory_space<vmem>>, %arg38: memref<1x8xf32, #tpu.memory_space<vmem>>, %arg39: memref<4x8xf32, #tpu.memory_space<vmem>>) attributes {dimension_semantics = [#tpu.dimension_semantics<parallel>], iteration_bounds = array<i64: 1>, scalar_prefetch = 0 : i64, scratch_operands = 0 : i64, tpu.core_type = #tpu.core_type<tc>, window_params = [{transform_indices = @transform_0, window_bounds = array<i64: 32, 8>}, {pipeline_mode = #tpu.pipeline_mode<synchronous>, transform_indices = @transform_1, window_bounds = array<i64: 8, 64>}, {pipeline_mode = #tpu.pipeline_mode<synchronous>, transform_indices = @transform_2, window_bounds = array<i64: 1, 64>}, {pipeline_mode = #tpu.pipeline_mode<synchronous>, transform_indices = @transform_3, window_bounds = array<i64: 64, 32>}, {pipeline_mode = #tpu.pipeline_mode<synchronous>, transform_indices = @transform_4, window_bounds = array<i64: 1, 32>}, {pipeline_mode = #tpu.pipeline_mode<synchronous>, transform_indices = @transform_5, window_bounds = array<i64: 32, 32>}, {pipeline_mode = #tpu.pipeline_mode<synchronous>, transform_indices = @transform_6, window_bounds = array<i64: 1, 32>}, {pipeline_mode = #tpu.pipeline_mode<synchronous>, transform_indices = @transform_7, window_bounds = array<i64: 64, 32>}, {pipeline_mode = #tpu.pipeline_mode<synchronous>, transform_indices = @transform_8, window_bounds = array<i64: 32, 32>}, {pipeline_mode = #tpu.pipeline_mode<synchronous>, transform_indices = @transform_9, window_bounds = array<i64: 32, 32>}, {pipeline_mode = #tpu.pipeline_mode<synchronous>, transform_indices = @transform_10, window_bounds = array<i64: 1, 32>}, {pipeline_mode = #tpu.pipeline_mode<synchronous>, transform_indices = @transform_11, window_bounds = array<i64: 32, 32>}, {pipeline_mode = #tpu.pipeline_mode<synchronous>, transform_indices = @transform_12, window_bounds = array<i64: 1, 32>}, {pipeline_mode = #tpu.pipeline_mode<synchronous>, transform_indices = @transform_13, window_bounds = array<i64: 32, 32>}, {pipeline_mode = #tpu.pipeline_mode<synchronous>, transform_indices = @transform_14, window_bounds = array<i64: 32, 32>}, {pipeline_mode = #tpu.pipeline_mode<synchronous>, transform_indices = @transform_15, window_bounds = array<i64: 32, 32>}, {pipeline_mode = #tpu.pipeline_mode<synchronous>, transform_indices = @transform_16, window_bounds = array<i64: 32, 32>}, {pipeline_mode = #tpu.pipeline_mode<synchronous>, transform_indices = @transform_17, window_bounds = array<i64: 1, 32>}, {pipeline_mode = #tpu.pipeline_mode<synchronous>, transform_indices = @transform_18, window_bounds = array<i64: 32, 32>}, {pipeline_mode = #tpu.pipeline_mode<synchronous>, transform_indices = @transform_19, window_bounds = array<i64: 1, 32>}, {pipeline_mode = #tpu.pipeline_mode<synchronous>, transform_indices = @transform_20, window_bounds = array<i64: 32, 32>}, {pipeline_mode = #tpu.pipeline_mode<synchronous>, transform_indices = @transform_21, window_bounds = array<i64: 32, 32>}, {pipeline_mode = #tpu.pipeline_mode<synchronous>, transform_indices = @transform_22, window_bounds = array<i64: 32, 32>}, {pipeline_mode = #tpu.pipeline_mode<synchronous>, transform_indices = @transform_23, window_bounds = array<i64: 32, 32>}, {pipeline_mode = #tpu.pipeline_mode<synchronous>, transform_indices = @transform_24, window_bounds = array<i64: 1, 32>}, {pipeline_mode = #tpu.pipeline_mode<synchronous>, transform_indices = @transform_25, window_bounds = array<i64: 32, 32>}, {pipeline_mode = #tpu.pipeline_mode<synchronous>, transform_indices = @transform_26, window_bounds = array<i64: 1, 32>}, {pipeline_mode = #tpu.pipeline_mode<synchronous>, transform_indices = @transform_27, window_bounds = array<i64: 32, 32>}, {pipeline_mode = #tpu.pipeline_mode<synchronous>, transform_indices = @transform_28, window_bounds = array<i64: 32, 32>}, {pipeline_mode = #tpu.pipeline_mode<synchronous>, transform_indices = @transform_29, window_bounds = array<i64: 32, 32>}, {pipeline_mode = #tpu.pipeline_mode<synchronous>, transform_indices = @transform_30, window_bounds = array<i64: 32, 32>}, {pipeline_mode = #tpu.pipeline_mode<synchronous>, transform_indices = @transform_31, window_bounds = array<i64: 1, 32>}, {pipeline_mode = #tpu.pipeline_mode<synchronous>, transform_indices = @transform_32, window_bounds = array<i64: 32, 32>}, {pipeline_mode = #tpu.pipeline_mode<synchronous>, transform_indices = @transform_33, window_bounds = array<i64: 1, 32>}, {pipeline_mode = #tpu.pipeline_mode<synchronous>, transform_indices = @transform_34, window_bounds = array<i64: 32, 32>}, {pipeline_mode = #tpu.pipeline_mode<synchronous>, transform_indices = @transform_35, window_bounds = array<i64: 32, 32>}, {pipeline_mode = #tpu.pipeline_mode<synchronous>, transform_indices = @transform_36, window_bounds = array<i64: 32, 8>}, {pipeline_mode = #tpu.pipeline_mode<synchronous>, transform_indices = @transform_37, window_bounds = array<i64: 1, 8>}, {transform_indices = @transform_38, window_bounds = array<i64: 4, 8>}]} {
    %c0 = arith.constant 0 : index
    %c0_0 = arith.constant 0 : index
    %0 = vector.load %arg1[%c0, %c0_0] : memref<32x8xf32, #tpu.memory_space<vmem>>, vector<32x8xf32>
    %c0_1 = arith.constant 0 : index
    %c0_2 = arith.constant 0 : index
    %1 = vector.load %arg2[%c0_1, %c0_2] : memref<8x64xf32, #tpu.memory_space<vmem>>, vector<8x64xf32>
    %cst = arith.constant dense<0.000000e+00> : vector<32x64xf32>
    %2 = tpu.matmul %0, %1, %cst {dimension_numbers = #tpu.dot_dimension_numbers<[1], [0], [0], [1], [0, 0, 1, 1], [], []>} : vector<32x8xf32>, vector<8x64xf32>, vector<32x64xf32> -> vector<32x64xf32>
    %c0_3 = arith.constant 0 : index
    %c0_4 = arith.constant 0 : index
    %3 = vector.load %arg3[%c0_3, %c0_4] : memref<1x64xf32, #tpu.memory_space<vmem>>, vector<1x64xf32>
    %4 = vector.broadcast %3 : vector<1x64xf32> to vector<32x64xf32>
    %5 = arith.addf %2, %4 : vector<32x64xf32>
    %cst_5 = arith.constant 0.000000e+00 : f32
    %6 = vector.broadcast %cst_5 : f32 to vector<32x64xf32>
    %7 = arith.maximumf %5, %6 : vector<32x64xf32>
    %c0_6 = arith.constant 0 : index
    %c0_7 = arith.constant 0 : index
    %8 = vector.load %arg4[%c0_6, %c0_7] : memref<64x32xf32, #tpu.memory_space<vmem>>, vector<64x32xf32>
    %cst_8 = arith.constant dense<0.000000e+00> : vector<32x32xf32>
    %9 = tpu.matmul %7, %8, %cst_8 {dimension_numbers = #tpu.dot_dimension_numbers<[1], [0], [0], [1], [0, 0, 1, 1], [], []>} : vector<32x64xf32>, vector<64x32xf32>, vector<32x32xf32> -> vector<32x32xf32>
    %c0_9 = arith.constant 0 : index
    %c0_10 = arith.constant 0 : index
    %10 = vector.load %arg5[%c0_9, %c0_10] : memref<1x32xf32, #tpu.memory_space<vmem>>, vector<1x32xf32>
    %11 = vector.broadcast %10 : vector<1x32xf32> to vector<32x32xf32>
    %12 = arith.addf %9, %11 : vector<32x32xf32>
    %cst_11 = arith.constant 0.000000e+00 : f32
    %13 = vector.broadcast %cst_11 : f32 to vector<32x32xf32>
    %14 = arith.maximumf %12, %13 : vector<32x32xf32>
    %c0_12 = arith.constant 0 : index
    %c0_13 = arith.constant 0 : index
    %15 = vector.load %arg6[%c0_12, %c0_13] : memref<32x32xf32, #tpu.memory_space<vmem>>, vector<32x32xf32>
    %cst_14 = arith.constant dense<0.000000e+00> : vector<32x32xf32>
    %16 = tpu.matmul %14, %15, %cst_14 {dimension_numbers = #tpu.dot_dimension_numbers<[1], [0], [0], [1], [0, 0, 1, 1], [], []>} : vector<32x32xf32>, vector<32x32xf32>, vector<32x32xf32> -> vector<32x32xf32>
    %c0_15 = arith.constant 0 : index
    %c0_16 = arith.constant 0 : index
    %17 = vector.load %arg7[%c0_15, %c0_16] : memref<1x32xf32, #tpu.memory_space<vmem>>, vector<1x32xf32>
    %18 = vector.broadcast %17 : vector<1x32xf32> to vector<32x32xf32>
    %19 = arith.addf %16, %18 : vector<32x32xf32>
    %c0_17 = arith.constant 0 : index
    %c0_18 = arith.constant 0 : index
    %20 = vector.load %arg8[%c0_17, %c0_18] : memref<64x32xf32, #tpu.memory_space<vmem>>, vector<64x32xf32>
    %cst_19 = arith.constant dense<0.000000e+00> : vector<32x32xf32>
    %21 = tpu.matmul %5, %20, %cst_19 {dimension_numbers = #tpu.dot_dimension_numbers<[1], [0], [0], [1], [0, 0, 1, 1], [], []>} : vector<32x64xf32>, vector<64x32xf32>, vector<32x32xf32> -> vector<32x32xf32>
    %22 = arith.addf %21, %19 : vector<32x32xf32>
    %23 = vector.shape_cast %22 : vector<32x32xf32> to vector<4x8x32xf32>
    %cst_20 = arith.constant dense<0xFF800000> : vector<4x32xf32>
    %24 = vector.multi_reduction <maximumf>, %23, %cst_20 [1] : vector<4x8x32xf32> to vector<4x32xf32>
    %cst_21 = arith.constant 0.000000e+00 : f32
    %25 = vector.broadcast %cst_21 : f32 to vector<32x32xf32>
    %26 = arith.maximumf %22, %25 : vector<32x32xf32>
    %c0_22 = arith.constant 0 : index
    %c0_23 = arith.constant 0 : index
    %27 = vector.load %arg9[%c0_22, %c0_23] : memref<32x32xf32, #tpu.memory_space<vmem>>, vector<32x32xf32>
    %cst_24 = arith.constant dense<0.000000e+00> : vector<32x32xf32>
    %28 = tpu.matmul %26, %27, %cst_24 {dimension_numbers = #tpu.dot_dimension_numbers<[1], [0], [0], [1], [0, 0, 1, 1], [], []>} : vector<32x32xf32>, vector<32x32xf32>, vector<32x32xf32> -> vector<32x32xf32>
    %c0_25 = arith.constant 0 : index
    %c0_26 = arith.constant 0 : index
    %29 = vector.load %arg11[%c0_25, %c0_26] : memref<1x32xf32, #tpu.memory_space<vmem>>, vector<1x32xf32>
    %30 = vector.broadcast %29 : vector<1x32xf32> to vector<32x32xf32>
    %31 = arith.addf %28, %30 : vector<32x32xf32>
    %cst_27 = arith.constant 0.000000e+00 : f32
    %32 = vector.broadcast %cst_27 : f32 to vector<4x32xf32>
    %33 = arith.maximumf %24, %32 : vector<4x32xf32>
    %c0_28 = arith.constant 0 : index
    %c0_29 = arith.constant 0 : index
    %34 = vector.load %arg10[%c0_28, %c0_29] : memref<32x32xf32, #tpu.memory_space<vmem>>, vector<32x32xf32>
    %cst_30 = arith.constant dense<0.000000e+00> : vector<4x32xf32>
    %35 = tpu.matmul %33, %34, %cst_30 {dimension_numbers = #tpu.dot_dimension_numbers<[1], [0], [0], [1], [0, 0, 1, 1], [], []>} : vector<4x32xf32>, vector<32x32xf32>, vector<4x32xf32> -> vector<4x32xf32>
    %36 = vector.shape_cast %35 : vector<4x32xf32> to vector<4x1x32xf32>
    %37 = vector.shape_cast %36 : vector<4x1x32xf32> to vector<4x1x32xf32>
    %38 = vector.broadcast %37 : vector<4x1x32xf32> to vector<4x8x32xf32>
    %39 = vector.shape_cast %38 : vector<4x8x32xf32> to vector<32x32xf32>
    %40 = arith.addf %31, %39 : vector<32x32xf32>
    %cst_31 = arith.constant 0.000000e+00 : f32
    %41 = vector.broadcast %cst_31 : f32 to vector<32x32xf32>
    %42 = arith.maximumf %40, %41 : vector<32x32xf32>
    %c0_32 = arith.constant 0 : index
    %c0_33 = arith.constant 0 : index
    %43 = vector.load %arg12[%c0_32, %c0_33] : memref<32x32xf32, #tpu.memory_space<vmem>>, vector<32x32xf32>
    %cst_34 = arith.constant dense<0.000000e+00> : vector<32x32xf32>
    %44 = tpu.matmul %42, %43, %cst_34 {dimension_numbers = #tpu.dot_dimension_numbers<[1], [0], [0], [1], [0, 0, 1, 1], [], []>} : vector<32x32xf32>, vector<32x32xf32>, vector<32x32xf32> -> vector<32x32xf32>
    %c0_35 = arith.constant 0 : index
    %c0_36 = arith.constant 0 : index
    %45 = vector.load %arg13[%c0_35, %c0_36] : memref<1x32xf32, #tpu.memory_space<vmem>>, vector<1x32xf32>
    %46 = vector.broadcast %45 : vector<1x32xf32> to vector<32x32xf32>
    %47 = arith.addf %44, %46 : vector<32x32xf32>
    %c0_37 = arith.constant 0 : index
    %c0_38 = arith.constant 0 : index
    %48 = vector.load %arg14[%c0_37, %c0_38] : memref<32x32xf32, #tpu.memory_space<vmem>>, vector<32x32xf32>
    %cst_39 = arith.constant dense<0.000000e+00> : vector<32x32xf32>
    %49 = tpu.matmul %22, %48, %cst_39 {dimension_numbers = #tpu.dot_dimension_numbers<[1], [0], [0], [1], [0, 0, 1, 1], [], []>} : vector<32x32xf32>, vector<32x32xf32>, vector<32x32xf32> -> vector<32x32xf32>
    %c0_40 = arith.constant 0 : index
    %c0_41 = arith.constant 0 : index
    %50 = vector.load %arg15[%c0_40, %c0_41] : memref<32x32xf32, #tpu.memory_space<vmem>>, vector<32x32xf32>
    %cst_42 = arith.constant dense<0.000000e+00> : vector<4x32xf32>
    %51 = tpu.matmul %24, %50, %cst_42 {dimension_numbers = #tpu.dot_dimension_numbers<[1], [0], [0], [1], [0, 0, 1, 1], [], []>} : vector<4x32xf32>, vector<32x32xf32>, vector<4x32xf32> -> vector<4x32xf32>
    %52 = vector.shape_cast %51 : vector<4x32xf32> to vector<4x1x32xf32>
    %53 = vector.shape_cast %52 : vector<4x1x32xf32> to vector<4x1x32xf32>
    %54 = vector.broadcast %53 : vector<4x1x32xf32> to vector<4x8x32xf32>
    %55 = vector.shape_cast %54 : vector<4x8x32xf32> to vector<32x32xf32>
    %56 = arith.addf %49, %55 : vector<32x32xf32>
    %57 = arith.addf %56, %47 : vector<32x32xf32>
    %58 = vector.shape_cast %57 : vector<32x32xf32> to vector<4x8x32xf32>
    %cst_43 = arith.constant dense<0xFF800000> : vector<4x32xf32>
    %59 = vector.multi_reduction <maximumf>, %58, %cst_43 [1] : vector<4x8x32xf32> to vector<4x32xf32>
    %cst_44 = arith.constant 0.000000e+00 : f32
    %60 = vector.broadcast %cst_44 : f32 to vector<32x32xf32>
    %61 = arith.maximumf %57, %60 : vector<32x32xf32>
    %c0_45 = arith.constant 0 : index
    %c0_46 = arith.constant 0 : index
    %62 = vector.load %arg16[%c0_45, %c0_46] : memref<32x32xf32, #tpu.memory_space<vmem>>, vector<32x32xf32>
    %cst_47 = arith.constant dense<0.000000e+00> : vector<32x32xf32>
    %63 = tpu.matmul %61, %62, %cst_47 {dimension_numbers = #tpu.dot_dimension_numbers<[1], [0], [0], [1], [0, 0, 1, 1], [], []>} : vector<32x32xf32>, vector<32x32xf32>, vector<32x32xf32> -> vector<32x32xf32>
    %c0_48 = arith.constant 0 : index
    %c0_49 = arith.constant 0 : index
    %64 = vector.load %arg18[%c0_48, %c0_49] : memref<1x32xf32, #tpu.memory_space<vmem>>, vector<1x32xf32>
    %65 = vector.broadcast %64 : vector<1x32xf32> to vector<32x32xf32>
    %66 = arith.addf %63, %65 : vector<32x32xf32>
    %cst_50 = arith.constant 0.000000e+00 : f32
    %67 = vector.broadcast %cst_50 : f32 to vector<4x32xf32>
    %68 = arith.maximumf %59, %67 : vector<4x32xf32>
    %c0_51 = arith.constant 0 : index
    %c0_52 = arith.constant 0 : index
    %69 = vector.load %arg17[%c0_51, %c0_52] : memref<32x32xf32, #tpu.memory_space<vmem>>, vector<32x32xf32>
    %cst_53 = arith.constant dense<0.000000e+00> : vector<4x32xf32>
    %70 = tpu.matmul %68, %69, %cst_53 {dimension_numbers = #tpu.dot_dimension_numbers<[1], [0], [0], [1], [0, 0, 1, 1], [], []>} : vector<4x32xf32>, vector<32x32xf32>, vector<4x32xf32> -> vector<4x32xf32>
    %71 = vector.shape_cast %70 : vector<4x32xf32> to vector<4x1x32xf32>
    %72 = vector.shape_cast %71 : vector<4x1x32xf32> to vector<4x1x32xf32>
    %73 = vector.broadcast %72 : vector<4x1x32xf32> to vector<4x8x32xf32>
    %74 = vector.shape_cast %73 : vector<4x8x32xf32> to vector<32x32xf32>
    %75 = arith.addf %66, %74 : vector<32x32xf32>
    %cst_54 = arith.constant 0.000000e+00 : f32
    %76 = vector.broadcast %cst_54 : f32 to vector<32x32xf32>
    %77 = arith.maximumf %75, %76 : vector<32x32xf32>
    %c0_55 = arith.constant 0 : index
    %c0_56 = arith.constant 0 : index
    %78 = vector.load %arg19[%c0_55, %c0_56] : memref<32x32xf32, #tpu.memory_space<vmem>>, vector<32x32xf32>
    %cst_57 = arith.constant dense<0.000000e+00> : vector<32x32xf32>
    %79 = tpu.matmul %77, %78, %cst_57 {dimension_numbers = #tpu.dot_dimension_numbers<[1], [0], [0], [1], [0, 0, 1, 1], [], []>} : vector<32x32xf32>, vector<32x32xf32>, vector<32x32xf32> -> vector<32x32xf32>
    %c0_58 = arith.constant 0 : index
    %c0_59 = arith.constant 0 : index
    %80 = vector.load %arg20[%c0_58, %c0_59] : memref<1x32xf32, #tpu.memory_space<vmem>>, vector<1x32xf32>
    %81 = vector.broadcast %80 : vector<1x32xf32> to vector<32x32xf32>
    %82 = arith.addf %79, %81 : vector<32x32xf32>
    %c0_60 = arith.constant 0 : index
    %c0_61 = arith.constant 0 : index
    %83 = vector.load %arg21[%c0_60, %c0_61] : memref<32x32xf32, #tpu.memory_space<vmem>>, vector<32x32xf32>
    %cst_62 = arith.constant dense<0.000000e+00> : vector<32x32xf32>
    %84 = tpu.matmul %57, %83, %cst_62 {dimension_numbers = #tpu.dot_dimension_numbers<[1], [0], [0], [1], [0, 0, 1, 1], [], []>} : vector<32x32xf32>, vector<32x32xf32>, vector<32x32xf32> -> vector<32x32xf32>
    %c0_63 = arith.constant 0 : index
    %c0_64 = arith.constant 0 : index
    %85 = vector.load %arg22[%c0_63, %c0_64] : memref<32x32xf32, #tpu.memory_space<vmem>>, vector<32x32xf32>
    %cst_65 = arith.constant dense<0.000000e+00> : vector<4x32xf32>
    %86 = tpu.matmul %59, %85, %cst_65 {dimension_numbers = #tpu.dot_dimension_numbers<[1], [0], [0], [1], [0, 0, 1, 1], [], []>} : vector<4x32xf32>, vector<32x32xf32>, vector<4x32xf32> -> vector<4x32xf32>
    %87 = vector.shape_cast %86 : vector<4x32xf32> to vector<4x1x32xf32>
    %88 = vector.shape_cast %87 : vector<4x1x32xf32> to vector<4x1x32xf32>
    %89 = vector.broadcast %88 : vector<4x1x32xf32> to vector<4x8x32xf32>
    %90 = vector.shape_cast %89 : vector<4x8x32xf32> to vector<32x32xf32>
    %91 = arith.addf %84, %90 : vector<32x32xf32>
    %92 = arith.addf %91, %82 : vector<32x32xf32>
    %93 = vector.shape_cast %92 : vector<32x32xf32> to vector<4x8x32xf32>
    %cst_66 = arith.constant dense<0xFF800000> : vector<4x32xf32>
    %94 = vector.multi_reduction <maximumf>, %93, %cst_66 [1] : vector<4x8x32xf32> to vector<4x32xf32>
    %cst_67 = arith.constant 0.000000e+00 : f32
    %95 = vector.broadcast %cst_67 : f32 to vector<32x32xf32>
    %96 = arith.maximumf %92, %95 : vector<32x32xf32>
    %c0_68 = arith.constant 0 : index
    %c0_69 = arith.constant 0 : index
    %97 = vector.load %arg23[%c0_68, %c0_69] : memref<32x32xf32, #tpu.memory_space<vmem>>, vector<32x32xf32>
    %cst_70 = arith.constant dense<0.000000e+00> : vector<32x32xf32>
    %98 = tpu.matmul %96, %97, %cst_70 {dimension_numbers = #tpu.dot_dimension_numbers<[1], [0], [0], [1], [0, 0, 1, 1], [], []>} : vector<32x32xf32>, vector<32x32xf32>, vector<32x32xf32> -> vector<32x32xf32>
    %c0_71 = arith.constant 0 : index
    %c0_72 = arith.constant 0 : index
    %99 = vector.load %arg25[%c0_71, %c0_72] : memref<1x32xf32, #tpu.memory_space<vmem>>, vector<1x32xf32>
    %100 = vector.broadcast %99 : vector<1x32xf32> to vector<32x32xf32>
    %101 = arith.addf %98, %100 : vector<32x32xf32>
    %cst_73 = arith.constant 0.000000e+00 : f32
    %102 = vector.broadcast %cst_73 : f32 to vector<4x32xf32>
    %103 = arith.maximumf %94, %102 : vector<4x32xf32>
    %c0_74 = arith.constant 0 : index
    %c0_75 = arith.constant 0 : index
    %104 = vector.load %arg24[%c0_74, %c0_75] : memref<32x32xf32, #tpu.memory_space<vmem>>, vector<32x32xf32>
    %cst_76 = arith.constant dense<0.000000e+00> : vector<4x32xf32>
    %105 = tpu.matmul %103, %104, %cst_76 {dimension_numbers = #tpu.dot_dimension_numbers<[1], [0], [0], [1], [0, 0, 1, 1], [], []>} : vector<4x32xf32>, vector<32x32xf32>, vector<4x32xf32> -> vector<4x32xf32>
    %106 = vector.shape_cast %105 : vector<4x32xf32> to vector<4x1x32xf32>
    %107 = vector.shape_cast %106 : vector<4x1x32xf32> to vector<4x1x32xf32>
    %108 = vector.broadcast %107 : vector<4x1x32xf32> to vector<4x8x32xf32>
    %109 = vector.shape_cast %108 : vector<4x8x32xf32> to vector<32x32xf32>
    %110 = arith.addf %101, %109 : vector<32x32xf32>
    %cst_77 = arith.constant 0.000000e+00 : f32
    %111 = vector.broadcast %cst_77 : f32 to vector<32x32xf32>
    %112 = arith.maximumf %110, %111 : vector<32x32xf32>
    %c0_78 = arith.constant 0 : index
    %c0_79 = arith.constant 0 : index
    %113 = vector.load %arg26[%c0_78, %c0_79] : memref<32x32xf32, #tpu.memory_space<vmem>>, vector<32x32xf32>
    %cst_80 = arith.constant dense<0.000000e+00> : vector<32x32xf32>
    %114 = tpu.matmul %112, %113, %cst_80 {dimension_numbers = #tpu.dot_dimension_numbers<[1], [0], [0], [1], [0, 0, 1, 1], [], []>} : vector<32x32xf32>, vector<32x32xf32>, vector<32x32xf32> -> vector<32x32xf32>
    %c0_81 = arith.constant 0 : index
    %c0_82 = arith.constant 0 : index
    %115 = vector.load %arg27[%c0_81, %c0_82] : memref<1x32xf32, #tpu.memory_space<vmem>>, vector<1x32xf32>
    %116 = vector.broadcast %115 : vector<1x32xf32> to vector<32x32xf32>
    %117 = arith.addf %114, %116 : vector<32x32xf32>
    %c0_83 = arith.constant 0 : index
    %c0_84 = arith.constant 0 : index
    %118 = vector.load %arg28[%c0_83, %c0_84] : memref<32x32xf32, #tpu.memory_space<vmem>>, vector<32x32xf32>
    %cst_85 = arith.constant dense<0.000000e+00> : vector<32x32xf32>
    %119 = tpu.matmul %92, %118, %cst_85 {dimension_numbers = #tpu.dot_dimension_numbers<[1], [0], [0], [1], [0, 0, 1, 1], [], []>} : vector<32x32xf32>, vector<32x32xf32>, vector<32x32xf32> -> vector<32x32xf32>
    %c0_86 = arith.constant 0 : index
    %c0_87 = arith.constant 0 : index
    %120 = vector.load %arg29[%c0_86, %c0_87] : memref<32x32xf32, #tpu.memory_space<vmem>>, vector<32x32xf32>
    %cst_88 = arith.constant dense<0.000000e+00> : vector<4x32xf32>
    %121 = tpu.matmul %94, %120, %cst_88 {dimension_numbers = #tpu.dot_dimension_numbers<[1], [0], [0], [1], [0, 0, 1, 1], [], []>} : vector<4x32xf32>, vector<32x32xf32>, vector<4x32xf32> -> vector<4x32xf32>
    %122 = vector.shape_cast %121 : vector<4x32xf32> to vector<4x1x32xf32>
    %123 = vector.shape_cast %122 : vector<4x1x32xf32> to vector<4x1x32xf32>
    %124 = vector.broadcast %123 : vector<4x1x32xf32> to vector<4x8x32xf32>
    %125 = vector.shape_cast %124 : vector<4x8x32xf32> to vector<32x32xf32>
    %126 = arith.addf %119, %125 : vector<32x32xf32>
    %127 = arith.addf %126, %117 : vector<32x32xf32>
    %128 = vector.shape_cast %127 : vector<32x32xf32> to vector<4x8x32xf32>
    %cst_89 = arith.constant dense<0xFF800000> : vector<4x32xf32>
    %129 = vector.multi_reduction <maximumf>, %128, %cst_89 [1] : vector<4x8x32xf32> to vector<4x32xf32>
    %cst_90 = arith.constant 0.000000e+00 : f32
    %130 = vector.broadcast %cst_90 : f32 to vector<32x32xf32>
    %131 = arith.maximumf %127, %130 : vector<32x32xf32>
    %c0_91 = arith.constant 0 : index
    %c0_92 = arith.constant 0 : index
    %132 = vector.load %arg30[%c0_91, %c0_92] : memref<32x32xf32, #tpu.memory_space<vmem>>, vector<32x32xf32>
    %cst_93 = arith.constant dense<0.000000e+00> : vector<32x32xf32>
    %133 = tpu.matmul %131, %132, %cst_93 {dimension_numbers = #tpu.dot_dimension_numbers<[1], [0], [0], [1], [0, 0, 1, 1], [], []>} : vector<32x32xf32>, vector<32x32xf32>, vector<32x32xf32> -> vector<32x32xf32>
    %c0_94 = arith.constant 0 : index
    %c0_95 = arith.constant 0 : index
    %134 = vector.load %arg32[%c0_94, %c0_95] : memref<1x32xf32, #tpu.memory_space<vmem>>, vector<1x32xf32>
    %135 = vector.broadcast %134 : vector<1x32xf32> to vector<32x32xf32>
    %136 = arith.addf %133, %135 : vector<32x32xf32>
    %cst_96 = arith.constant 0.000000e+00 : f32
    %137 = vector.broadcast %cst_96 : f32 to vector<4x32xf32>
    %138 = arith.maximumf %129, %137 : vector<4x32xf32>
    %c0_97 = arith.constant 0 : index
    %c0_98 = arith.constant 0 : index
    %139 = vector.load %arg31[%c0_97, %c0_98] : memref<32x32xf32, #tpu.memory_space<vmem>>, vector<32x32xf32>
    %cst_99 = arith.constant dense<0.000000e+00> : vector<4x32xf32>
    %140 = tpu.matmul %138, %139, %cst_99 {dimension_numbers = #tpu.dot_dimension_numbers<[1], [0], [0], [1], [0, 0, 1, 1], [], []>} : vector<4x32xf32>, vector<32x32xf32>, vector<4x32xf32> -> vector<4x32xf32>
    %141 = vector.shape_cast %140 : vector<4x32xf32> to vector<4x1x32xf32>
    %142 = vector.shape_cast %141 : vector<4x1x32xf32> to vector<4x1x32xf32>
    %143 = vector.broadcast %142 : vector<4x1x32xf32> to vector<4x8x32xf32>
    %144 = vector.shape_cast %143 : vector<4x8x32xf32> to vector<32x32xf32>
    %145 = arith.addf %136, %144 : vector<32x32xf32>
    %cst_100 = arith.constant 0.000000e+00 : f32
    %146 = vector.broadcast %cst_100 : f32 to vector<32x32xf32>
    %147 = arith.maximumf %145, %146 : vector<32x32xf32>
    %c0_101 = arith.constant 0 : index
    %c0_102 = arith.constant 0 : index
    %148 = vector.load %arg33[%c0_101, %c0_102] : memref<32x32xf32, #tpu.memory_space<vmem>>, vector<32x32xf32>
    %cst_103 = arith.constant dense<0.000000e+00> : vector<32x32xf32>
    %149 = tpu.matmul %147, %148, %cst_103 {dimension_numbers = #tpu.dot_dimension_numbers<[1], [0], [0], [1], [0, 0, 1, 1], [], []>} : vector<32x32xf32>, vector<32x32xf32>, vector<32x32xf32> -> vector<32x32xf32>
    %c0_104 = arith.constant 0 : index
    %c0_105 = arith.constant 0 : index
    %150 = vector.load %arg34[%c0_104, %c0_105] : memref<1x32xf32, #tpu.memory_space<vmem>>, vector<1x32xf32>
    %151 = vector.broadcast %150 : vector<1x32xf32> to vector<32x32xf32>
    %152 = arith.addf %149, %151 : vector<32x32xf32>
    %c0_106 = arith.constant 0 : index
    %c0_107 = arith.constant 0 : index
    %153 = vector.load %arg35[%c0_106, %c0_107] : memref<32x32xf32, #tpu.memory_space<vmem>>, vector<32x32xf32>
    %cst_108 = arith.constant dense<0.000000e+00> : vector<32x32xf32>
    %154 = tpu.matmul %127, %153, %cst_108 {dimension_numbers = #tpu.dot_dimension_numbers<[1], [0], [0], [1], [0, 0, 1, 1], [], []>} : vector<32x32xf32>, vector<32x32xf32>, vector<32x32xf32> -> vector<32x32xf32>
    %c0_109 = arith.constant 0 : index
    %c0_110 = arith.constant 0 : index
    %155 = vector.load %arg36[%c0_109, %c0_110] : memref<32x32xf32, #tpu.memory_space<vmem>>, vector<32x32xf32>
    %cst_111 = arith.constant dense<0.000000e+00> : vector<4x32xf32>
    %156 = tpu.matmul %129, %155, %cst_111 {dimension_numbers = #tpu.dot_dimension_numbers<[1], [0], [0], [1], [0, 0, 1, 1], [], []>} : vector<4x32xf32>, vector<32x32xf32>, vector<4x32xf32> -> vector<4x32xf32>
    %157 = vector.shape_cast %156 : vector<4x32xf32> to vector<4x1x32xf32>
    %158 = vector.shape_cast %157 : vector<4x1x32xf32> to vector<4x1x32xf32>
    %159 = vector.broadcast %158 : vector<4x1x32xf32> to vector<4x8x32xf32>
    %160 = vector.shape_cast %159 : vector<4x8x32xf32> to vector<32x32xf32>
    %161 = arith.addf %154, %160 : vector<32x32xf32>
    %162 = arith.addf %161, %152 : vector<32x32xf32>
    %163 = vector.shape_cast %162 : vector<32x32xf32> to vector<4x8x32xf32>
    %cst_112 = arith.constant dense<0xFF800000> : vector<4x32xf32>
    %164 = vector.multi_reduction <maximumf>, %163, %cst_112 [1] : vector<4x8x32xf32> to vector<4x32xf32>
    %cst_113 = arith.constant 0.000000e+00 : f32
    %165 = vector.broadcast %cst_113 : f32 to vector<4x32xf32>
    %166 = arith.maximumf %164, %165 : vector<4x32xf32>
    %c0_114 = arith.constant 0 : index
    %c0_115 = arith.constant 0 : index
    %167 = vector.load %arg37[%c0_114, %c0_115] : memref<32x8xf32, #tpu.memory_space<vmem>>, vector<32x8xf32>
    %cst_116 = arith.constant dense<0.000000e+00> : vector<4x8xf32>
    %168 = tpu.matmul %166, %167, %cst_116 {dimension_numbers = #tpu.dot_dimension_numbers<[1], [0], [0], [1], [0, 0, 1, 1], [], []>} : vector<4x32xf32>, vector<32x8xf32>, vector<4x8xf32> -> vector<4x8xf32>
    %c0_117 = arith.constant 0 : index
    %c0_118 = arith.constant 0 : index
    %169 = vector.load %arg38[%c0_117, %c0_118] : memref<1x8xf32, #tpu.memory_space<vmem>>, vector<1x8xf32>
    %170 = vector.broadcast %169 : vector<1x8xf32> to vector<4x8xf32>
    %171 = arith.addf %168, %170 : vector<4x8xf32>
    %c0_119 = arith.constant 0 : index
    %c0_120 = arith.constant 0 : index
    %172 = vector.load %arg39[%c0_119, %c0_120] : memref<4x8xf32, #tpu.memory_space<vmem>>, vector<4x8xf32>
    tpu.vector_store %arg39[%c0_119, %c0_120], %171 {strides = array<i32>} : memref<4x8xf32, #tpu.memory_space<vmem>>, vector<4x8xf32>,
    return
  }
  func.func @transform_0(%arg0: i32) -> (i32, i32) {
    %c0_i32 = arith.constant 0 : i32
    %c0_i32_0 = arith.constant 0 : i32
    return %arg0, %c0_i32 : i32, i32
  }
  func.func @transform_1(%arg0: i32) -> (i32, i32) {
    %c0_i32 = arith.constant 0 : i32
    %c0_i32_0 = arith.constant 0 : i32
    %c0_i32_1 = arith.constant 0 : i32
    return %c0_i32, %c0_i32_0 : i32, i32
  }
  func.func @transform_2(%arg0: i32) -> (i32, i32) {
    %c0_i32 = arith.constant 0 : i32
    %c0_i32_0 = arith.constant 0 : i32
    %c0_i32_1 = arith.constant 0 : i32
    return %c0_i32, %c0_i32_0 : i32, i32
  }
  func.func @transform_3(%arg0: i32) -> (i32, i32) {
    %c0_i32 = arith.constant 0 : i32
    %c0_i32_0 = arith.constant 0 : i32
    %c0_i32_1 = arith.constant 0 : i32
    return %c0_i32, %c0_i32_0 : i32, i32
  }
  func.func @transform_4(%arg0: i32) -> (i32, i32) {
    %c0_i32 = arith.constant 0 : i32
    %c0_i32_0 = arith.constant 0 : i32
    %c0_i32_1 = arith.constant 0 : i32
    return %c0_i32, %c0_i32_0 : i32, i32
  }
  func.func @transform_5(%arg0: i32) -> (i32, i32) {
    %c0_i32 = arith.constant 0 : i32
    %c0_i32_0 = arith.constant 0 : i32
    %c0_i32_1 = arith.constant 0 : i32
    return %c0_i32, %c0_i32_0 : i32, i32
  }
  func.func @transform_6(%arg0: i32) -> (i32, i32) {
    %c0_i32 = arith.constant 0 : i32
    %c0_i32_0 = arith.constant 0 : i32
    %c0_i32_1 = arith.constant 0 : i32
    return %c0_i32, %c0_i32_0 : i32, i32
  }
  func.func @transform_7(%arg0: i32) -> (i32, i32) {
    %c0_i32 = arith.constant 0 : i32
    %c0_i32_0 = arith.constant 0 : i32
    %c0_i32_1 = arith.constant 0 : i32
    return %c0_i32, %c0_i32_0 : i32, i32
  }
  func.func @transform_8(%arg0: i32) -> (i32, i32) {
    %c0_i32 = arith.constant 0 : i32
    %c0_i32_0 = arith.constant 0 : i32
    %c0_i32_1 = arith.constant 0 : i32
    return %c0_i32, %c0_i32_0 : i32, i32
  }
  func.func @transform_9(%arg0: i32) -> (i32, i32) {
    %c0_i32 = arith.constant 0 : i32
    %c0_i32_0 = arith.constant 0 : i32
    %c0_i32_1 = arith.constant 0 : i32
    return %c0_i32, %c0_i32_0 : i32, i32
  }
  func.func @transform_10(%arg0: i32) -> (i32, i32) {
    %c0_i32 = arith.constant 0 : i32
    %c0_i32_0 = arith.constant 0 : i32
    %c0_i32_1 = arith.constant 0 : i32
    return %c0_i32, %c0_i32_0 : i32, i32
  }
  func.func @transform_11(%arg0: i32) -> (i32, i32) {
    %c0_i32 = arith.constant 0 : i32
    %c0_i32_0 = arith.constant 0 : i32
    %c0_i32_1 = arith.constant 0 : i32
    return %c0_i32, %c0_i32_0 : i32, i32
  }
  func.func @transform_12(%arg0: i32) -> (i32, i32) {
    %c0_i32 = arith.constant 0 : i32
    %c0_i32_0 = arith.constant 0 : i32
    %c0_i32_1 = arith.constant 0 : i32
    return %c0_i32, %c0_i32_0 : i32, i32
  }
  func.func @transform_13(%arg0: i32) -> (i32, i32) {
    %c0_i32 = arith.constant 0 : i32
    %c0_i32_0 = arith.constant 0 : i32
    %c0_i32_1 = arith.constant 0 : i32
    return %c0_i32, %c0_i32_0 : i32, i32
  }
  func.func @transform_14(%arg0: i32) -> (i32, i32) {
    %c0_i32 = arith.constant 0 : i32
    %c0_i32_0 = arith.constant 0 : i32
    %c0_i32_1 = arith.constant 0 : i32
    return %c0_i32, %c0_i32_0 : i32, i32
  }
  func.func @transform_15(%arg0: i32) -> (i32, i32) {
    %c0_i32 = arith.constant 0 : i32
    %c0_i32_0 = arith.constant 0 : i32
    %c0_i32_1 = arith.constant 0 : i32
    return %c0_i32, %c0_i32_0 : i32, i32
  }
  func.func @transform_16(%arg0: i32) -> (i32, i32) {
    %c0_i32 = arith.constant 0 : i32
    %c0_i32_0 = arith.constant 0 : i32
    %c0_i32_1 = arith.constant 0 : i32
    return %c0_i32, %c0_i32_0 : i32, i32
  }
  func.func @transform_17(%arg0: i32) -> (i32, i32) {
    %c0_i32 = arith.constant 0 : i32
    %c0_i32_0 = arith.constant 0 : i32
    %c0_i32_1 = arith.constant 0 : i32
    return %c0_i32, %c0_i32_0 : i32, i32
  }
  func.func @transform_18(%arg0: i32) -> (i32, i32) {
    %c0_i32 = arith.constant 0 : i32
    %c0_i32_0 = arith.constant 0 : i32
    %c0_i32_1 = arith.constant 0 : i32
    return %c0_i32, %c0_i32_0 : i32, i32
  }
  func.func @transform_19(%arg0: i32) -> (i32, i32) {
    %c0_i32 = arith.constant 0 : i32
    %c0_i32_0 = arith.constant 0 : i32
    %c0_i32_1 = arith.constant 0 : i32
    return %c0_i32, %c0_i32_0 : i32, i32
  }
  func.func @transform_20(%arg0: i32) -> (i32, i32) {
    %c0_i32 = arith.constant 0 : i32
    %c0_i32_0 = arith.constant 0 : i32
    %c0_i32_1 = arith.constant 0 : i32
    return %c0_i32, %c0_i32_0 : i32, i32
  }
  func.func @transform_21(%arg0: i32) -> (i32, i32) {
    %c0_i32 = arith.constant 0 : i32
    %c0_i32_0 = arith.constant 0 : i32
    %c0_i32_1 = arith.constant 0 : i32
    return %c0_i32, %c0_i32_0 : i32, i32
  }
  func.func @transform_22(%arg0: i32) -> (i32, i32) {
    %c0_i32 = arith.constant 0 : i32
    %c0_i32_0 = arith.constant 0 : i32
    %c0_i32_1 = arith.constant 0 : i32
    return %c0_i32, %c0_i32_0 : i32, i32
  }
  func.func @transform_23(%arg0: i32) -> (i32, i32) {
    %c0_i32 = arith.constant 0 : i32
    %c0_i32_0 = arith.constant 0 : i32
    %c0_i32_1 = arith.constant 0 : i32
    return %c0_i32, %c0_i32_0 : i32, i32
  }
  func.func @transform_24(%arg0: i32) -> (i32, i32) {
    %c0_i32 = arith.constant 0 : i32
    %c0_i32_0 = arith.constant 0 : i32
    %c0_i32_1 = arith.constant 0 : i32
    return %c0_i32, %c0_i32_0 : i32, i32
  }
  func.func @transform_25(%arg0: i32) -> (i32, i32) {
    %c0_i32 = arith.constant 0 : i32
    %c0_i32_0 = arith.constant 0 : i32
    %c0_i32_1 = arith.constant 0 : i32
    return %c0_i32, %c0_i32_0 : i32, i32
  }
  func.func @transform_26(%arg0: i32) -> (i32, i32) {
    %c0_i32 = arith.constant 0 : i32
    %c0_i32_0 = arith.constant 0 : i32
    %c0_i32_1 = arith.constant 0 : i32
    return %c0_i32, %c0_i32_0 : i32, i32
  }
  func.func @transform_27(%arg0: i32) -> (i32, i32) {
    %c0_i32 = arith.constant 0 : i32
    %c0_i32_0 = arith.constant 0 : i32
    %c0_i32_1 = arith.constant 0 : i32
    return %c0_i32, %c0_i32_0 : i32, i32
  }
  func.func @transform_28(%arg0: i32) -> (i32, i32) {
    %c0_i32 = arith.constant 0 : i32
    %c0_i32_0 = arith.constant 0 : i32
    %c0_i32_1 = arith.constant 0 : i32
    return %c0_i32, %c0_i32_0 : i32, i32
  }
  func.func @transform_29(%arg0: i32) -> (i32, i32) {
    %c0_i32 = arith.constant 0 : i32
    %c0_i32_0 = arith.constant 0 : i32
    %c0_i32_1 = arith.constant 0 : i32
    return %c0_i32, %c0_i32_0 : i32, i32
  }
  func.func @transform_30(%arg0: i32) -> (i32, i32) {
    %c0_i32 = arith.constant 0 : i32
    %c0_i32_0 = arith.constant 0 : i32
    %c0_i32_1 = arith.constant 0 : i32
    return %c0_i32, %c0_i32_0 : i32, i32
  }
  func.func @transform_31(%arg0: i32) -> (i32, i32) {
    %c0_i32 = arith.constant 0 : i32
    %c0_i32_0 = arith.constant 0 : i32
    %c0_i32_1 = arith.constant 0 : i32
    return %c0_i32, %c0_i32_0 : i32, i32
  }
  func.func @transform_32(%arg0: i32) -> (i32, i32) {
    %c0_i32 = arith.constant 0 : i32
    %c0_i32_0 = arith.constant 0 : i32
    %c0_i32_1 = arith.constant 0 : i32
    return %c0_i32, %c0_i32_0 : i32, i32
  }
  func.func @transform_33(%arg0: i32) -> (i32, i32) {
    %c0_i32 = arith.constant 0 : i32
    %c0_i32_0 = arith.constant 0 : i32
    %c0_i32_1 = arith.constant 0 : i32
    return %c0_i32, %c0_i32_0 : i32, i32
  }
  func.func @transform_34(%arg0: i32) -> (i32, i32) {
    %c0_i32 = arith.constant 0 : i32
    %c0_i32_0 = arith.constant 0 : i32
    %c0_i32_1 = arith.constant 0 : i32
    return %c0_i32, %c0_i32_0 : i32, i32
  }
  func.func @transform_35(%arg0: i32) -> (i32, i32) {
    %c0_i32 = arith.constant 0 : i32
    %c0_i32_0 = arith.constant 0 : i32
    %c0_i32_1 = arith.constant 0 : i32
    return %c0_i32, %c0_i32_0 : i32, i32
  }
  func.func @transform_36(%arg0: i32) -> (i32, i32) {
    %c0_i32 = arith.constant 0 : i32
    %c0_i32_0 = arith.constant 0 : i32
    %c0_i32_1 = arith.constant 0 : i32
    return %c0_i32, %c0_i32_0 : i32, i32
  }
  func.func @transform_37(%arg0: i32) -> (i32, i32) {
    %c0_i32 = arith.constant 0 : i32
    %c0_i32_0 = arith.constant 0 : i32
    %c0_i32_1 = arith.constant 0 : i32
    return %c0_i32, %c0_i32_0 : i32, i32
  }
  func.func @transform_38(%arg0: i32) -> (i32, i32) {
    %c0_i32 = arith.constant 0 : i32
    %c0_i32_0 = arith.constant 0 : i32
    return %arg0, %c0_i32 : i32, i32
  }
}

</mosaic_0001>

<llo_original>
// kernel: tpu_custom_call.1
$region0: #{tpu_custom_call.1}
  #allocation0 [shape = 'u32[]', space=smem, size = 0x4, offset = 0x4, fixed_abs, tag = 'smem constant byte address 0x4 - core index']
  #allocation1 [shape = 'u32[144,128]{1,0:T(1,128)}', space=vmem, size = 0x12000, scoped, tag = 'internal scratch']
  %s0 = inlined_call_operand.smem [shape: u32[39], index: -1, kind: input, shape index: {}]
  %s1 = sld [smem:[%s0]]
  %s2 = scalar_lea.smem %s0, 1
  %s3 = sld [smem:[%s2]]
  %s4 = scalar_lea.smem %s0, 2
  %s5 = sld [smem:[%s4]]
  %s6 = scalar_lea.smem %s0, 3
  %s7 = sld [smem:[%s6]]
  %s8 = scalar_lea.smem %s0, 4
  %s9 = sld [smem:[%s8]]
  %s10 = scalar_lea.smem %s0, 5
  %s11 = sld [smem:[%s10]]
  %s12 = scalar_lea.smem %s0, 6
  %s13 = sld [smem:[%s12]]
  %s14 = scalar_lea.smem %s0, 7
  %s15 = sld [smem:[%s14]]
  %s16 = scalar_lea.smem %s0, 8
  %s17 = sld [smem:[%s16]]
  %s18 = scalar_lea.smem %s0, 9
  %s19 = sld [smem:[%s18]]
  %s20 = scalar_lea.smem %s0, 10
  %s21 = sld [smem:[%s20]]
  %s22 = scalar_lea.smem %s0, 11
  %s23 = sld [smem:[%s22]]
  %s24 = scalar_lea.smem %s0, 12
  %s25 = sld [smem:[%s24]]
  %s26 = scalar_lea.smem %s0, 13
  %s27 = sld [smem:[%s26]]
  %s28 = scalar_lea.smem %s0, 14
  %s29 = sld [smem:[%s28]]
  %s30 = scalar_lea.smem %s0, 15
  %s31 = sld [smem:[%s30]]
  %s32 = scalar_lea.smem %s0, 16
  %s33 = sld [smem:[%s32]]
  %s34 = scalar_lea.smem %s0, 17
  %s35 = sld [smem:[%s34]]
  %s36 = scalar_lea.smem %s0, 18
  %s37 = sld [smem:[%s36]]
  %s38 = scalar_lea.smem %s0, 19
  %s39 = sld [smem:[%s38]]
  %s40 = scalar_lea.smem %s0, 20
  %s41 = sld [smem:[%s40]]
  %s42 = scalar_lea.smem %s0, 21
  %s43 = sld [smem:[%s42]]
  %s44 = scalar_lea.smem %s0, 22
  %s45 = sld [smem:[%s44]]
  %s46 = scalar_lea.smem %s0, 23
  %s47 = sld [smem:[%s46]]
  %s48 = scalar_lea.smem %s0, 24
  %s49 = sld [smem:[%s48]]
  %s50 = scalar_lea.smem %s0, 25
  %s51 = sld [smem:[%s50]]
  %s52 = scalar_lea.smem %s0, 26
  %s53 = sld [smem:[%s52]]
  %s54 = scalar_lea.smem %s0, 27
  %s55 = sld [smem:[%s54]]
  %s56 = scalar_lea.smem %s0, 28
  %s57 = sld [smem:[%s56]]
  %s58 = scalar_lea.smem %s0, 29
  %s59 = sld [smem:[%s58]]
  %s60 = scalar_lea.smem %s0, 30
  %s61 = sld [smem:[%s60]]
  %s62 = scalar_lea.smem %s0, 31
  %s63 = sld [smem:[%s62]]
  %s64 = scalar_lea.smem %s0, 32
  %s65 = sld [smem:[%s64]]
  %s66 = scalar_lea.smem %s0, 33
  %s67 = sld [smem:[%s66]]
  %s68 = scalar_lea.smem %s0, 34
  %s69 = sld [smem:[%s68]]
  %s70 = scalar_lea.smem %s0, 35
  %s71 = sld [smem:[%s70]]
  %s72 = scalar_lea.smem %s0, 36
  %s73 = sld [smem:[%s72]]
  %s74 = scalar_lea.smem %s0, 37
  %s75 = sld [smem:[%s74]]
  %s76 = scalar_lea.smem %s0, 38
  %s77 = sld [smem:[%s76]]
  %s78 = sld [smem:[#allocation0]]
  $region242: #{tpu_custom_call.1} parent=0
    _
  %s80 = ssub.s32 1, %s78
  %s81 = scalar_select 0, %s80, %s78
  $region1: #{tpu_custom_call.1} parent=0
    #allocation2 [shape = 'u8[4096]{0}', space=vmem, size = 0x1000, scoped, tag = 'input window, operand 1, single buffered']
    #allocation3 [shape = 's32[1]{0}', space=sflag, size = 0x4, scoped, tag = 'scoped memory for tpu_custom_call.1']
    #allocation4 [shape = 's32[1]{0}', space=sflag, size = 0x4, scoped, tag = 'scoped memory for tpu_custom_call.1']
    #allocation5 [shape = 'u8[512]{0}', space=vmem, size = 0x400, scoped, tag = 'input window, operand 4, single buffered']
    #allocation6 [shape = 's32[1]{0}', space=sflag, size = 0x4, scoped, tag = 'scoped memory for tpu_custom_call.1']
    #allocation7 [shape = 'u8[512]{0}', space=vmem, size = 0x400, scoped, tag = 'input window, operand 6, single buffered']
    #allocation8 [shape = 'u8[512]{0}', space=vmem, size = 0x400, scoped, tag = 'input window, operand 10, single buffered']
    #allocation9 [shape = 's32[1]{0}', space=sflag, size = 0x4, scoped, tag = 'scoped memory for tpu_custom_call.1']
    #allocation10 [shape = 'u8[512]{0}', space=vmem, size = 0x400, scoped, tag = 'input window, operand 12, single buffered']
    #allocation11 [shape = 'u8[512]{0}', space=vmem, size = 0x400, scoped, tag = 'input window, operand 17, single buffered']
    #allocation12 [shape = 's32[1]{0}', space=sflag, size = 0x4, scoped, tag = 'scoped memory for tpu_custom_call.1']
    #allocation13 [shape = 'u8[512]{0}', space=vmem, size = 0x400, scoped, tag = 'input window, operand 19, single buffered']
    #allocation14 [shape = 'u8[16384]{0}', space=vmem, size = 0x4000, scoped, tag = 'input window, operand 21, single buffered']
    #allocation15 [shape = 's32[1]{0}', space=sflag, size = 0x4, scoped, tag = 'scoped memory for tpu_custom_call.1']
    #allocation16 [shape = 'u8[16384]{0}', space=vmem, size = 0x4000, scoped, tag = 'input window, operand 23, single buffered']
    #allocation17 [shape = 'u8[512]{0}', space=vmem, size = 0x400, scoped, tag = 'input window, operand 24, single buffered']
    #allocation18 [shape = 's32[1]{0}', space=sflag, size = 0x4, scoped, tag = 'scoped memory for tpu_custom_call.1']
    #allocation19 [shape = 'u8[16384]{0}', space=vmem, size = 0x4000, scoped, tag = 'input window, operand 25, single buffered']
    #allocation20 [shape = 'u8[512]{0}', space=vmem, size = 0x400, scoped, tag = 'input window, operand 26, single buffered']
    #allocation21 [shape = 's32[1]{0}', space=sflag, size = 0x4, scoped, tag = 'scoped memory for tpu_custom_call.1']
    #allocation22 [shape = 'u8[16384]{0}', space=vmem, size = 0x4000, scoped, tag = 'input window, operand 27, single buffered']
    #allocation23 [shape = 'u8[16384]{0}', space=vmem, size = 0x4000, scoped, tag = 'input window, operand 28, single buffered']
    #allocation24 [shape = 's32[1]{0}', space=sflag, size = 0x4, scoped, tag = 'scoped memory for tpu_custom_call.1']
    #allocation25 [shape = 'u8[16384]{0}', space=vmem, size = 0x4000, scoped, tag = 'input window, operand 29, single buffered']
    #allocation26 [shape = 'u8[512]{0}', space=vmem, size = 0x400, scoped, tag = 'input window, operand 31, single buffered']
    #allocation27 [shape = 's32[1]{0}', space=sflag, size = 0x4, scoped, tag = 'scoped memory for tpu_custom_call.1']
    #allocation28 [shape = 'u8[16384]{0}', space=vmem, size = 0x4000, scoped, tag = 'input window, operand 32, single buffered']
    #allocation29 [shape = 'u8[512]{0}', space=vmem, size = 0x400, scoped, tag = 'input window, operand 33, single buffered']
    #allocation30 [shape = 's32[1]{0}', space=sflag, size = 0x4, scoped, tag = 'scoped memory for tpu_custom_call.1']
    #allocation31 [shape = 'u8[16384]{0}', space=vmem, size = 0x4000, scoped, tag = 'input window, operand 34, single buffered']
    #allocation32 [shape = 'u8[16384]{0}', space=vmem, size = 0x4000, scoped, tag = 'input window, operand 35, single buffered']
    #allocation33 [shape = 's32[1]{0}', space=sflag, size = 0x4, scoped, tag = 'scoped memory for tpu_custom_call.1']
    #allocation34 [shape = 'u8[2048]{0}', space=vmem, size = 0x800, scoped, tag = 'output window, operand 0, single buffered']
    %82 = vsyncpa [#allocation3], 0
    %83 = vsyncpa [#allocation6], 0
    %84 = vsyncpa [#allocation9], 0
    %85 = vsyncpa [#allocation12], 0
    %86 = vsyncpa [#allocation15], 0
    %87 = vsyncpa [#allocation18], 0
    %88 = vsyncpa [#allocation21], 0
    %89 = vsyncpa [#allocation24], 0
    %90 = vsyncpa [#allocation27], 0
    %91 = vsyncpa [#allocation30], 0
    %92 = vsyncpa [#allocation33], 0
    %93 = vsyncpa [#allocation4], 0
    // Predicated region
    $region2: #{tpu_custom_call.1} parent=1 // pred_check
      _
    $region3: #{tpu_custom_call.1} parent=1 // pred_check_branch
      %95 = sbr.rel (0) target = $region5
    $region4: #{tpu_custom_call.1} parent=1 // pred_region
      _
    $region5: #{tpu_custom_call.1} parent=1 // pred_fallthru
      _
    // Predicated region
    $region6: #{tpu_custom_call.1} parent=1 // pred_check
      _
    $region7: #{tpu_custom_call.1} parent=1 // pred_check_branch
      %97 = sbr.rel (0) target = $region9
    $region8: #{tpu_custom_call.1} parent=1 // pred_region
      %s99 = ssub.s32 128, 128
      %100 = vsyncadd [#allocation3], %s99
      %s102 = sshll.u32 [#allocation2], 4
      %s103 = int_to_ptr.vmem [resolvable:$true] %s102
      %105 = dma.hbm_to_vmem [thread:$0]  %s3, 128, %s103, [#allocation3]
    $region9: #{tpu_custom_call.1} parent=1 // pred_fallthru
      _
    // Predicated region
    $region10: #{tpu_custom_call.1} parent=1 // pred_check
      _
    $region11: #{tpu_custom_call.1} parent=1 // pred_check_branch
      %107 = sbr.rel (0) target = $region13
    $region12: #{tpu_custom_call.1} parent=1 // pred_region
      _
    $region13: #{tpu_custom_call.1} parent=1 // pred_fallthru
      _
    // Predicated region
    $region14: #{tpu_custom_call.1} parent=1 // pred_check
      _
    $region15: #{tpu_custom_call.1} parent=1 // pred_check_branch
      %109 = sbr.rel (0) target = $region17
    $region16: #{tpu_custom_call.1} parent=1 // pred_region
      _
    $region17: #{tpu_custom_call.1} parent=1 // pred_fallthru
      _
    // Predicated region
    $region18: #{tpu_custom_call.1} parent=1 // pred_check
      _
    $region19: #{tpu_custom_call.1} parent=1 // pred_check_branch
      %111 = sbr.rel (0) target = $region21
    $region20: #{tpu_custom_call.1} parent=1 // pred_region
      %s113 = ssub.s32 16, 16
      %114 = vsyncadd [#allocation6], %s113
      %s116 = sshll.u32 [#allocation5], 4
      %s117 = int_to_ptr.vmem [resolvable:$true] %s116
      %119 = dma.hbm_to_vmem [thread:$0]  %s9, 16, %s117, [#allocation6]
    $region21: #{tpu_custom_call.1} parent=1 // pred_fallthru
      _
    // Predicated region
    $region22: #{tpu_custom_call.1} parent=1 // pred_check
      _
    $region23: #{tpu_custom_call.1} parent=1 // pred_check_branch
      %121 = sbr.rel (0) target = $region25
    $region24: #{tpu_custom_call.1} parent=1 // pred_region
      _
    $region25: #{tpu_custom_call.1} parent=1 // pred_fallthru
      _
    // Predicated region
    $region26: #{tpu_custom_call.1} parent=1 // pred_check
      _
    $region27: #{tpu_custom_call.1} parent=1 // pred_check_branch
      %123 = sbr.rel (0) target = $region29
    $region28: #{tpu_custom_call.1} parent=1 // pred_region
      %s125 = ssub.s32 16, 16
      %126 = vsyncadd [#allocation6], %s125
      %s128 = sshll.u32 [#allocation7], 4
      %s129 = int_to_ptr.vmem [resolvable:$true] %s128
      %131 = dma.hbm_to_vmem [thread:$0]  %s13, 16, %s129, [#allocation6]
    $region29: #{tpu_custom_call.1} parent=1 // pred_fallthru
      _
    // Predicated region
    $region30: #{tpu_custom_call.1} parent=1 // pred_check
      _
    $region31: #{tpu_custom_call.1} parent=1 // pred_check_branch
      %133 = sbr.rel (0) target = $region33
    $region32: #{tpu_custom_call.1} parent=1 // pred_region
      _
    $region33: #{tpu_custom_call.1} parent=1 // pred_fallthru
      _
    // Predicated region
    $region34: #{tpu_custom_call.1} parent=1 // pred_check
      _
    $region35: #{tpu_custom_call.1} parent=1 // pred_check_branch
      %135 = sbr.rel (0) target = $region37
    $region36: #{tpu_custom_call.1} parent=1 // pred_region
      _
    $region37: #{tpu_custom_call.1} parent=1 // pred_fallthru
      _
    // Predicated region
    $region38: #{tpu_custom_call.1} parent=1 // pred_check
      _
    $region39: #{tpu_custom_call.1} parent=1 // pred_check_branch
      %137 = sbr.rel (0) target = $region41
    $region40: #{tpu_custom_call.1} parent=1 // pred_region
      _
    $region41: #{tpu_custom_call.1} parent=1 // pred_fallthru
      _
    // Predicated region
    $region42: #{tpu_custom_call.1} parent=1 // pred_check
      _
    $region43: #{tpu_custom_call.1} parent=1 // pred_check_branch
      %139 = sbr.rel (0) target = $region45
    $region44: #{tpu_custom_call.1} parent=1 // pred_region
      %s141 = ssub.s32 16, 16
      %142 = vsyncadd [#allocation9], %s141
      %s144 = sshll.u32 [#allocation8], 4
      %s145 = int_to_ptr.vmem [resolvable:$true] %s144
      %147 = dma.hbm_to_vmem [thread:$0]  %s21, 16, %s145, [#allocation9]
    $region45: #{tpu_custom_call.1} parent=1 // pred_fallthru
      _
    // Predicated region
    $region46: #{tpu_custom_call.1} parent=1 // pred_check
      _
    $region47: #{tpu_custom_call.1} parent=1 // pred_check_branch
      %149 = sbr.rel (0) target = $region49
    $region48: #{tpu_custom_call.1} parent=1 // pred_region
      _
    $region49: #{tpu_custom_call.1} parent=1 // pred_fallthru
      _
    // Predicated region
    $region50: #{tpu_custom_call.1} parent=1 // pred_check
      _
    $region51: #{tpu_custom_call.1} parent=1 // pred_check_branch
      %151 = sbr.rel (0) target = $region53
    $region52: #{tpu_custom_call.1} parent=1 // pred_region
      %s153 = ssub.s32 16, 16
      %154 = vsyncadd [#allocation9], %s153
      %s156 = sshll.u32 [#allocation10], 4
      %s157 = int_to_ptr.vmem [resolvable:$true] %s156
      %159 = dma.hbm_to_vmem [thread:$0]  %s25, 16, %s157, [#allocation9]
    $region53: #{tpu_custom_call.1} parent=1 // pred_fallthru
      _
    // Predicated region
    $region54: #{tpu_custom_call.1} parent=1 // pred_check
      _
    $region55: #{tpu_custom_call.1} parent=1 // pred_check_branch
      %161 = sbr.rel (0) target = $region57
    $region56: #{tpu_custom_call.1} parent=1 // pred_region
      _
    $region57: #{tpu_custom_call.1} parent=1 // pred_fallthru
      _
    // Predicated region
    $region58: #{tpu_custom_call.1} parent=1 // pred_check
      _
    $region59: #{tpu_custom_call.1} parent=1 // pred_check_branch
      %163 = sbr.rel (0) target = $region61
    $region60: #{tpu_custom_call.1} parent=1 // pred_region
      _
    $region61: #{tpu_custom_call.1} parent=1 // pred_fallthru
      _
    // Predicated region
    $region62: #{tpu_custom_call.1} parent=1 // pred_check
      _
    $region63: #{tpu_custom_call.1} parent=1 // pred_check_branch
      %165 = sbr.rel (0) target = $region65
    $region64: #{tpu_custom_call.1} parent=1 // pred_region
      _
    $region65: #{tpu_custom_call.1} parent=1 // pred_fallthru
      _
    // Predicated region
    $region66: #{tpu_custom_call.1} parent=1 // pred_check
      _
    $region67: #{tpu_custom_call.1} parent=1 // pred_check_branch
      %167 = sbr.rel (0) target = $region69
    $region68: #{tpu_custom_call.1} parent=1 // pred_region
      _
    $region69: #{tpu_custom_call.1} parent=1 // pred_fallthru
      _
    // Predicated region
    $region70: #{tpu_custom_call.1} parent=1 // pred_check
      _
    $region71: #{tpu_custom_call.1} parent=1 // pred_check_branch
      %169 = sbr.rel (0) target = $region73
    $region72: #{tpu_custom_call.1} parent=1 // pred_region
      %s171 = ssub.s32 16, 16
      %172 = vsyncadd [#allocation12], %s171
      %s174 = sshll.u32 [#allocation11], 4
      %s175 = int_to_ptr.vmem [resolvable:$true] %s174
      %177 = dma.hbm_to_vmem [thread:$0]  %s35, 16, %s175, [#allocation12]
    $region73: #{tpu_custom_call.1} parent=1 // pred_fallthru
      _
    // Predicated region
    $region74: #{tpu_custom_call.1} parent=1 // pred_check
      _
    $region75: #{tpu_custom_call.1} parent=1 // pred_check_branch
      %179 = sbr.rel (0) target = $region77
    $region76: #{tpu_custom_call.1} parent=1 // pred_region
      _
    $region77: #{tpu_custom_call.1} parent=1 // pred_fallthru
      _
    // Predicated region
    $region78: #{tpu_custom_call.1} parent=1 // pred_check
      _
    $region79: #{tpu_custom_call.1} parent=1 // pred_check_branch
      %181 = sbr.rel (0) target = $region81
    $region80: #{tpu_custom_call.1} parent=1 // pred_region
      %s183 = ssub.s32 16, 16
      %184 = vsyncadd [#allocation12], %s183
      %s186 = sshll.u32 [#allocation13], 4
      %s187 = int_to_ptr.vmem [resolvable:$true] %s186
      %189 = dma.hbm_to_vmem [thread:$0]  %s39, 16, %s187, [#allocation12]
    $region81: #{tpu_custom_call.1} parent=1 // pred_fallthru
      _
    // Predicated region
    $region82: #{tpu_custom_call.1} parent=1 // pred_check
      _
    $region83: #{tpu_custom_call.1} parent=1 // pred_check_branch
      %191 = sbr.rel (0) target = $region85
    $region84: #{tpu_custom_call.1} parent=1 // pred_region
      _
    $region85: #{tpu_custom_call.1} parent=1 // pred_fallthru
      _
    // Predicated region
    $region86: #{tpu_custom_call.1} parent=1 // pred_check
      _
    $region87: #{tpu_custom_call.1} parent=1 // pred_check_branch
      %193 = sbr.rel (0) target = $region89
    $region88: #{tpu_custom_call.1} parent=1 // pred_region
      %s195 = ssub.s32 512, 512
      %196 = vsyncadd [#allocation15], %s195
      %s197 = sshll.u32 [#allocation14], 4
      %s198 = int_to_ptr.vmem [resolvable:$true] %s197
      %203 = dma.hbm_to_vmem [thread:$0]  %s43, 512, %s198, [#allocation15], 128, 128, 8
    $region89: #{tpu_custom_call.1} parent=1 // pred_fallthru
      _
    // Predicated region
    $region90: #{tpu_custom_call.1} parent=1 // pred_check
      _
    $region91: #{tpu_custom_call.1} parent=1 // pred_check_branch
      %205 = sbr.rel (0) target = $region93
    $region92: #{tpu_custom_call.1} parent=1 // pred_region
      _
    $region93: #{tpu_custom_call.1} parent=1 // pred_fallthru
      _
    // Predicated region
    $region94: #{tpu_custom_call.1} parent=1 // pred_check
      _
    $region95: #{tpu_custom_call.1} parent=1 // pred_check_branch
      %207 = sbr.rel (0) target = $region97
    $region96: #{tpu_custom_call.1} parent=1 // pred_region
      %s209 = ssub.s32 512, 512
      %210 = vsyncadd [#allocation15], %s209
      %s211 = sshll.u32 [#allocation16], 4
      %s212 = int_to_ptr.vmem [resolvable:$true] %s211
      %217 = dma.hbm_to_vmem [thread:$0]  %s47, 512, %s212, [#allocation15], 128, 128, 8
    $region97: #{tpu_custom_call.1} parent=1 // pred_fallthru
      _
    // Predicated region
    $region98: #{tpu_custom_call.1} parent=1 // pred_check
      _
    $region99: #{tpu_custom_call.1} parent=1 // pred_check_branch
      %219 = sbr.rel (0) target = $region101
    $region100: #{tpu_custom_call.1} parent=1 // pred_region
      %s221 = ssub.s32 16, 16
      %222 = vsyncadd [#allocation18], %s221
      %s224 = sshll.u32 [#allocation17], 4
      %s225 = int_to_ptr.vmem [resolvable:$true] %s224
      %227 = dma.hbm_to_vmem [thread:$0]  %s49, 16, %s225, [#allocation18]
    $region101: #{tpu_custom_call.1} parent=1 // pred_fallthru
      _
    // Predicated region
    $region102: #{tpu_custom_call.1} parent=1 // pred_check
      _
    $region103: #{tpu_custom_call.1} parent=1 // pred_check_branch
      %229 = sbr.rel (0) target = $region105
    $region104: #{tpu_custom_call.1} parent=1 // pred_region
      %s231 = ssub.s32 512, 512
      %232 = vsyncadd [#allocation18], %s231
      %s233 = sshll.u32 [#allocation19], 4
      %s234 = int_to_ptr.vmem [resolvable:$true] %s233
      %239 = dma.hbm_to_vmem [thread:$0]  %s51, 512, %s234, [#allocation18], 128, 128, 8
    $region105: #{tpu_custom_call.1} parent=1 // pred_fallthru
      _
    // Predicated region
    $region106: #{tpu_custom_call.1} parent=1 // pred_check
      _
    $region107: #{tpu_custom_call.1} parent=1 // pred_check_branch
      %241 = sbr.rel (0) target = $region109
    $region108: #{tpu_custom_call.1} parent=1 // pred_region
      %s243 = ssub.s32 16, 16
      %244 = vsyncadd [#allocation21], %s243
      %s246 = sshll.u32 [#allocation20], 4
      %s247 = int_to_ptr.vmem [resolvable:$true] %s246
      %249 = dma.hbm_to_vmem [thread:$0]  %s53, 16, %s247, [#allocation21]
    $region109: #{tpu_custom_call.1} parent=1 // pred_fallthru
      _
    // Predicated region
    $region110: #{tpu_custom_call.1} parent=1 // pred_check
      _
    $region111: #{tpu_custom_call.1} parent=1 // pred_check_branch
      %251 = sbr.rel (0) target = $region113
    $region112: #{tpu_custom_call.1} parent=1 // pred_region
      %s253 = ssub.s32 512, 512
      %254 = vsyncadd [#allocation21], %s253
      %s255 = sshll.u32 [#allocation22], 4
      %s256 = int_to_ptr.vmem [resolvable:$true] %s255
      %261 = dma.hbm_to_vmem [thread:$0]  %s55, 512, %s256, [#allocation21], 128, 128, 8
    $region113: #{tpu_custom_call.1} parent=1 // pred_fallthru
      _
    // Predicated region
    $region114: #{tpu_custom_call.1} parent=1 // pred_check
      _
    $region115: #{tpu_custom_call.1} parent=1 // pred_check_branch
      %263 = sbr.rel (0) target = $region117
    $region116: #{tpu_custom_call.1} parent=1 // pred_region
      %s265 = ssub.s32 512, 512
      %266 = vsyncadd [#allocation24], %s265
      %s267 = sshll.u32 [#allocation23], 4
      %s268 = int_to_ptr.vmem [resolvable:$true] %s267
      %273 = dma.hbm_to_vmem [thread:$0]  %s57, 512, %s268, [#allocation24], 128, 128, 8
    $region117: #{tpu_custom_call.1} parent=1 // pred_fallthru
      _
    // Predicated region
    $region118: #{tpu_custom_call.1} parent=1 // pred_check
      _
    $region119: #{tpu_custom_call.1} parent=1 // pred_check_branch
      %275 = sbr.rel (0) target = $region121
    $region120: #{tpu_custom_call.1} parent=1 // pred_region
      %s277 = ssub.s32 512, 512
      %278 = vsyncadd [#allocation24], %s277
      %s279 = sshll.u32 [#allocation25], 4
      %s280 = int_to_ptr.vmem [resolvable:$true] %s279
      %285 = dma.hbm_to_vmem [thread:$0]  %s59, 512, %s280, [#allocation24], 128, 128, 8
    $region121: #{tpu_custom_call.1} parent=1 // pred_fallthru
      _
    // Predicated region
    $region122: #{tpu_custom_call.1} parent=1 // pred_check
      _
    $region123: #{tpu_custom_call.1} parent=1 // pred_check_branch
      %287 = sbr.rel (0) target = $region125
    $region124: #{tpu_custom_call.1} parent=1 // pred_region
      _
    $region125: #{tpu_custom_call.1} parent=1 // pred_fallthru
      _
    // Predicated region
    $region126: #{tpu_custom_call.1} parent=1 // pred_check
      _
    $region127: #{tpu_custom_call.1} parent=1 // pred_check_branch
      %289 = sbr.rel (0) target = $region129
    $region128: #{tpu_custom_call.1} parent=1 // pred_region
      %s291 = ssub.s32 16, 16
      %292 = vsyncadd [#allocation27], %s291
      %s294 = sshll.u32 [#allocation26], 4
      %s295 = int_to_ptr.vmem [resolvable:$true] %s294
      %297 = dma.hbm_to_vmem [thread:$0]  %s63, 16, %s295, [#allocation27]
    $region129: #{tpu_custom_call.1} parent=1 // pred_fallthru
      _
    // Predicated region
    $region130: #{tpu_custom_call.1} parent=1 // pred_check
      _
    $region131: #{tpu_custom_call.1} parent=1 // pred_check_branch
      %299 = sbr.rel (0) target = $region133
    $region132: #{tpu_custom_call.1} parent=1 // pred_region
      %s301 = ssub.s32 512, 512
      %302 = vsyncadd [#allocation27], %s301
      %s303 = sshll.u32 [#allocation28], 4
      %s304 = int_to_ptr.vmem [resolvable:$true] %s303
      %309 = dma.hbm_to_vmem [thread:$0]  %s65, 512, %s304, [#allocation27], 128, 128, 8
    $region133: #{tpu_custom_call.1} parent=1 // pred_fallthru
      _
    // Predicated region
    $region134: #{tpu_custom_call.1} parent=1 // pred_check
      _
    $region135: #{tpu_custom_call.1} parent=1 // pred_check_branch
      %311 = sbr.rel (0) target = $region137
    $region136: #{tpu_custom_call.1} parent=1 // pred_region
      %s313 = ssub.s32 16, 16
      %314 = vsyncadd [#allocation30], %s313
      %s316 = sshll.u32 [#allocation29], 4
      %s317 = int_to_ptr.vmem [resolvable:$true] %s316
      %319 = dma.hbm_to_vmem [thread:$0]  %s67, 16, %s317, [#allocation30]
    $region137: #{tpu_custom_call.1} parent=1 // pred_fallthru
      _
    // Predicated region
    $region138: #{tpu_custom_call.1} parent=1 // pred_check
      _
    $region139: #{tpu_custom_call.1} parent=1 // pred_check_branch
      %321 = sbr.rel (0) target = $region141
    $region140: #{tpu_custom_call.1} parent=1 // pred_region
      %s323 = ssub.s32 512, 512
      %324 = vsyncadd [#allocation30], %s323
      %s325 = sshll.u32 [#allocation31], 4
      %s326 = int_to_ptr.vmem [resolvable:$true] %s325
      %331 = dma.hbm_to_vmem [thread:$0]  %s69, 512, %s326, [#allocation30], 128, 128, 8
    $region141: #{tpu_custom_call.1} parent=1 // pred_fallthru
      _
    // Predicated region
    $region142: #{tpu_custom_call.1} parent=1 // pred_check
      _
    $region143: #{tpu_custom_call.1} parent=1 // pred_check_branch
      %333 = sbr.rel (0) target = $region145
    $region144: #{tpu_custom_call.1} parent=1 // pred_region
      %s335 = ssub.s32 512, 512
      %336 = vsyncadd [#allocation33], %s335
      %s337 = sshll.u32 [#allocation32], 4
      %s338 = int_to_ptr.vmem [resolvable:$true] %s337
      %343 = dma.hbm_to_vmem [thread:$0]  %s71, 512, %s338, [#allocation33], 128, 128, 8
    $region145: #{tpu_custom_call.1} parent=1 // pred_fallthru
      _
    // Predicated region
    $region146: #{tpu_custom_call.1} parent=1 // pred_check
      _
    $region147: #{tpu_custom_call.1} parent=1 // pred_check_branch
      %345 = sbr.rel (0) target = $region149
    $region148: #{tpu_custom_call.1} parent=1 // pred_region
      _
    $region149: #{tpu_custom_call.1} parent=1 // pred_fallthru
      _
    // Predicated region
    $region150: #{tpu_custom_call.1} parent=1 // pred_check
      _
    $region151: #{tpu_custom_call.1} parent=1 // pred_check_branch
      %347 = sbr.rel (0) target = $region153
    $region152: #{tpu_custom_call.1} parent=1 // pred_region
      _
    $region153: #{tpu_custom_call.1} parent=1 // pred_fallthru
      _
    // Predicated region
    $region154: #{tpu_custom_call.1} parent=1 // pred_check
      _
    $region155: #{tpu_custom_call.1} parent=1 // pred_check_branch
      %349 = sbr.rel (0) target = $region157
    $region156: #{tpu_custom_call.1} parent=1 // pred_region
      %350 = dma.done [#allocation3], 128
    $region157: #{tpu_custom_call.1} parent=1 // pred_fallthru
      _
    // Predicated region
    $region158: #{tpu_custom_call.1} parent=1 // pred_check
      _
    $region159: #{tpu_custom_call.1} parent=1 // pred_check_branch
      %352 = sbr.rel (0) target = $region161
    $region160: #{tpu_custom_call.1} parent=1 // pred_region
      %353 = dma.done [#allocation6], 16
    $region161: #{tpu_custom_call.1} parent=1 // pred_fallthru
      _
    // Predicated region
    $region162: #{tpu_custom_call.1} parent=1 // pred_check
      _
    $region163: #{tpu_custom_call.1} parent=1 // pred_check_branch
      %355 = sbr.rel (0) target = $region165
    $region164: #{tpu_custom_call.1} parent=1 // pred_region
      %356 = dma.done [#allocation6], 16
    $region165: #{tpu_custom_call.1} parent=1 // pred_fallthru
      _
    // Predicated region
    $region166: #{tpu_custom_call.1} parent=1 // pred_check
      _
    $region167: #{tpu_custom_call.1} parent=1 // pred_check_branch
      %358 = sbr.rel (0) target = $region169
    $region168: #{tpu_custom_call.1} parent=1 // pred_region
      %359 = dma.done [#allocation9], 16
    $region169: #{tpu_custom_call.1} parent=1 // pred_fallthru
      _
    // Predicated region
    $region170: #{tpu_custom_call.1} parent=1 // pred_check
      _
    $region171: #{tpu_custom_call.1} parent=1 // pred_check_branch
      %361 = sbr.rel (0) target = $region173
    $region172: #{tpu_custom_call.1} parent=1 // pred_region
      %362 = dma.done [#allocation9], 16
    $region173: #{tpu_custom_call.1} parent=1 // pred_fallthru
      _
    // Predicated region
    $region174: #{tpu_custom_call.1} parent=1 // pred_check
      _
    $region175: #{tpu_custom_call.1} parent=1 // pred_check_branch
      %364 = sbr.rel (0) target = $region177
    $region176: #{tpu_custom_call.1} parent=1 // pred_region
      %365 = dma.done [#allocation12], 16
    $region177: #{tpu_custom_call.1} parent=1 // pred_fallthru
      _
    // Predicated region
    $region178: #{tpu_custom_call.1} parent=1 // pred_check
      _
    $region179: #{tpu_custom_call.1} parent=1 // pred_check_branch
      %367 = sbr.rel (0) target = $region181
    $region180: #{tpu_custom_call.1} parent=1 // pred_region
      %368 = dma.done [#allocation12], 16
    $region181: #{tpu_custom_call.1} parent=1 // pred_fallthru
      _
    // Predicated region
    $region182: #{tpu_custom_call.1} parent=1 // pred_check
      _
    $region183: #{tpu_custom_call.1} parent=1 // pred_check_branch
      %370 = sbr.rel (0) target = $region185
    $region184: #{tpu_custom_call.1} parent=1 // pred_region
      %371 = dma.done [#allocation15], 512
    $region185: #{tpu_custom_call.1} parent=1 // pred_fallthru
      _
    // Predicated region
    $region186: #{tpu_custom_call.1} parent=1 // pred_check
      _
    $region187: #{tpu_custom_call.1} parent=1 // pred_check_branch
      %373 = sbr.rel (0) target = $region189
    $region188: #{tpu_custom_call.1} parent=1 // pred_region
      %374 = dma.done [#allocation15], 512
    $region189: #{tpu_custom_call.1} parent=1 // pred_fallthru
      _
    // Predicated region
    $region190: #{tpu_custom_call.1} parent=1 // pred_check
      _
    $region191: #{tpu_custom_call.1} parent=1 // pred_check_branch
      %376 = sbr.rel (0) target = $region193
    $region192: #{tpu_custom_call.1} parent=1 // pred_region
      %377 = dma.done [#allocation18], 16
    $region193: #{tpu_custom_call.1} parent=1 // pred_fallthru
      _
    // Predicated region
    $region194: #{tpu_custom_call.1} parent=1 // pred_check
      _
    $region195: #{tpu_custom_call.1} parent=1 // pred_check_branch
      %379 = sbr.rel (0) target = $region197
    $region196: #{tpu_custom_call.1} parent=1 // pred_region
      %380 = dma.done [#allocation18], 512
    $region197: #{tpu_custom_call.1} parent=1 // pred_fallthru
      _
    // Predicated region
    $region198: #{tpu_custom_call.1} parent=1 // pred_check
      _
    $region199: #{tpu_custom_call.1} parent=1 // pred_check_branch
      %382 = sbr.rel (0) target = $region201
    $region200: #{tpu_custom_call.1} parent=1 // pred_region
      %383 = dma.done [#allocation21], 16
    $region201: #{tpu_custom_call.1} parent=1 // pred_fallthru
      _
    // Predicated region
    $region202: #{tpu_custom_call.1} parent=1 // pred_check
      _
    $region203: #{tpu_custom_call.1} parent=1 // pred_check_branch
      %385 = sbr.rel (0) target = $region205
    $region204: #{tpu_custom_call.1} parent=1 // pred_region
      %386 = dma.done [#allocation21], 512
    $region205: #{tpu_custom_call.1} parent=1 // pred_fallthru
      _
    // Predicated region
    $region206: #{tpu_custom_call.1} parent=1 // pred_check
      _
    $region207: #{tpu_custom_call.1} parent=1 // pred_check_branch
      %388 = sbr.rel (0) target = $region209
    $region208: #{tpu_custom_call.1} parent=1 // pred_region
      %389 = dma.done [#allocation24], 512
    $region209: #{tpu_custom_call.1} parent=1 // pred_fallthru
      _
    // Predicated region
    $region210: #{tpu_custom_call.1} parent=1 // pred_check
      _
    $region211: #{tpu_custom_call.1} parent=1 // pred_check_branch
      %391 = sbr.rel (0) target = $region213
    $region212: #{tpu_custom_call.1} parent=1 // pred_region
      %392 = dma.done [#allocation24], 512
    $region213: #{tpu_custom_call.1} parent=1 // pred_fallthru
      _
    // Predicated region
    $region214: #{tpu_custom_call.1} parent=1 // pred_check
      _
    $region215: #{tpu_custom_call.1} parent=1 // pred_check_branch
      %394 = sbr.rel (0) target = $region217
    $region216: #{tpu_custom_call.1} parent=1 // pred_region
      %395 = dma.done [#allocation27], 16
    $region217: #{tpu_custom_call.1} parent=1 // pred_fallthru
      _
    // Predicated region
    $region218: #{tpu_custom_call.1} parent=1 // pred_check
      _
    $region219: #{tpu_custom_call.1} parent=1 // pred_check_branch
      %397 = sbr.rel (0) target = $region221
    $region220: #{tpu_custom_call.1} parent=1 // pred_region
      %398 = dma.done [#allocation27], 512
    $region221: #{tpu_custom_call.1} parent=1 // pred_fallthru
      _
    // Predicated region
    $region222: #{tpu_custom_call.1} parent=1 // pred_check
      _
    $region223: #{tpu_custom_call.1} parent=1 // pred_check_branch
      %400 = sbr.rel (0) target = $region225
    $region224: #{tpu_custom_call.1} parent=1 // pred_region
      %401 = dma.done [#allocation30], 16
    $region225: #{tpu_custom_call.1} parent=1 // pred_fallthru
      _
    // Predicated region
    $region226: #{tpu_custom_call.1} parent=1 // pred_check
      _
    $region227: #{tpu_custom_call.1} parent=1 // pred_check_branch
      %403 = sbr.rel (0) target = $region229
    $region228: #{tpu_custom_call.1} parent=1 // pred_region
      %404 = dma.done [#allocation30], 512
    $region229: #{tpu_custom_call.1} parent=1 // pred_fallthru
      _
    // Predicated region
    $region230: #{tpu_custom_call.1} parent=1 // pred_check
      _
    $region231: #{tpu_custom_call.1} parent=1 // pred_check_branch
      %406 = sbr.rel (0) target = $region233
    $region232: #{tpu_custom_call.1} parent=1 // pred_region
      %407 = dma.done [#allocation33], 512
    $region233: #{tpu_custom_call.1} parent=1 // pred_fallthru
      _
    %v408 = vld [vmem:[%s1] sm:$0xff]
    %v409 = vld [vmem:[%s1 + $0x8] sm:$0xff]
    %v410 = vld [vmem:[%s1 + $0x10] sm:$0xff]
    %v411 = vld [vmem:[%s1 + $0x18] sm:$0xff]
    %v412 = vld [vmem:[#allocation2] sm:$0xff]
    %v413 = vld [vmem:[%s5] sm:$0x1]
    %v415 = vlaneseq
    %v416 = vshrl.u32 %v415, 7
    %v417 = vsub.s32 0, %v416
    %v418 = vrot.slane %v413, %v417
    %vm420 = vcmask 64512
    %v422 = vsel %vm420, %v408, 0
    %v425 = vsel %vm420, %v409, 0
    %v428 = vsel %vm420, %v410, 0
    %v431 = vsel %vm420, %v411, 0
    %433 = vmatprep.subr.mxu0 0.0
    %434 = vmatpush1.msra.mxu0 %v412
    %435 = vmatprep.subr.mxu0 0.0
    %436 = vmatpush1.msra.mxu0 0.0
    %437 = vmatprep.subr.mxu0 0.0
    %438 = vmatpush1.msra.mxu0 0.0
    %439 = vmatprep.subr.mxu0 0.0
    %440 = vmatpush1.msra.mxu0 0.0
    %441 = vmatprep.subr.mxu0 0.0
    %442 = vmatpush1.msra.mxu0 0.0
    %443 = vmatprep.subr.mxu0 0.0
    %444 = vmatpush1.msra.mxu0 0.0
    %445 = vmatprep.subr.mxu0 0.0
    %446 = vmatpush1.msra.mxu0 0.0
    %447 = vmatprep.subr.mxu0 0.0
    %448 = vmatpush1.msra.mxu0 0.0
    %449 = vmatprep.subr.mxu0 0.0
    %450 = vmatpush1.msra.mxu0 0.0
    %451 = vmatprep.subr.mxu0 0.0
    %452 = vmatpush1.msra.mxu0 0.0
    %453 = vmatprep.subr.mxu0 0.0
    %454 = vmatpush1.msra.mxu0 0.0
    %455 = vmatprep.subr.mxu0 0.0
    %456 = vmatpush1.msra.mxu0 0.0
    %457 = vmatprep.subr.mxu0 0.0
    %458 = vmatpush1.msra.mxu0 0.0
    %459 = vmatprep.subr.mxu0 0.0
    %460 = vmatpush1.msra.mxu0 0.0
    %461 = vmatprep.subr.mxu0 0.0
    %462 = vmatpush1.msra.mxu0 0.0
    %463 = vmatprep.subr.mxu0 0.0
    %464 = vmatpush1.msra.mxu0 0.0
    %465 = vmatprep.subr.mxu0 0.0
    %466 = vmatpush1.msra.mxu0 0.0
    %467 = vmatprep.subr.mxu0 0.0
    %468 = vmatpush1.msra.mxu0 0.0
    %469 = vmatprep.subr.mxu0 0.0
    %470 = vmatpush1.msra.mxu0 0.0
    %471 = vmatprep.subr.mxu0 0.0
    %472 = vmatpush1.msra.mxu0 0.0
    %473 = vmatprep.subr.mxu0 0.0
    %474 = vmatpush1.msra.mxu0 0.0
    %475 = vmatprep.subr.mxu0 0.0
    %476 = vmatpush1.msra.mxu0 0.0
    %477 = vmatprep.subr.mxu0 0.0
    %478 = vmatpush1.msra.mxu0 0.0
    %479 = vmatprep.subr.mxu0 0.0
    %480 = vmatpush1.msra.mxu0 0.0
    %481 = vmatprep.subr.mxu0 0.0
    %482 = vmatpush1.msra.mxu0 0.0
    %483 = vmatprep.subr.mxu0 0.0
    %484 = vmatpush1.msra.mxu0 0.0
    %485 = vmatprep.subr.mxu0 0.0
    %486 = vmatpush1.msra.mxu0 0.0
    %487 = vmatprep.subr.mxu0 0.0
    %488 = vmatpush1.msra.mxu0 0.0
    %489 = vmatprep.subr.mxu0 0.0
    %490 = vmatpush1.msra.mxu0 0.0
    %491 = vmatprep.subr.mxu0 0.0
    %492 = vmatpush1.msra.mxu0 0.0
    %493 = vmatprep.subr.mxu0 0.0
    %494 = vmatpush1.msra.mxu0 0.0
    %495 = vmatprep.subr.mxu0 0.0
    %496 = vmatpush1.msra.mxu0 0.0
    %497 = vmatprep.mubr.f32.mxu0 0.0
    %498 = vmatmul.mubr.f32.gmra.mrb[0].mxu0 %v422
    %v499 = vpop.f32.mrb[0].mxu0
    %v500 = vadd.f32 %v418, %v499
    %v501 = vpop.f32.mrb[0].mxu0
    %502 = vmatprep.mubr.f32.mxu0 0.0
    %503 = vmatmul.mubr.f32.gmra.mrb[0].mxu0 %v425
    %v504 = vpop.f32.mrb[0].mxu0
    %v505 = vadd.f32 %v418, %v504
    %v506 = vpop.f32.mrb[0].mxu0
    %507 = vmatprep.mubr.f32.mxu0 0.0
    %508 = vmatmul.mubr.f32.gmra.mrb[0].mxu0 %v428
    %v509 = vpop.f32.mrb[0].mxu0
    %v510 = vadd.f32 %v418, %v509
    %v511 = vpop.f32.mrb[0].mxu0
    %512 = vmatprep.mubr.f32.mxu0 0.0
    %513 = vmatmul.mubr.f32.gmra.mrb[0].mxu0 %v431
    %v514 = vpop.f32.mrb[0].mxu0
    %v515 = vadd.f32 %v418, %v514
    %v516 = vpop.f32.mrb[0].mxu0
    %517 = vdwg.mxu0
    %v518 = vmax.f32 %v500, 0.0
    %v519 = vmax.f32 %v505, 0.0
    %v520 = vmax.f32 %v510, 0.0
    %v521 = vmax.f32 %v515, 0.0
    %v522 = vld [vmem:[%s7] sm:$0xff]
    %v523 = vld [vmem:[%s7 + $0x8] sm:$0xff]
    %v524 = vld [vmem:[%s7 + $0x10] sm:$0xff]
    %v525 = vld [vmem:[%s7 + $0x18] sm:$0xff]
    %v526 = vld [vmem:[%s7 + $0x20] sm:$0xff]
    %v527 = vld [vmem:[%s7 + $0x28] sm:$0xff]
    %v528 = vld [vmem:[%s7 + $0x30] sm:$0xff]
    %v529 = vld [vmem:[%s7 + $0x38] sm:$0xff]
    %v530 = vld [vmem:[#allocation5] sm:$0x1]
    %v532 = vlaneseq
    %v533 = vshrl.u32 %v532, 7
    %v534 = vsub.s32 0, %v533
    %v535 = vrot.slane %v530, %v534
    %vm537 = vcmask 523264
    %v539 = vsel %vm537, %v518, 0
    %v542 = vsel %vm537, %v519, 0
    %v545 = vsel %vm537, %v520, 0
    %v548 = vsel %vm537, %v521, 0
    %550 = vmatprep.subr.mxu0 0.0
    %551 = vmatpush1.msra.mxu0 %v522
    %552 = vmatprep.subr.mxu0 0.0
    %553 = vmatpush1.msra.mxu0 %v523
    %554 = vmatprep.subr.mxu0 0.0
    %555 = vmatpush1.msra.mxu0 %v524
    %556 = vmatprep.subr.mxu0 0.0
    %557 = vmatpush1.msra.mxu0 %v525
    %558 = vmatprep.subr.mxu0 0.0
    %559 = vmatpush1.msra.mxu0 %v526
    %560 = vmatprep.subr.mxu0 0.0
    %561 = vmatpush1.msra.mxu0 %v527
    %562 = vmatprep.subr.mxu0 0.0
    %563 = vmatpush1.msra.mxu0 %v528
    %564 = vmatprep.subr.mxu0 0.0
    %565 = vmatpush1.msra.mxu0 %v529
    %566 = vmatprep.subr.mxu0 0.0
    %567 = vmatpush1.msra.mxu0 0.0
    %568 = vmatprep.subr.mxu0 0.0
    %569 = vmatpush1.msra.mxu0 0.0
    %570 = vmatprep.subr.mxu0 0.0
    %571 = vmatpush1.msra.mxu0 0.0
    %572 = vmatprep.subr.mxu0 0.0
    %573 = vmatpush1.msra.mxu0 0.0
    %574 = vmatprep.subr.mxu0 0.0
    %575 = vmatpush1.msra.mxu0 0.0
    %576 = vmatprep.subr.mxu0 0.0
    %577 = vmatpush1.msra.mxu0 0.0
    %578 = vmatprep.subr.mxu0 0.0
    %579 = vmatpush1.msra.mxu0 0.0
    %580 = vmatprep.subr.mxu0 0.0
    %581 = vmatpush1.msra.mxu0 0.0
    %582 = vmatprep.subr.mxu0 0.0
    %583 = vmatpush1.msra.mxu0 0.0
    %584 = vmatprep.subr.mxu0 0.0
    %585 = vmatpush1.msra.mxu0 0.0
    %586 = vmatprep.subr.mxu0 0.0
    %587 = vmatpush1.msra.mxu0 0.0
    %588 = vmatprep.subr.mxu0 0.0
    %589 = vmatpush1.msra.mxu0 0.0
    %590 = vmatprep.subr.mxu0 0.0
    %591 = vmatpush1.msra.mxu0 0.0
    %592 = vmatprep.subr.mxu0 0.0
    %593 = vmatpush1.msra.mxu0 0.0
    %594 = vmatprep.subr.mxu0 0.0
    %595 = vmatpush1.msra.mxu0 0.0
    %596 = vmatprep.subr.mxu0 0.0
    %597 = vmatpush1.msra.mxu0 0.0
    %598 = vmatprep.subr.mxu0 0.0
    %599 = vmatpush1.msra.mxu0 0.0
    %600 = vmatprep.subr.mxu0 0.0
    %601 = vmatpush1.msra.mxu0 0.0
    %602 = vmatprep.subr.mxu0 0.0
    %603 = vmatpush1.msra.mxu0 0.0
    %604 = vmatprep.subr.mxu0 0.0
    %605 = vmatpush1.msra.mxu0 0.0
    %606 = vmatprep.subr.mxu0 0.0
    %607 = vmatpush1.msra.mxu0 0.0
    %608 = vmatprep.subr.mxu0 0.0
    %609 = vmatpush1.msra.mxu0 0.0
    %610 = vmatprep.subr.mxu0 0.0
    %611 = vmatpush1.msra.mxu0 0.0
    %612 = vmatprep.subr.mxu0 0.0
    %613 = vmatpush1.msra.mxu0 0.0
    %614 = vmatprep.mubr.f32.mxu0 0.0
    %615 = vmatmul.mubr.f32.gmra.mrb[0].mxu0 %v539
    %v616 = vpop.f32.mrb[0].mxu0
    %v617 = vadd.f32 %v535, %v616
    %v618 = vpop.f32.mrb[0].mxu0
    %619 = vmatprep.mubr.f32.mxu0 0.0
    %620 = vmatmul.mubr.f32.gmra.mrb[0].mxu0 %v542
    %v621 = vpop.f32.mrb[0].mxu0
    %v622 = vadd.f32 %v535, %v621
    %v623 = vpop.f32.mrb[0].mxu0
    %624 = vmatprep.mubr.f32.mxu0 0.0
    %625 = vmatmul.mubr.f32.gmra.mrb[0].mxu0 %v545
    %v626 = vpop.f32.mrb[0].mxu0
    %v627 = vadd.f32 %v535, %v626
    %v628 = vpop.f32.mrb[0].mxu0
    %629 = vmatprep.mubr.f32.mxu0 0.0
    %630 = vmatmul.mubr.f32.gmra.mrb[0].mxu0 %v548
    %v631 = vpop.f32.mrb[0].mxu0
    %v632 = vadd.f32 %v535, %v631
    %v633 = vpop.f32.mrb[0].mxu0
    %634 = vdwg.mxu0
    %v635 = vmax.f32 %v617, 0.0
    %v636 = vmax.f32 %v622, 0.0
    %v637 = vmax.f32 %v627, 0.0
    %v638 = vmax.f32 %v632, 0.0
    %v639 = vld [vmem:[%s11] sm:$0xff]
    %v640 = vld [vmem:[%s11 + $0x8] sm:$0xff]
    %v641 = vld [vmem:[%s11 + $0x10] sm:$0xff]
    %v642 = vld [vmem:[%s11 + $0x18] sm:$0xff]
    %v643 = vld [vmem:[#allocation7] sm:$0x1]
    %v645 = vlaneseq
    %v646 = vshrl.u32 %v645, 7
    %v647 = vsub.s32 0, %v646
    %v648 = vrot.slane %v643, %v647
    %vm650 = vcmask 261120
    %v652 = vsel %vm650, %v635, 0
    %v655 = vsel %vm650, %v636, 0
    %v658 = vsel %vm650, %v637, 0
    %v661 = vsel %vm650, %v638, 0
    %663 = vmatprep.subr.mxu0 0.0
    %664 = vmatpush1.msra.mxu0 %v639
    %665 = vmatprep.subr.mxu0 0.0
    %666 = vmatpush1.msra.mxu0 %v640
    %667 = vmatprep.subr.mxu0 0.0
    %668 = vmatpush1.msra.mxu0 %v641
    %669 = vmatprep.subr.mxu0 0.0
    %670 = vmatpush1.msra.mxu0 %v642
    %671 = vmatprep.subr.mxu0 0.0
    %672 = vmatpush1.msra.mxu0 0.0
    %673 = vmatprep.subr.mxu0 0.0
    %674 = vmatpush1.msra.mxu0 0.0
    %675 = vmatprep.subr.mxu0 0.0
    %676 = vmatpush1.msra.mxu0 0.0
    %677 = vmatprep.subr.mxu0 0.0
    %678 = vmatpush1.msra.mxu0 0.0
    %679 = vmatprep.subr.mxu0 0.0
    %680 = vmatpush1.msra.mxu0 0.0
    %681 = vmatprep.subr.mxu0 0.0
    %682 = vmatpush1.msra.mxu0 0.0
    %683 = vmatprep.subr.mxu0 0.0
    %684 = vmatpush1.msra.mxu0 0.0
    %685 = vmatprep.subr.mxu0 0.0
    %686 = vmatpush1.msra.mxu0 0.0
    %687 = vmatprep.subr.mxu0 0.0
    %688 = vmatpush1.msra.mxu0 0.0
    %689 = vmatprep.subr.mxu0 0.0
    %690 = vmatpush1.msra.mxu0 0.0
    %691 = vmatprep.subr.mxu0 0.0
    %692 = vmatpush1.msra.mxu0 0.0
    %693 = vmatprep.subr.mxu0 0.0
    %694 = vmatpush1.msra.mxu0 0.0
    %695 = vmatprep.subr.mxu0 0.0
    %696 = vmatpush1.msra.mxu0 0.0
    %697 = vmatprep.subr.mxu0 0.0
    %698 = vmatpush1.msra.mxu0 0.0
    %699 = vmatprep.subr.mxu0 0.0
    %700 = vmatpush1.msra.mxu0 0.0
    %701 = vmatprep.subr.mxu0 0.0
    %702 = vmatpush1.msra.mxu0 0.0
    %703 = vmatprep.subr.mxu0 0.0
    %704 = vmatpush1.msra.mxu0 0.0
    %705 = vmatprep.subr.mxu0 0.0
    %706 = vmatpush1.msra.mxu0 0.0
    %707 = vmatprep.subr.mxu0 0.0
    %708 = vmatpush1.msra.mxu0 0.0
    %709 = vmatprep.subr.mxu0 0.0
    %710 = vmatpush1.msra.mxu0 0.0
    %711 = vmatprep.subr.mxu0 0.0
    %712 = vmatpush1.msra.mxu0 0.0
    %713 = vmatprep.subr.mxu0 0.0
    %714 = vmatpush1.msra.mxu0 0.0
    %715 = vmatprep.subr.mxu0 0.0
    %716 = vmatpush1.msra.mxu0 0.0
    %717 = vmatprep.subr.mxu0 0.0
    %718 = vmatpush1.msra.mxu0 0.0
    %719 = vmatprep.subr.mxu0 0.0
    %720 = vmatpush1.msra.mxu0 0.0
    %721 = vmatprep.subr.mxu0 0.0
    %722 = vmatpush1.msra.mxu0 0.0
    %723 = vmatprep.subr.mxu0 0.0
    %724 = vmatpush1.msra.mxu0 0.0
    %725 = vmatprep.subr.mxu0 0.0
    %726 = vmatpush1.msra.mxu0 0.0
    %727 = vmatprep.mubr.f32.mxu0 0.0
    %728 = vmatmul.mubr.f32.gmra.mrb[0].mxu0 %v652
    %v729 = vpop.f32.mrb[0].mxu0
    %v730 = vadd.f32 %v648, %v729
    %v731 = vpop.f32.mrb[0].mxu0
    %732 = vmatprep.mubr.f32.mxu0 0.0
    %733 = vmatmul.mubr.f32.gmra.mrb[0].mxu0 %v655
    %v734 = vpop.f32.mrb[0].mxu0
    %v735 = vadd.f32 %v648, %v734
    %v736 = vpop.f32.mrb[0].mxu0
    %737 = vmatprep.mubr.f32.mxu0 0.0
    %738 = vmatmul.mubr.f32.gmra.mrb[0].mxu0 %v658
    %v739 = vpop.f32.mrb[0].mxu0
    %v740 = vadd.f32 %v648, %v739
    %v741 = vpop.f32.mrb[0].mxu0
    %742 = vmatprep.mubr.f32.mxu0 0.0
    %743 = vmatmul.mubr.f32.gmra.mrb[0].mxu0 %v661
    %v744 = vpop.f32.mrb[0].mxu0
    %v745 = vadd.f32 %v648, %v744
    %v746 = vpop.f32.mrb[0].mxu0
    %747 = vdwg.mxu0
    %v748 = vld [vmem:[%s15] sm:$0xff]
    %v749 = vld [vmem:[%s15 + $0x8] sm:$0xff]
    %v750 = vld [vmem:[%s15 + $0x10] sm:$0xff]
    %v751 = vld [vmem:[%s15 + $0x18] sm:$0xff]
    %v752 = vld [vmem:[%s15 + $0x20] sm:$0xff]
    %v753 = vld [vmem:[%s15 + $0x28] sm:$0xff]
    %v754 = vld [vmem:[%s15 + $0x30] sm:$0xff]
    %v755 = vld [vmem:[%s15 + $0x38] sm:$0xff]
    %v757 = vsel %vm537, %v500, 0
    %v760 = vsel %vm537, %v505, 0
    %v763 = vsel %vm537, %v510, 0
    %v766 = vsel %vm537, %v515, 0
    %768 = vmatprep.subr.mxu0 0.0
    %769 = vmatpush1.msra.mxu0 %v748
    %770 = vmatprep.subr.mxu0 0.0
    %771 = vmatpush1.msra.mxu0 %v749
    %772 = vmatprep.subr.mxu0 0.0
    %773 = vmatpush1.msra.mxu0 %v750
    %774 = vmatprep.subr.mxu0 0.0
    %775 = vmatpush1.msra.mxu0 %v751
    %776 = vmatprep.subr.mxu0 0.0
    %777 = vmatpush1.msra.mxu0 %v752
    %778 = vmatprep.subr.mxu0 0.0
    %779 = vmatpush1.msra.mxu0 %v753
    %780 = vmatprep.subr.mxu0 0.0
    %781 = vmatpush1.msra.mxu0 %v754
    %782 = vmatprep.subr.mxu0 0.0
    %783 = vmatpush1.msra.mxu0 %v755
    %784 = vmatprep.subr.mxu0 0.0
    %785 = vmatpush1.msra.mxu0 0.0
    %786 = vmatprep.subr.mxu0 0.0
    %787 = vmatpush1.msra.mxu0 0.0
    %788 = vmatprep.subr.mxu0 0.0
    %789 = vmatpush1.msra.mxu0 0.0
    %790 = vmatprep.subr.mxu0 0.0
    %791 = vmatpush1.msra.mxu0 0.0
    %792 = vmatprep.subr.mxu0 0.0
    %793 = vmatpush1.msra.mxu0 0.0
    %794 = vmatprep.subr.mxu0 0.0
    %795 = vmatpush1.msra.mxu0 0.0
    %796 = vmatprep.subr.mxu0 0.0
    %797 = vmatpush1.msra.mxu0 0.0
    %798 = vmatprep.subr.mxu0 0.0
    %799 = vmatpush1.msra.mxu0 0.0
    %800 = vmatprep.subr.mxu0 0.0
    %801 = vmatpush1.msra.mxu0 0.0
    %802 = vmatprep.subr.mxu0 0.0
    %803 = vmatpush1.msra.mxu0 0.0
    %804 = vmatprep.subr.mxu0 0.0
    %805 = vmatpush1.msra.mxu0 0.0
    %806 = vmatprep.subr.mxu0 0.0
    %807 = vmatpush1.msra.mxu0 0.0
    %808 = vmatprep.subr.mxu0 0.0
    %809 = vmatpush1.msra.mxu0 0.0
    %810 = vmatprep.subr.mxu0 0.0
    %811 = vmatpush1.msra.mxu0 0.0
    %812 = vmatprep.subr.mxu0 0.0
    %813 = vmatpush1.msra.mxu0 0.0
    %814 = vmatprep.subr.mxu0 0.0
    %815 = vmatpush1.msra.mxu0 0.0
    %816 = vmatprep.subr.mxu0 0.0
    %817 = vmatpush1.msra.mxu0 0.0
    %818 = vmatprep.subr.mxu0 0.0
    %819 = vmatpush1.msra.mxu0 0.0
    %820 = vmatprep.subr.mxu0 0.0
    %821 = vmatpush1.msra.mxu0 0.0
    %822 = vmatprep.subr.mxu0 0.0
    %823 = vmatpush1.msra.mxu0 0.0
    %824 = vmatprep.subr.mxu0 0.0
    %825 = vmatpush1.msra.mxu0 0.0
    %826 = vmatprep.subr.mxu0 0.0
    %827 = vmatpush1.msra.mxu0 0.0
    %828 = vmatprep.subr.mxu0 0.0
    %829 = vmatpush1.msra.mxu0 0.0
    %830 = vmatprep.subr.mxu0 0.0
    %831 = vmatpush1.msra.mxu0 0.0
    %832 = vmatprep.mubr.f32.mxu0 0.0
    %833 = vmatmul.mubr.f32.gmra.mrb[0].mxu0 %v757
    %v834 = vpop.f32.mrb[0].mxu0
    %v835 = vadd.f32 %v730, %v834
    %v836 = vpop.f32.mrb[0].mxu0
    %837 = vmatprep.mubr.f32.mxu0 0.0
    %838 = vmatmul.mubr.f32.gmra.mrb[0].mxu0 %v760
    %v839 = vpop.f32.mrb[0].mxu0
    %v840 = vadd.f32 %v735, %v839
    %v841 = vpop.f32.mrb[0].mxu0
    %842 = vmatprep.mubr.f32.mxu0 0.0
    %843 = vmatmul.mubr.f32.gmra.mrb[0].mxu0 %v763
    %v844 = vpop.f32.mrb[0].mxu0
    %v845 = vadd.f32 %v740, %v844
    %v846 = vpop.f32.mrb[0].mxu0
    %847 = vmatprep.mubr.f32.mxu0 0.0
    %848 = vmatmul.mubr.f32.gmra.mrb[0].mxu0 %v766
    %v849 = vpop.f32.mrb[0].mxu0
    %v850 = vadd.f32 %v745, %v849
    %v851 = vpop.f32.mrb[0].mxu0
    %852 = vdwg.mxu0
    %v853 = vsel %vm650, %v835, -inf
    %v854 = vrot.slane %v853, 4
    %v855 = vmax.f32 %v853, %v854
    %v856 = vrot.slane %v855, 2
    %v857 = vmax.f32 %v855, %v856
    %v858 = vrot.slane %v857, 1
    %v859 = vmax.f32 %v857, %v858
    %v860 = vsel %vm650, %v840, -inf
    %v861 = vrot.slane %v860, 4
    %v862 = vmax.f32 %v860, %v861
    %v863 = vrot.slane %v862, 2
    %v864 = vmax.f32 %v862, %v863
    %v865 = vrot.slane %v864, 1
    %v866 = vmax.f32 %v864, %v865
    %v867 = vsel %vm650, %v845, -inf
    %v868 = vrot.slane %v867, 4
    %v869 = vmax.f32 %v867, %v868
    %v870 = vrot.slane %v869, 2
    %v871 = vmax.f32 %v869, %v870
    %v872 = vrot.slane %v871, 1
    %v873 = vmax.f32 %v871, %v872
    %v874 = vsel %vm650, %v850, -inf
    %v875 = vrot.slane %v874, 4
    %v876 = vmax.f32 %v874, %v875
    %v877 = vrot.slane %v876, 2
    %v878 = vmax.f32 %v876, %v877
    %v879 = vrot.slane %v878, 1
    %v880 = vmax.f32 %v878, %v879
    %v881 = vmax.f32 %v835, 0.0
    %v882 = vmax.f32 %v840, 0.0
    %v883 = vmax.f32 %v845, 0.0
    %v884 = vmax.f32 %v850, 0.0
    %v885 = vld [vmem:[%s17] sm:$0xff]
    %v886 = vld [vmem:[%s17 + $0x8] sm:$0xff]
    %v887 = vld [vmem:[%s17 + $0x10] sm:$0xff]
    %v888 = vld [vmem:[%s17 + $0x18] sm:$0xff]
    %v889 = vld [vmem:[#allocation8] sm:$0x1]
    %v891 = vlaneseq
    %v892 = vshrl.u32 %v891, 7
    %v893 = vsub.s32 0, %v892
    %v894 = vrot.slane %v889, %v893
    %v897 = vsel %vm650, %v881, 0
    %v900 = vsel %vm650, %v882, 0
    %v903 = vsel %vm650, %v883, 0
    %v906 = vsel %vm650, %v884, 0
    %908 = vmatprep.subr.mxu0 0.0
    %909 = vmatpush1.msra.mxu0 %v885
    %910 = vmatprep.subr.mxu0 0.0
    %911 = vmatpush1.msra.mxu0 %v886
    %912 = vmatprep.subr.mxu0 0.0
    %913 = vmatpush1.msra.mxu0 %v887
    %914 = vmatprep.subr.mxu0 0.0
    %915 = vmatpush1.msra.mxu0 %v888
    %916 = vmatprep.subr.mxu0 0.0
    %917 = vmatpush1.msra.mxu0 0.0
    %918 = vmatprep.subr.mxu0 0.0
    %919 = vmatpush1.msra.mxu0 0.0
    %920 = vmatprep.subr.mxu0 0.0
    %921 = vmatpush1.msra.mxu0 0.0
    %922 = vmatprep.subr.mxu0 0.0
    %923 = vmatpush1.msra.mxu0 0.0
    %924 = vmatprep.subr.mxu0 0.0
    %925 = vmatpush1.msra.mxu0 0.0
    %926 = vmatprep.subr.mxu0 0.0
    %927 = vmatpush1.msra.mxu0 0.0
    %928 = vmatprep.subr.mxu0 0.0
    %929 = vmatpush1.msra.mxu0 0.0
    %930 = vmatprep.subr.mxu0 0.0
    %931 = vmatpush1.msra.mxu0 0.0
    %932 = vmatprep.subr.mxu0 0.0
    %933 = vmatpush1.msra.mxu0 0.0
    %934 = vmatprep.subr.mxu0 0.0
    %935 = vmatpush1.msra.mxu0 0.0
    %936 = vmatprep.subr.mxu0 0.0
    %937 = vmatpush1.msra.mxu0 0.0
    %938 = vmatprep.subr.mxu0 0.0
    %939 = vmatpush1.msra.mxu0 0.0
    %940 = vmatprep.subr.mxu0 0.0
    %941 = vmatpush1.msra.mxu0 0.0
    %942 = vmatprep.subr.mxu0 0.0
    %943 = vmatpush1.msra.mxu0 0.0
    %944 = vmatprep.subr.mxu0 0.0
    %945 = vmatpush1.msra.mxu0 0.0
    %946 = vmatprep.subr.mxu0 0.0
    %947 = vmatpush1.msra.mxu0 0.0
    %948 = vmatprep.subr.mxu0 0.0
    %949 = vmatpush1.msra.mxu0 0.0
    %950 = vmatprep.subr.mxu0 0.0
    %951 = vmatpush1.msra.mxu0 0.0
    %952 = vmatprep.subr.mxu0 0.0
    %953 = vmatpush1.msra.mxu0 0.0
    %954 = vmatprep.subr.mxu0 0.0
    %955 = vmatpush1.msra.mxu0 0.0
    %956 = vmatprep.subr.mxu0 0.0
    %957 = vmatpush1.msra.mxu0 0.0
    %958 = vmatprep.subr.mxu0 0.0
    %959 = vmatpush1.msra.mxu0 0.0
    %960 = vmatprep.subr.mxu0 0.0
    %961 = vmatpush1.msra.mxu0 0.0
    %962 = vmatprep.subr.mxu0 0.0
    %963 = vmatpush1.msra.mxu0 0.0
    %964 = vmatprep.subr.mxu0 0.0
    %965 = vmatpush1.msra.mxu0 0.0
    %966 = vmatprep.subr.mxu0 0.0
    %967 = vmatpush1.msra.mxu0 0.0
    %968 = vmatprep.subr.mxu0 0.0
    %969 = vmatpush1.msra.mxu0 0.0
    %970 = vmatprep.subr.mxu0 0.0
    %971 = vmatpush1.msra.mxu0 0.0
    %972 = vmatprep.mubr.f32.mxu0 0.0
    %973 = vmatmul.mubr.f32.gmra.mrb[0].mxu0 %v897
    %v974 = vpop.f32.mrb[0].mxu0
    %v975 = vadd.f32 %v894, %v974
    %v976 = vpop.f32.mrb[0].mxu0
    %977 = vmatprep.mubr.f32.mxu0 0.0
    %978 = vmatmul.mubr.f32.gmra.mrb[0].mxu0 %v900
    %v979 = vpop.f32.mrb[0].mxu0
    %v980 = vadd.f32 %v894, %v979
    %v981 = vpop.f32.mrb[0].mxu0
    %982 = vmatprep.mubr.f32.mxu0 0.0
    %983 = vmatmul.mubr.f32.gmra.mrb[0].mxu0 %v903
    %v984 = vpop.f32.mrb[0].mxu0
    %v985 = vadd.f32 %v894, %v984
    %v986 = vpop.f32.mrb[0].mxu0
    %987 = vmatprep.mubr.f32.mxu0 0.0
    %988 = vmatmul.mubr.f32.gmra.mrb[0].mxu0 %v906
    %v989 = vpop.f32.mrb[0].mxu0
    %v990 = vadd.f32 %v894, %v989
    %v991 = vpop.f32.mrb[0].mxu0
    %992 = vdwg.mxu0
    %v993 = vmax.f32 %v859, 0.0
    %v994 = vmax.f32 %v866, 0.0
    %v995 = vmax.f32 %v873, 0.0
    %v996 = vmax.f32 %v880, 0.0
    %v997 = vld [vmem:[%s19] sm:$0xff]
    %v998 = vld [vmem:[%s19 + $0x8] sm:$0xff]
    %v999 = vld [vmem:[%s19 + $0x10] sm:$0xff]
    %v1000 = vld [vmem:[%s19 + $0x18] sm:$0xff]
    %vm1005 = vcmask 1041409
    %v1006 = vsel %vm1005, %v994, %v993
    %vm1007 = vcmask 1042434
    %v1008 = vsel %vm1007, %v995, %v1006
    %vm1009 = vcmask 1043459
    %v1010 = vsel %vm1009, %v996, %v1008
    %v1011 = vsel %vm650, %v1010, 0
    %1013 = vmatprep.subr.mxu0 0.0
    %1014 = vmatpush1.msra.mxu0 %v997
    %1015 = vmatprep.subr.mxu0 0.0
    %1016 = vmatpush1.msra.mxu0 %v998
    %1017 = vmatprep.subr.mxu0 0.0
    %1018 = vmatpush1.msra.mxu0 %v999
    %1019 = vmatprep.subr.mxu0 0.0
    %1020 = vmatpush1.msra.mxu0 %v1000
    %1021 = vmatprep.subr.mxu0 0.0
    %1022 = vmatpush1.msra.mxu0 0.0
    %1023 = vmatprep.subr.mxu0 0.0
    %1024 = vmatpush1.msra.mxu0 0.0
    %1025 = vmatprep.subr.mxu0 0.0
    %1026 = vmatpush1.msra.mxu0 0.0
    %1027 = vmatprep.subr.mxu0 0.0
    %1028 = vmatpush1.msra.mxu0 0.0
    %1029 = vmatprep.subr.mxu0 0.0
    %1030 = vmatpush1.msra.mxu0 0.0
    %1031 = vmatprep.subr.mxu0 0.0
    %1032 = vmatpush1.msra.mxu0 0.0
    %1033 = vmatprep.subr.mxu0 0.0
    %1034 = vmatpush1.msra.mxu0 0.0
    %1035 = vmatprep.subr.mxu0 0.0
    %1036 = vmatpush1.msra.mxu0 0.0
    %1037 = vmatprep.subr.mxu0 0.0
    %1038 = vmatpush1.msra.mxu0 0.0
    %1039 = vmatprep.subr.mxu0 0.0
    %1040 = vmatpush1.msra.mxu0 0.0
    %1041 = vmatprep.subr.mxu0 0.0
    %1042 = vmatpush1.msra.mxu0 0.0
    %1043 = vmatprep.subr.mxu0 0.0
    %1044 = vmatpush1.msra.mxu0 0.0
    %1045 = vmatprep.subr.mxu0 0.0
    %1046 = vmatpush1.msra.mxu0 0.0
    %1047 = vmatprep.subr.mxu0 0.0
    %1048 = vmatpush1.msra.mxu0 0.0
    %1049 = vmatprep.subr.mxu0 0.0
    %1050 = vmatpush1.msra.mxu0 0.0
    %1051 = vmatprep.subr.mxu0 0.0
    %1052 = vmatpush1.msra.mxu0 0.0
    %1053 = vmatprep.subr.mxu0 0.0
    %1054 = vmatpush1.msra.mxu0 0.0
    %1055 = vmatprep.subr.mxu0 0.0
    %1056 = vmatpush1.msra.mxu0 0.0
    %1057 = vmatprep.subr.mxu0 0.0
    %1058 = vmatpush1.msra.mxu0 0.0
    %1059 = vmatprep.subr.mxu0 0.0
    %1060 = vmatpush1.msra.mxu0 0.0
    %1061 = vmatprep.subr.mxu0 0.0
    %1062 = vmatpush1.msra.mxu0 0.0
    %1063 = vmatprep.subr.mxu0 0.0
    %1064 = vmatpush1.msra.mxu0 0.0
    %1065 = vmatprep.subr.mxu0 0.0
    %1066 = vmatpush1.msra.mxu0 0.0
    %1067 = vmatprep.subr.mxu0 0.0
    %1068 = vmatpush1.msra.mxu0 0.0
    %1069 = vmatprep.subr.mxu0 0.0
    %1070 = vmatpush1.msra.mxu0 0.0
    %1071 = vmatprep.subr.mxu0 0.0
    %1072 = vmatpush1.msra.mxu0 0.0
    %1073 = vmatprep.subr.mxu0 0.0
    %1074 = vmatpush1.msra.mxu0 0.0
    %1075 = vmatprep.subr.mxu0 0.0
    %1076 = vmatpush1.msra.mxu0 0.0
    %1077 = vmatprep.mubr.f32.mxu0 0.0
    %1078 = vmatmul.mubr.f32.gmra.mrb[0].mxu0 %v1011
    %v1079 = vpop.f32.mrb[0].mxu0
    %v1080 = vadd.f32 0.0, %v1079
    %v1081 = vpop.f32.mrb[0].mxu0
    %1082 = vdwg.mxu0
    %v1085 = vunpack.c.l.s4 1966171168
    %v1086 = vunpack.c.0.s8 %v1085
    %v1087 = vlaneseq
    %v1088 = vshrl.u32 %v1087, 7
    %v1089 = vsub.s32 %v1086, %v1088
    %v1090 = vrot.slane %v1080, %v1089
    %v1091 = vcombine.high %v1090, %v1090
    %v1093 = vunpack.c.l.s4 1966171168
    %v1094 = vunpack.c.0.s8 %v1093
    %v1095 = vlaneseq
    %v1096 = vshrl.u32 %v1095, 7
    %v1097 = vsub.s32 %v1094, %v1096
    %v1098 = vrot.slane %v1090, %v1097
    %v1100 = vunpack.c.l.s4 1966171168
    %v1101 = vunpack.c.0.s8 %v1100
    %v1102 = vlaneseq
    %v1103 = vshrl.u32 %v1102, 7
    %v1104 = vsub.s32 %v1101, %v1103
    %v1105 = vrot.slane %v1091, %v1104
    %v1106 = vcombine.high %v1098, %v1098
    %v1107 = vcombine.high %v1105, %v1105
    %v1108 = vlaneseq
    %v1109 = vshrl.u32 %v1108, 7
    %v1110 = vsub.s32 0, %v1109
    %v1111 = vrot.slane %v1098, %v1110
    %v1112 = vlaneseq
    %v1113 = vshrl.u32 %v1112, 7
    %v1114 = vsub.s32 0, %v1113
    %v1115 = vrot.slane %v1105, %v1114
    %v1116 = vlaneseq
    %v1117 = vshrl.u32 %v1116, 7
    %v1118 = vsub.s32 0, %v1117
    %v1119 = vrot.slane %v1106, %v1118
    %v1120 = vlaneseq
    %v1121 = vshrl.u32 %v1120, 7
    %v1122 = vsub.s32 0, %v1121
    %v1123 = vrot.slane %v1107, %v1122
    %v1128 = vadd.f32 %v975, %v1111
    %v1129 = vadd.f32 %v980, %v1115
    %v1130 = vadd.f32 %v985, %v1119
    %v1131 = vadd.f32 %v990, %v1123
    %v1132 = vmax.f32 %v1128, 0.0
    %v1133 = vmax.f32 %v1129, 0.0
    %v1134 = vmax.f32 %v1130, 0.0
    %v1135 = vmax.f32 %v1131, 0.0
    %v1136 = vld [vmem:[%s23] sm:$0xff]
    %v1137 = vld [vmem:[%s23 + $0x8] sm:$0xff]
    %v1138 = vld [vmem:[%s23 + $0x10] sm:$0xff]
    %v1139 = vld [vmem:[%s23 + $0x18] sm:$0xff]
    %v1140 = vld [vmem:[#allocation10] sm:$0x1]
    %v1142 = vlaneseq
    %v1143 = vshrl.u32 %v1142, 7
    %v1144 = vsub.s32 0, %v1143
    %v1145 = vrot.slane %v1140, %v1144
    %v1148 = vsel %vm650, %v1132, 0
    %v1151 = vsel %vm650, %v1133, 0
    %v1154 = vsel %vm650, %v1134, 0
    %v1157 = vsel %vm650, %v1135, 0
    %1159 = vmatprep.subr.mxu0 0.0
    %1160 = vmatpush1.msra.mxu0 %v1136
    %1161 = vmatprep.subr.mxu0 0.0
    %1162 = vmatpush1.msra.mxu0 %v1137
    %1163 = vmatprep.subr.mxu0 0.0
    %1164 = vmatpush1.msra.mxu0 %v1138
    %1165 = vmatprep.subr.mxu0 0.0
    %1166 = vmatpush1.msra.mxu0 %v1139
    %1167 = vmatprep.subr.mxu0 0.0
    %1168 = vmatpush1.msra.mxu0 0.0
    %1169 = vmatprep.subr.mxu0 0.0
    %1170 = vmatpush1.msra.mxu0 0.0
    %1171 = vmatprep.subr.mxu0 0.0
    %1172 = vmatpush1.msra.mxu0 0.0
    %1173 = vmatprep.subr.mxu0 0.0
    %1174 = vmatpush1.msra.mxu0 0.0
    %1175 = vmatprep.subr.mxu0 0.0
    %1176 = vmatpush1.msra.mxu0 0.0
    %1177 = vmatprep.subr.mxu0 0.0
    %1178 = vmatpush1.msra.mxu0 0.0
    %1179 = vmatprep.subr.mxu0 0.0
    %1180 = vmatpush1.msra.mxu0 0.0
    %1181 = vmatprep.subr.mxu0 0.0
    %1182 = vmatpush1.msra.mxu0 0.0
    %1183 = vmatprep.subr.mxu0 0.0
    %1184 = vmatpush1.msra.mxu0 0.0
    %1185 = vmatprep.subr.mxu0 0.0
    %1186 = vmatpush1.msra.mxu0 0.0
    %1187 = vmatprep.subr.mxu0 0.0
    %1188 = vmatpush1.msra.mxu0 0.0
    %1189 = vmatprep.subr.mxu0 0.0
    %1190 = vmatpush1.msra.mxu0 0.0
    %1191 = vmatprep.subr.mxu0 0.0
    %1192 = vmatpush1.msra.mxu0 0.0
    %1193 = vmatprep.subr.mxu0 0.0
    %1194 = vmatpush1.msra.mxu0 0.0
    %1195 = vmatprep.subr.mxu0 0.0
    %1196 = vmatpush1.msra.mxu0 0.0
    %1197 = vmatprep.subr.mxu0 0.0
    %1198 = vmatpush1.msra.mxu0 0.0
    %1199 = vmatprep.subr.mxu0 0.0
    %1200 = vmatpush1.msra.mxu0 0.0
    %1201 = vmatprep.subr.mxu0 0.0
    %1202 = vmatpush1.msra.mxu0 0.0
    %1203 = vmatprep.subr.mxu0 0.0
    %1204 = vmatpush1.msra.mxu0 0.0
    %1205 = vmatprep.subr.mxu0 0.0
    %1206 = vmatpush1.msra.mxu0 0.0
    %1207 = vmatprep.subr.mxu0 0.0
    %1208 = vmatpush1.msra.mxu0 0.0
    %1209 = vmatprep.subr.mxu0 0.0
    %1210 = vmatpush1.msra.mxu0 0.0
    %1211 = vmatprep.subr.mxu0 0.0
    %1212 = vmatpush1.msra.mxu0 0.0
    %1213 = vmatprep.subr.mxu0 0.0
    %1214 = vmatpush1.msra.mxu0 0.0
    %1215 = vmatprep.subr.mxu0 0.0
    %1216 = vmatpush1.msra.mxu0 0.0
    %1217 = vmatprep.subr.mxu0 0.0
    %1218 = vmatpush1.msra.mxu0 0.0
    %1219 = vmatprep.subr.mxu0 0.0
    %1220 = vmatpush1.msra.mxu0 0.0
    %1221 = vmatprep.subr.mxu0 0.0
    %1222 = vmatpush1.msra.mxu0 0.0
    %1223 = vmatprep.mubr.f32.mxu0 0.0
    %1224 = vmatmul.mubr.f32.gmra.mrb[0].mxu0 %v1148
    %v1225 = vpop.f32.mrb[0].mxu0
    %v1226 = vadd.f32 %v1145, %v1225
    %v1227 = vpop.f32.mrb[0].mxu0
    %1228 = vmatprep.mubr.f32.mxu0 0.0
    %1229 = vmatmul.mubr.f32.gmra.mrb[0].mxu0 %v1151
    %v1230 = vpop.f32.mrb[0].mxu0
    %v1231 = vadd.f32 %v1145, %v1230
    %v1232 = vpop.f32.mrb[0].mxu0
    %1233 = vmatprep.mubr.f32.mxu0 0.0
    %1234 = vmatmul.mubr.f32.gmra.mrb[0].mxu0 %v1154
    %v1235 = vpop.f32.mrb[0].mxu0
    %v1236 = vadd.f32 %v1145, %v1235
    %v1237 = vpop.f32.mrb[0].mxu0
    %1238 = vmatprep.mubr.f32.mxu0 0.0
    %1239 = vmatmul.mubr.f32.gmra.mrb[0].mxu0 %v1157
    %v1240 = vpop.f32.mrb[0].mxu0
    %v1241 = vadd.f32 %v1145, %v1240
    %v1242 = vpop.f32.mrb[0].mxu0
    %1243 = vdwg.mxu0
    %v1244 = vld [vmem:[%s27] sm:$0xff]
    %v1245 = vld [vmem:[%s27 + $0x8] sm:$0xff]
    %v1246 = vld [vmem:[%s27 + $0x10] sm:$0xff]
    %v1247 = vld [vmem:[%s27 + $0x18] sm:$0xff]
    %v1248 = vld [vmem:[%s29] sm:$0xff]
    %v1249 = vld [vmem:[%s29 + $0x8] sm:$0xff]
    %v1250 = vld [vmem:[%s29 + $0x10] sm:$0xff]
    %v1251 = vld [vmem:[%s29 + $0x18] sm:$0xff]
    %v1256 = vsel %vm1005, %v866, %v859
    %v1257 = vsel %vm1007, %v873, %v1256
    %v1258 = vsel %vm1009, %v880, %v1257
    %v1259 = vsel %vm650, %v1258, 0
    %1261 = vmatprep.subr.mxu0 0.0
    %1262 = vmatpush1.msra.mxu0 %v1248
    %1263 = vmatprep.subr.mxu0 0.0
    %1264 = vmatpush1.msra.mxu0 %v1249
    %1265 = vmatprep.subr.mxu0 0.0
    %1266 = vmatpush1.msra.mxu0 %v1250
    %1267 = vmatprep.subr.mxu0 0.0
    %1268 = vmatpush1.msra.mxu0 %v1251
    %1269 = vmatprep.subr.mxu0 0.0
    %1270 = vmatpush1.msra.mxu0 0.0
    %1271 = vmatprep.subr.mxu0 0.0
    %1272 = vmatpush1.msra.mxu0 0.0
    %1273 = vmatprep.subr.mxu0 0.0
    %1274 = vmatpush1.msra.mxu0 0.0
    %1275 = vmatprep.subr.mxu0 0.0
    %1276 = vmatpush1.msra.mxu0 0.0
    %1277 = vmatprep.subr.mxu0 0.0
    %1278 = vmatpush1.msra.mxu0 0.0
    %1279 = vmatprep.subr.mxu0 0.0
    %1280 = vmatpush1.msra.mxu0 0.0
    %1281 = vmatprep.subr.mxu0 0.0
    %1282 = vmatpush1.msra.mxu0 0.0
    %1283 = vmatprep.subr.mxu0 0.0
    %1284 = vmatpush1.msra.mxu0 0.0
    %1285 = vmatprep.subr.mxu0 0.0
    %1286 = vmatpush1.msra.mxu0 0.0
    %1287 = vmatprep.subr.mxu0 0.0
    %1288 = vmatpush1.msra.mxu0 0.0
    %1289 = vmatprep.subr.mxu0 0.0
    %1290 = vmatpush1.msra.mxu0 0.0
    %1291 = vmatprep.subr.mxu0 0.0
    %1292 = vmatpush1.msra.mxu0 0.0
    %1293 = vmatprep.subr.mxu0 0.0
    %1294 = vmatpush1.msra.mxu0 0.0
    %1295 = vmatprep.subr.mxu0 0.0
    %1296 = vmatpush1.msra.mxu0 0.0
    %1297 = vmatprep.subr.mxu0 0.0
    %1298 = vmatpush1.msra.mxu0 0.0
    %1299 = vmatprep.subr.mxu0 0.0
    %1300 = vmatpush1.msra.mxu0 0.0
    %1301 = vmatprep.subr.mxu0 0.0
    %1302 = vmatpush1.msra.mxu0 0.0
    %1303 = vmatprep.subr.mxu0 0.0
    %1304 = vmatpush1.msra.mxu0 0.0
    %1305 = vmatprep.subr.mxu0 0.0
    %1306 = vmatpush1.msra.mxu0 0.0
    %1307 = vmatprep.subr.mxu0 0.0
    %1308 = vmatpush1.msra.mxu0 0.0
    %1309 = vmatprep.subr.mxu0 0.0
    %1310 = vmatpush1.msra.mxu0 0.0
    %1311 = vmatprep.subr.mxu0 0.0
    %1312 = vmatpush1.msra.mxu0 0.0
    %1313 = vmatprep.subr.mxu0 0.0
    %1314 = vmatpush1.msra.mxu0 0.0
    %1315 = vmatprep.subr.mxu0 0.0
    %1316 = vmatpush1.msra.mxu0 0.0
    %1317 = vmatprep.subr.mxu0 0.0
    %1318 = vmatpush1.msra.mxu0 0.0
    %1319 = vmatprep.subr.mxu0 0.0
    %1320 = vmatpush1.msra.mxu0 0.0
    %1321 = vmatprep.subr.mxu0 0.0
    %1322 = vmatpush1.msra.mxu0 0.0
    %1323 = vmatprep.subr.mxu0 0.0
    %1324 = vmatpush1.msra.mxu0 0.0
    %1325 = vmatprep.mubr.f32.mxu0 0.0
    %1326 = vmatmul.mubr.f32.gmra.mrb[0].mxu0 %v1259
    %v1327 = vpop.f32.mrb[0].mxu0
    %v1328 = vadd.f32 0.0, %v1327
    %v1329 = vpop.f32.mrb[0].mxu0
    %1330 = vdwg.mxu0
    %v1333 = vunpack.c.l.s4 1966171168
    %v1334 = vunpack.c.0.s8 %v1333
    %v1335 = vlaneseq
    %v1336 = vshrl.u32 %v1335, 7
    %v1337 = vsub.s32 %v1334, %v1336
    %v1338 = vrot.slane %v1328, %v1337
    %v1339 = vcombine.high %v1338, %v1338
    %v1341 = vunpack.c.l.s4 1966171168
    %v1342 = vunpack.c.0.s8 %v1341
    %v1343 = vlaneseq
    %v1344 = vshrl.u32 %v1343, 7
    %v1345 = vsub.s32 %v1342, %v1344
    %v1346 = vrot.slane %v1338, %v1345
    %v1348 = vunpack.c.l.s4 1966171168
    %v1349 = vunpack.c.0.s8 %v1348
    %v1350 = vlaneseq
    %v1351 = vshrl.u32 %v1350, 7
    %v1352 = vsub.s32 %v1349, %v1351
    %v1353 = vrot.slane %v1339, %v1352
    %v1354 = vcombine.high %v1346, %v1346
    %v1355 = vcombine.high %v1353, %v1353
    %v1356 = vlaneseq
    %v1357 = vshrl.u32 %v1356, 7
    %v1358 = vsub.s32 0, %v1357
    %v1359 = vrot.slane %v1346, %v1358
    %v1360 = vlaneseq
    %v1361 = vshrl.u32 %v1360, 7
    %v1362 = vsub.s32 0, %v1361
    %v1363 = vrot.slane %v1353, %v1362
    %v1364 = vlaneseq
    %v1365 = vshrl.u32 %v1364, 7
    %v1366 = vsub.s32 0, %v1365
    %v1367 = vrot.slane %v1354, %v1366
    %v1368 = vlaneseq
    %v1369 = vshrl.u32 %v1368, 7
    %v1370 = vsub.s32 0, %v1369
    %v1371 = vrot.slane %v1355, %v1370
    %v1377 = vsel %vm650, %v835, 0
    %v1380 = vsel %vm650, %v840, 0
    %v1383 = vsel %vm650, %v845, 0
    %v1386 = vsel %vm650, %v850, 0
    %1388 = vmatprep.subr.mxu0 0.0
    %1389 = vmatpush1.msra.mxu0 %v1244
    %1390 = vmatprep.subr.mxu0 0.0
    %1391 = vmatpush1.msra.mxu0 %v1245
    %1392 = vmatprep.subr.mxu0 0.0
    %1393 = vmatpush1.msra.mxu0 %v1246
    %1394 = vmatprep.subr.mxu0 0.0
    %1395 = vmatpush1.msra.mxu0 %v1247
    %1396 = vmatprep.subr.mxu0 0.0
    %1397 = vmatpush1.msra.mxu0 0.0
    %1398 = vmatprep.subr.mxu0 0.0
    %1399 = vmatpush1.msra.mxu0 0.0
    %1400 = vmatprep.subr.mxu0 0.0
    %1401 = vmatpush1.msra.mxu0 0.0
    %1402 = vmatprep.subr.mxu0 0.0
    %1403 = vmatpush1.msra.mxu0 0.0
    %1404 = vmatprep.subr.mxu0 0.0
    %1405 = vmatpush1.msra.mxu0 0.0
    %1406 = vmatprep.subr.mxu0 0.0
    %1407 = vmatpush1.msra.mxu0 0.0
    %1408 = vmatprep.subr.mxu0 0.0
    %1409 = vmatpush1.msra.mxu0 0.0
    %1410 = vmatprep.subr.mxu0 0.0
    %1411 = vmatpush1.msra.mxu0 0.0
    %1412 = vmatprep.subr.mxu0 0.0
    %1413 = vmatpush1.msra.mxu0 0.0
    %1414 = vmatprep.subr.mxu0 0.0
    %1415 = vmatpush1.msra.mxu0 0.0
    %1416 = vmatprep.subr.mxu0 0.0
    %1417 = vmatpush1.msra.mxu0 0.0
    %1418 = vmatprep.subr.mxu0 0.0
    %1419 = vmatpush1.msra.mxu0 0.0
    %1420 = vmatprep.subr.mxu0 0.0
    %1421 = vmatpush1.msra.mxu0 0.0
    %1422 = vmatprep.subr.mxu0 0.0
    %1423 = vmatpush1.msra.mxu0 0.0
    %1424 = vmatprep.subr.mxu0 0.0
    %1425 = vmatpush1.msra.mxu0 0.0
    %1426 = vmatprep.subr.mxu0 0.0
    %1427 = vmatpush1.msra.mxu0 0.0
    %1428 = vmatprep.subr.mxu0 0.0
    %1429 = vmatpush1.msra.mxu0 0.0
    %1430 = vmatprep.subr.mxu0 0.0
    %1431 = vmatpush1.msra.mxu0 0.0
    %1432 = vmatprep.subr.mxu0 0.0
    %1433 = vmatpush1.msra.mxu0 0.0
    %1434 = vmatprep.subr.mxu0 0.0
    %1435 = vmatpush1.msra.mxu0 0.0
    %1436 = vmatprep.subr.mxu0 0.0
    %1437 = vmatpush1.msra.mxu0 0.0
    %1438 = vmatprep.subr.mxu0 0.0
    %1439 = vmatpush1.msra.mxu0 0.0
    %1440 = vmatprep.subr.mxu0 0.0
    %1441 = vmatpush1.msra.mxu0 0.0
    %1442 = vmatprep.subr.mxu0 0.0
    %1443 = vmatpush1.msra.mxu0 0.0
    %1444 = vmatprep.subr.mxu0 0.0
    %1445 = vmatpush1.msra.mxu0 0.0
    %1446 = vmatprep.subr.mxu0 0.0
    %1447 = vmatpush1.msra.mxu0 0.0
    %1448 = vmatprep.subr.mxu0 0.0
    %1449 = vmatpush1.msra.mxu0 0.0
    %1450 = vmatprep.subr.mxu0 0.0
    %1451 = vmatpush1.msra.mxu0 0.0
    %1452 = vmatprep.mubr.f32.mxu0 0.0
    %1453 = vmatmul.mubr.f32.gmra.mrb[0].mxu0 %v1377
    %v1454 = vpop.f32.mrb[0].mxu0
    %v1455 = vadd.f32 %v1359, %v1454
    %v1456 = vpop.f32.mrb[0].mxu0
    %1457 = vmatprep.mubr.f32.mxu0 0.0
    %1458 = vmatmul.mubr.f32.gmra.mrb[0].mxu0 %v1380
    %v1459 = vpop.f32.mrb[0].mxu0
    %v1460 = vadd.f32 %v1363, %v1459
    %v1461 = vpop.f32.mrb[0].mxu0
    %1462 = vmatprep.mubr.f32.mxu0 0.0
    %1463 = vmatmul.mubr.f32.gmra.mrb[0].mxu0 %v1383
    %v1464 = vpop.f32.mrb[0].mxu0
    %v1465 = vadd.f32 %v1367, %v1464
    %v1466 = vpop.f32.mrb[0].mxu0
    %1467 = vmatprep.mubr.f32.mxu0 0.0
    %1468 = vmatmul.mubr.f32.gmra.mrb[0].mxu0 %v1386
    %v1469 = vpop.f32.mrb[0].mxu0
    %v1470 = vadd.f32 %v1371, %v1469
    %v1471 = vpop.f32.mrb[0].mxu0
    %1472 = vdwg.mxu0
    %v1473 = vadd.f32 %v1455, %v1226
    %v1474 = vadd.f32 %v1460, %v1231
    %v1475 = vadd.f32 %v1465, %v1236
    %v1476 = vadd.f32 %v1470, %v1241
    %v1477 = vsel %vm650, %v1473, -inf
    %v1478 = vrot.slane %v1477, 4
    %v1479 = vmax.f32 %v1477, %v1478
    %v1480 = vrot.slane %v1479, 2
    %v1481 = vmax.f32 %v1479, %v1480
    %v1482 = vrot.slane %v1481, 1
    %v1483 = vmax.f32 %v1481, %v1482
    %v1484 = vsel %vm650, %v1474, -inf
    %v1485 = vrot.slane %v1484, 4
    %v1486 = vmax.f32 %v1484, %v1485
    %v1487 = vrot.slane %v1486, 2
    %v1488 = vmax.f32 %v1486, %v1487
    %v1489 = vrot.slane %v1488, 1
    %v1490 = vmax.f32 %v1488, %v1489
    %v1491 = vsel %vm650, %v1475, -inf
    %v1492 = vrot.slane %v1491, 4
    %v1493 = vmax.f32 %v1491, %v1492
    %v1494 = vrot.slane %v1493, 2
    %v1495 = vmax.f32 %v1493, %v1494
    %v1496 = vrot.slane %v1495, 1
    %v1497 = vmax.f32 %v1495, %v1496
    %v1498 = vsel %vm650, %v1476, -inf
    %v1499 = vrot.slane %v1498, 4
    %v1500 = vmax.f32 %v1498, %v1499
    %v1501 = vrot.slane %v1500, 2
    %v1502 = vmax.f32 %v1500, %v1501
    %v1503 = vrot.slane %v1502, 1
    %v1504 = vmax.f32 %v1502, %v1503
    %v1505 = vmax.f32 %v1473, 0.0
    %v1506 = vmax.f32 %v1474, 0.0
    %v1507 = vmax.f32 %v1475, 0.0
    %v1508 = vmax.f32 %v1476, 0.0
    %v1509 = vld [vmem:[%s31] sm:$0xff]
    %v1510 = vld [vmem:[%s31 + $0x8] sm:$0xff]
    %v1511 = vld [vmem:[%s31 + $0x10] sm:$0xff]
    %v1512 = vld [vmem:[%s31 + $0x18] sm:$0xff]
    %v1513 = vld [vmem:[#allocation11] sm:$0x1]
    %v1515 = vlaneseq
    %v1516 = vshrl.u32 %v1515, 7
    %v1517 = vsub.s32 0, %v1516
    %v1518 = vrot.slane %v1513, %v1517
    %v1521 = vsel %vm650, %v1505, 0
    %v1524 = vsel %vm650, %v1506, 0
    %v1527 = vsel %vm650, %v1507, 0
    %v1530 = vsel %vm650, %v1508, 0
    %1532 = vmatprep.subr.mxu0 0.0
    %1533 = vmatpush1.msra.mxu0 %v1509
    %1534 = vmatprep.subr.mxu0 0.0
    %1535 = vmatpush1.msra.mxu0 %v1510
    %1536 = vmatprep.subr.mxu0 0.0
    %1537 = vmatpush1.msra.mxu0 %v1511
    %1538 = vmatprep.subr.mxu0 0.0
    %1539 = vmatpush1.msra.mxu0 %v1512
    %1540 = vmatprep.subr.mxu0 0.0
    %1541 = vmatpush1.msra.mxu0 0.0
    %1542 = vmatprep.subr.mxu0 0.0
    %1543 = vmatpush1.msra.mxu0 0.0
    %1544 = vmatprep.subr.mxu0 0.0
    %1545 = vmatpush1.msra.mxu0 0.0
    %1546 = vmatprep.subr.mxu0 0.0
    %1547 = vmatpush1.msra.mxu0 0.0
    %1548 = vmatprep.subr.mxu0 0.0
    %1549 = vmatpush1.msra.mxu0 0.0
    %1550 = vmatprep.subr.mxu0 0.0
    %1551 = vmatpush1.msra.mxu0 0.0
    %1552 = vmatprep.subr.mxu0 0.0
    %1553 = vmatpush1.msra.mxu0 0.0
    %1554 = vmatprep.subr.mxu0 0.0
    %1555 = vmatpush1.msra.mxu0 0.0
    %1556 = vmatprep.subr.mxu0 0.0
    %1557 = vmatpush1.msra.mxu0 0.0
    %1558 = vmatprep.subr.mxu0 0.0
    %1559 = vmatpush1.msra.mxu0 0.0
    %1560 = vmatprep.subr.mxu0 0.0
    %1561 = vmatpush1.msra.mxu0 0.0
    %1562 = vmatprep.subr.mxu0 0.0
    %1563 = vmatpush1.msra.mxu0 0.0
    %1564 = vmatprep.subr.mxu0 0.0
    %1565 = vmatpush1.msra.mxu0 0.0
    %1566 = vmatprep.subr.mxu0 0.0
    %1567 = vmatpush1.msra.mxu0 0.0
    %1568 = vmatprep.subr.mxu0 0.0
    %1569 = vmatpush1.msra.mxu0 0.0
    %1570 = vmatprep.subr.mxu0 0.0
    %1571 = vmatpush1.msra.mxu0 0.0
    %1572 = vmatprep.subr.mxu0 0.0
    %1573 = vmatpush1.msra.mxu0 0.0
    %1574 = vmatprep.subr.mxu0 0.0
    %1575 = vmatpush1.msra.mxu0 0.0
    %1576 = vmatprep.subr.mxu0 0.0
    %1577 = vmatpush1.msra.mxu0 0.0
    %1578 = vmatprep.subr.mxu0 0.0
    %1579 = vmatpush1.msra.mxu0 0.0
    %1580 = vmatprep.subr.mxu0 0.0
    %1581 = vmatpush1.msra.mxu0 0.0
    %1582 = vmatprep.subr.mxu0 0.0
    %1583 = vmatpush1.msra.mxu0 0.0
    %1584 = vmatprep.subr.mxu0 0.0
    %1585 = vmatpush1.msra.mxu0 0.0
    %1586 = vmatprep.subr.mxu0 0.0
    %1587 = vmatpush1.msra.mxu0 0.0
    %1588 = vmatprep.subr.mxu0 0.0
    %1589 = vmatpush1.msra.mxu0 0.0
    %1590 = vmatprep.subr.mxu0 0.0
    %1591 = vmatpush1.msra.mxu0 0.0
    %1592 = vmatprep.subr.mxu0 0.0
    %1593 = vmatpush1.msra.mxu0 0.0
    %1594 = vmatprep.subr.mxu0 0.0
    %1595 = vmatpush1.msra.mxu0 0.0
    %1596 = vmatprep.mubr.f32.mxu0 0.0
    %1597 = vmatmul.mubr.f32.gmra.mrb[0].mxu0 %v1521
    %v1598 = vpop.f32.mrb[0].mxu0
    %v1599 = vadd.f32 %v1518, %v1598
    %v1600 = vpop.f32.mrb[0].mxu0
    %1601 = vmatprep.mubr.f32.mxu0 0.0
    %1602 = vmatmul.mubr.f32.gmra.mrb[0].mxu0 %v1524
    %v1603 = vpop.f32.mrb[0].mxu0
    %v1604 = vadd.f32 %v1518, %v1603
    %v1605 = vpop.f32.mrb[0].mxu0
    %1606 = vmatprep.mubr.f32.mxu0 0.0
    %1607 = vmatmul.mubr.f32.gmra.mrb[0].mxu0 %v1527
    %v1608 = vpop.f32.mrb[0].mxu0
    %v1609 = vadd.f32 %v1518, %v1608
    %v1610 = vpop.f32.mrb[0].mxu0
    %1611 = vmatprep.mubr.f32.mxu0 0.0
    %1612 = vmatmul.mubr.f32.gmra.mrb[0].mxu0 %v1530
    %v1613 = vpop.f32.mrb[0].mxu0
    %v1614 = vadd.f32 %v1518, %v1613
    %v1615 = vpop.f32.mrb[0].mxu0
    %1616 = vdwg.mxu0
    %v1617 = vmax.f32 %v1483, 0.0
    %v1618 = vmax.f32 %v1490, 0.0
    %v1619 = vmax.f32 %v1497, 0.0
    %v1620 = vmax.f32 %v1504, 0.0
    %v1621 = vld [vmem:[%s33] sm:$0xff]
    %v1622 = vld [vmem:[%s33 + $0x8] sm:$0xff]
    %v1623 = vld [vmem:[%s33 + $0x10] sm:$0xff]
    %v1624 = vld [vmem:[%s33 + $0x18] sm:$0xff]
    %v1629 = vsel %vm1005, %v1618, %v1617
    %v1630 = vsel %vm1007, %v1619, %v1629
    %v1631 = vsel %vm1009, %v1620, %v1630
    %v1632 = vsel %vm650, %v1631, 0
    %1634 = vmatprep.subr.mxu0 0.0
    %1635 = vmatpush1.msra.mxu0 %v1621
    %1636 = vmatprep.subr.mxu0 0.0
    %1637 = vmatpush1.msra.mxu0 %v1622
    %1638 = vmatprep.subr.mxu0 0.0
    %1639 = vmatpush1.msra.mxu0 %v1623
    %1640 = vmatprep.subr.mxu0 0.0
    %1641 = vmatpush1.msra.mxu0 %v1624
    %1642 = vmatprep.subr.mxu0 0.0
    %1643 = vmatpush1.msra.mxu0 0.0
    %1644 = vmatprep.subr.mxu0 0.0
    %1645 = vmatpush1.msra.mxu0 0.0
    %1646 = vmatprep.subr.mxu0 0.0
    %1647 = vmatpush1.msra.mxu0 0.0
    %1648 = vmatprep.subr.mxu0 0.0
    %1649 = vmatpush1.msra.mxu0 0.0
    %1650 = vmatprep.subr.mxu0 0.0
    %1651 = vmatpush1.msra.mxu0 0.0
    %1652 = vmatprep.subr.mxu0 0.0
    %1653 = vmatpush1.msra.mxu0 0.0
    %1654 = vmatprep.subr.mxu0 0.0
    %1655 = vmatpush1.msra.mxu0 0.0
    %1656 = vmatprep.subr.mxu0 0.0
    %1657 = vmatpush1.msra.mxu0 0.0
    %1658 = vmatprep.subr.mxu0 0.0
    %1659 = vmatpush1.msra.mxu0 0.0
    %1660 = vmatprep.subr.mxu0 0.0
    %1661 = vmatpush1.msra.mxu0 0.0
    %1662 = vmatprep.subr.mxu0 0.0
    %1663 = vmatpush1.msra.mxu0 0.0
    %1664 = vmatprep.subr.mxu0 0.0
    %1665 = vmatpush1.msra.mxu0 0.0
    %1666 = vmatprep.subr.mxu0 0.0
    %1667 = vmatpush1.msra.mxu0 0.0
    %1668 = vmatprep.subr.mxu0 0.0
    %1669 = vmatpush1.msra.mxu0 0.0
    %1670 = vmatprep.subr.mxu0 0.0
    %1671 = vmatpush1.msra.mxu0 0.0
    %1672 = vmatprep.subr.mxu0 0.0
    %1673 = vmatpush1.msra.mxu0 0.0
    %1674 = vmatprep.subr.mxu0 0.0
    %1675 = vmatpush1.msra.mxu0 0.0
    %1676 = vmatprep.subr.mxu0 0.0
    %1677 = vmatpush1.msra.mxu0 0.0
    %1678 = vmatprep.subr.mxu0 0.0
    %1679 = vmatpush1.msra.mxu0 0.0
    %1680 = vmatprep.subr.mxu0 0.0
    %1681 = vmatpush1.msra.mxu0 0.0
    %1682 = vmatprep.subr.mxu0 0.0
    %1683 = vmatpush1.msra.mxu0 0.0
    %1684 = vmatprep.subr.mxu0 0.0
    %1685 = vmatpush1.msra.mxu0 0.0
    %1686 = vmatprep.subr.mxu0 0.0
    %1687 = vmatpush1.msra.mxu0 0.0
    %1688 = vmatprep.subr.mxu0 0.0
    %1689 = vmatpush1.msra.mxu0 0.0
    %1690 = vmatprep.subr.mxu0 0.0
    %1691 = vmatpush1.msra.mxu0 0.0
    %1692 = vmatprep.subr.mxu0 0.0
    %1693 = vmatpush1.msra.mxu0 0.0
    %1694 = vmatprep.subr.mxu0 0.0
    %1695 = vmatpush1.msra.mxu0 0.0
    %1696 = vmatprep.subr.mxu0 0.0
    %1697 = vmatpush1.msra.mxu0 0.0
    %1698 = vmatprep.mubr.f32.mxu0 0.0
    %1699 = vmatmul.mubr.f32.gmra.mrb[0].mxu0 %v1632
    %v1700 = vpop.f32.mrb[0].mxu0
    %v1701 = vadd.f32 0.0, %v1700
    %v1702 = vpop.f32.mrb[0].mxu0
    %1703 = vdwg.mxu0
    %v1706 = vunpack.c.l.s4 1966171168
    %v1707 = vunpack.c.0.s8 %v1706
    %v1708 = vlaneseq
    %v1709 = vshrl.u32 %v1708, 7
    %v1710 = vsub.s32 %v1707, %v1709
    %v1711 = vrot.slane %v1701, %v1710
    %v1712 = vcombine.high %v1711, %v1711
    %v1714 = vunpack.c.l.s4 1966171168
    %v1715 = vunpack.c.0.s8 %v1714
    %v1716 = vlaneseq
    %v1717 = vshrl.u32 %v1716, 7
    %v1718 = vsub.s32 %v1715, %v1717
    %v1719 = vrot.slane %v1711, %v1718
    %v1721 = vunpack.c.l.s4 1966171168
    %v1722 = vunpack.c.0.s8 %v1721
    %v1723 = vlaneseq
    %v1724 = vshrl.u32 %v1723, 7
    %v1725 = vsub.s32 %v1722, %v1724
    %v1726 = vrot.slane %v1712, %v1725
    %v1727 = vcombine.high %v1719, %v1719
    %v1728 = vcombine.high %v1726, %v1726
    %v1729 = vlaneseq
    %v1730 = vshrl.u32 %v1729, 7
    %v1731 = vsub.s32 0, %v1730
    %v1732 = vrot.slane %v1719, %v1731
    %v1733 = vlaneseq
    %v1734 = vshrl.u32 %v1733, 7
    %v1735 = vsub.s32 0, %v1734
    %v1736 = vrot.slane %v1726, %v1735
    %v1737 = vlaneseq
    %v1738 = vshrl.u32 %v1737, 7
    %v1739 = vsub.s32 0, %v1738
    %v1740 = vrot.slane %v1727, %v1739
    %v1741 = vlaneseq
    %v1742 = vshrl.u32 %v1741, 7
    %v1743 = vsub.s32 0, %v1742
    %v1744 = vrot.slane %v1728, %v1743
    %v1749 = vadd.f32 %v1599, %v1732
    %v1750 = vadd.f32 %v1604, %v1736
    %v1751 = vadd.f32 %v1609, %v1740
    %v1752 = vadd.f32 %v1614, %v1744
    %v1753 = vmax.f32 %v1749, 0.0
    %v1754 = vmax.f32 %v1750, 0.0
    %v1755 = vmax.f32 %v1751, 0.0
    %v1756 = vmax.f32 %v1752, 0.0
    %v1757 = vld [vmem:[%s37] sm:$0xff]
    %v1758 = vld [vmem:[%s37 + $0x8] sm:$0xff]
    %v1759 = vld [vmem:[%s37 + $0x10] sm:$0xff]
    %v1760 = vld [vmem:[%s37 + $0x18] sm:$0xff]
    %v1761 = vld [vmem:[#allocation13] sm:$0x1]
    %v1763 = vlaneseq
    %v1764 = vshrl.u32 %v1763, 7
    %v1765 = vsub.s32 0, %v1764
    %v1766 = vrot.slane %v1761, %v1765
    %v1769 = vsel %vm650, %v1753, 0
    %v1772 = vsel %vm650, %v1754, 0
    %v1775 = vsel %vm650, %v1755, 0
    %v1778 = vsel %vm650, %v1756, 0
    %1780 = vmatprep.subr.mxu0 0.0
    %1781 = vmatpush1.msra.mxu0 %v1757
    %1782 = vmatprep.subr.mxu0 0.0
    %1783 = vmatpush1.msra.mxu0 %v1758
    %1784 = vmatprep.subr.mxu0 0.0
    %1785 = vmatpush1.msra.mxu0 %v1759
    %1786 = vmatprep.subr.mxu0 0.0
    %1787 = vmatpush1.msra.mxu0 %v1760
    %1788 = vmatprep.subr.mxu0 0.0
    %1789 = vmatpush1.msra.mxu0 0.0
    %1790 = vmatprep.subr.mxu0 0.0
    %1791 = vmatpush1.msra.mxu0 0.0
    %1792 = vmatprep.subr.mxu0 0.0
    %1793 = vmatpush1.msra.mxu0 0.0
    %1794 = vmatprep.subr.mxu0 0.0
    %1795 = vmatpush1.msra.mxu0 0.0
    %1796 = vmatprep.subr.mxu0 0.0
    %1797 = vmatpush1.msra.mxu0 0.0
    %1798 = vmatprep.subr.mxu0 0.0
    %1799 = vmatpush1.msra.mxu0 0.0
    %1800 = vmatprep.subr.mxu0 0.0
    %1801 = vmatpush1.msra.mxu0 0.0
    %1802 = vmatprep.subr.mxu0 0.0
    %1803 = vmatpush1.msra.mxu0 0.0
    %1804 = vmatprep.subr.mxu0 0.0
    %1805 = vmatpush1.msra.mxu0 0.0
    %1806 = vmatprep.subr.mxu0 0.0
    %1807 = vmatpush1.msra.mxu0 0.0
    %1808 = vmatprep.subr.mxu0 0.0
    %1809 = vmatpush1.msra.mxu0 0.0
    %1810 = vmatprep.subr.mxu0 0.0
    %1811 = vmatpush1.msra.mxu0 0.0
    %1812 = vmatprep.subr.mxu0 0.0
    %1813 = vmatpush1.msra.mxu0 0.0
    %1814 = vmatprep.subr.mxu0 0.0
    %1815 = vmatpush1.msra.mxu0 0.0
    %1816 = vmatprep.subr.mxu0 0.0
    %1817 = vmatpush1.msra.mxu0 0.0
    %1818 = vmatprep.subr.mxu0 0.0
    %1819 = vmatpush1.msra.mxu0 0.0
    %1820 = vmatprep.subr.mxu0 0.0
    %1821 = vmatpush1.msra.mxu0 0.0
    %1822 = vmatprep.subr.mxu0 0.0
    %1823 = vmatpush1.msra.mxu0 0.0
    %1824 = vmatprep.subr.mxu0 0.0
    %1825 = vmatpush1.msra.mxu0 0.0
    %1826 = vmatprep.subr.mxu0 0.0
    %1827 = vmatpush1.msra.mxu0 0.0
    %1828 = vmatprep.subr.mxu0 0.0
    %1829 = vmatpush1.msra.mxu0 0.0
    %1830 = vmatprep.subr.mxu0 0.0
    %1831 = vmatpush1.msra.mxu0 0.0
    %1832 = vmatprep.subr.mxu0 0.0
    %1833 = vmatpush1.msra.mxu0 0.0
    %1834 = vmatprep.subr.mxu0 0.0
    %1835 = vmatpush1.msra.mxu0 0.0
    %1836 = vmatprep.subr.mxu0 0.0
    %1837 = vmatpush1.msra.mxu0 0.0
    %1838 = vmatprep.subr.mxu0 0.0
    %1839 = vmatpush1.msra.mxu0 0.0
    %1840 = vmatprep.subr.mxu0 0.0
    %1841 = vmatpush1.msra.mxu0 0.0
    %1842 = vmatprep.subr.mxu0 0.0
    %1843 = vmatpush1.msra.mxu0 0.0
    %1844 = vmatprep.mubr.f32.mxu0 0.0
    %1845 = vmatmul.mubr.f32.gmra.mrb[0].mxu0 %v1769
    %v1846 = vpop.f32.mrb[0].mxu0
    %v1847 = vadd.f32 %v1766, %v1846
    %v1848 = vpop.f32.mrb[0].mxu0
    %1849 = vmatprep.mubr.f32.mxu0 0.0
    %1850 = vmatmul.mubr.f32.gmra.mrb[0].mxu0 %v1772
    %v1851 = vpop.f32.mrb[0].mxu0
    %v1852 = vadd.f32 %v1766, %v1851
    %v1853 = vpop.f32.mrb[0].mxu0
    %1854 = vmatprep.mubr.f32.mxu0 0.0
    %1855 = vmatmul.mubr.f32.gmra.mrb[0].mxu0 %v1775
    %v1856 = vpop.f32.mrb[0].mxu0
    %v1857 = vadd.f32 %v1766, %v1856
    %v1858 = vpop.f32.mrb[0].mxu0
    %1859 = vmatprep.mubr.f32.mxu0 0.0
    %1860 = vmatmul.mubr.f32.gmra.mrb[0].mxu0 %v1778
    %v1861 = vpop.f32.mrb[0].mxu0
    %v1862 = vadd.f32 %v1766, %v1861
    %v1863 = vpop.f32.mrb[0].mxu0
    %1864 = vdwg.mxu0
    %v1865 = vld [vmem:[%s41] sm:$0xff]
    %v1866 = vld [vmem:[%s41 + $0x8] sm:$0xff]
    %v1867 = vld [vmem:[%s41 + $0x10] sm:$0xff]
    %v1868 = vld [vmem:[%s41 + $0x18] sm:$0xff]
    %v1869 = vld [vmem:[#allocation14] sm:$0xff]
    %v1870 = vld [vmem:[#allocation14 + $0x8] sm:$0xff]
    %v1871 = vld [vmem:[#allocation14 + $0x10] sm:$0xff]
    %v1872 = vld [vmem:[#allocation14 + $0x18] sm:$0xff]
    %v1877 = vsel %vm1005, %v1490, %v1483
    %v1878 = vsel %vm1007, %v1497, %v1877
    %v1879 = vsel %vm1009, %v1504, %v1878
    %v1880 = vsel %vm650, %v1879, 0
    %1882 = vmatprep.subr.mxu0 0.0
    %1883 = vmatpush1.msra.mxu0 %v1869
    %1884 = vmatprep.subr.mxu0 0.0
    %1885 = vmatpush1.msra.mxu0 %v1870
    %1886 = vmatprep.subr.mxu0 0.0
    %1887 = vmatpush1.msra.mxu0 %v1871
    %1888 = vmatprep.subr.mxu0 0.0
    %1889 = vmatpush1.msra.mxu0 %v1872
    %1890 = vmatprep.subr.mxu0 0.0
    %1891 = vmatpush1.msra.mxu0 0.0
    %1892 = vmatprep.subr.mxu0 0.0
    %1893 = vmatpush1.msra.mxu0 0.0
    %1894 = vmatprep.subr.mxu0 0.0
    %1895 = vmatpush1.msra.mxu0 0.0
    %1896 = vmatprep.subr.mxu0 0.0
    %1897 = vmatpush1.msra.mxu0 0.0
    %1898 = vmatprep.subr.mxu0 0.0
    %1899 = vmatpush1.msra.mxu0 0.0
    %1900 = vmatprep.subr.mxu0 0.0
    %1901 = vmatpush1.msra.mxu0 0.0
    %1902 = vmatprep.subr.mxu0 0.0
    %1903 = vmatpush1.msra.mxu0 0.0
    %1904 = vmatprep.subr.mxu0 0.0
    %1905 = vmatpush1.msra.mxu0 0.0
    %1906 = vmatprep.subr.mxu0 0.0
    %1907 = vmatpush1.msra.mxu0 0.0
    %1908 = vmatprep.subr.mxu0 0.0
    %1909 = vmatpush1.msra.mxu0 0.0
    %1910 = vmatprep.subr.mxu0 0.0
    %1911 = vmatpush1.msra.mxu0 0.0
    %1912 = vmatprep.subr.mxu0 0.0
    %1913 = vmatpush1.msra.mxu0 0.0
    %1914 = vmatprep.subr.mxu0 0.0
    %1915 = vmatpush1.msra.mxu0 0.0
    %1916 = vmatprep.subr.mxu0 0.0
    %1917 = vmatpush1.msra.mxu0 0.0
    %1918 = vmatprep.subr.mxu0 0.0
    %1919 = vmatpush1.msra.mxu0 0.0
    %1920 = vmatprep.subr.mxu0 0.0
    %1921 = vmatpush1.msra.mxu0 0.0
    %1922 = vmatprep.subr.mxu0 0.0
    %1923 = vmatpush1.msra.mxu0 0.0
    %1924 = vmatprep.subr.mxu0 0.0
    %1925 = vmatpush1.msra.mxu0 0.0
    %1926 = vmatprep.subr.mxu0 0.0
    %1927 = vmatpush1.msra.mxu0 0.0
    %1928 = vmatprep.subr.mxu0 0.0
    %1929 = vmatpush1.msra.mxu0 0.0
    %1930 = vmatprep.subr.mxu0 0.0
    %1931 = vmatpush1.msra.mxu0 0.0
    %1932 = vmatprep.subr.mxu0 0.0
    %1933 = vmatpush1.msra.mxu0 0.0
    %1934 = vmatprep.subr.mxu0 0.0
    %1935 = vmatpush1.msra.mxu0 0.0
    %1936 = vmatprep.subr.mxu0 0.0
    %1937 = vmatpush1.msra.mxu0 0.0
    %1938 = vmatprep.subr.mxu0 0.0
    %1939 = vmatpush1.msra.mxu0 0.0
    %1940 = vmatprep.subr.mxu0 0.0
    %1941 = vmatpush1.msra.mxu0 0.0
    %1942 = vmatprep.subr.mxu0 0.0
    %1943 = vmatpush1.msra.mxu0 0.0
    %1944 = vmatprep.subr.mxu0 0.0
    %1945 = vmatpush1.msra.mxu0 0.0
    %1946 = vmatprep.mubr.f32.mxu0 0.0
    %1947 = vmatmul.mubr.f32.gmra.mrb[0].mxu0 %v1880
    %v1948 = vpop.f32.mrb[0].mxu0
    %v1949 = vadd.f32 0.0, %v1948
    %v1950 = vpop.f32.mrb[0].mxu0
    %1951 = vdwg.mxu0
    %v1954 = vunpack.c.l.s4 1966171168
    %v1955 = vunpack.c.0.s8 %v1954
    %v1956 = vlaneseq
    %v1957 = vshrl.u32 %v1956, 7
    %v1958 = vsub.s32 %v1955, %v1957
    %v1959 = vrot.slane %v1949, %v1958
    %v1960 = vcombine.high %v1959, %v1959
    %v1962 = vunpack.c.l.s4 1966171168
    %v1963 = vunpack.c.0.s8 %v1962
    %v1964 = vlaneseq
    %v1965 = vshrl.u32 %v1964, 7
    %v1966 = vsub.s32 %v1963, %v1965
    %v1967 = vrot.slane %v1959, %v1966
    %v1969 = vunpack.c.l.s4 1966171168
    %v1970 = vunpack.c.0.s8 %v1969
    %v1971 = vlaneseq
    %v1972 = vshrl.u32 %v1971, 7
    %v1973 = vsub.s32 %v1970, %v1972
    %v1974 = vrot.slane %v1960, %v1973
    %v1975 = vcombine.high %v1967, %v1967
    %v1976 = vcombine.high %v1974, %v1974
    %v1977 = vlaneseq
    %v1978 = vshrl.u32 %v1977, 7
    %v1979 = vsub.s32 0, %v1978
    %v1980 = vrot.slane %v1967, %v1979
    %v1981 = vlaneseq
    %v1982 = vshrl.u32 %v1981, 7
    %v1983 = vsub.s32 0, %v1982
    %v1984 = vrot.slane %v1974, %v1983
    %v1985 = vlaneseq
    %v1986 = vshrl.u32 %v1985, 7
    %v1987 = vsub.s32 0, %v1986
    %v1988 = vrot.slane %v1975, %v1987
    %v1989 = vlaneseq
    %v1990 = vshrl.u32 %v1989, 7
    %v1991 = vsub.s32 0, %v1990
    %v1992 = vrot.slane %v1976, %v1991
    %v1998 = vsel %vm650, %v1473, 0
    %v2001 = vsel %vm650, %v1474, 0
    %v2004 = vsel %vm650, %v1475, 0
    %v2007 = vsel %vm650, %v1476, 0
    %2009 = vmatprep.subr.mxu0 0.0
    %2010 = vmatpush1.msra.mxu0 %v1865
    %2011 = vmatprep.subr.mxu0 0.0
    %2012 = vmatpush1.msra.mxu0 %v1866
    %2013 = vmatprep.subr.mxu0 0.0
    %2014 = vmatpush1.msra.mxu0 %v1867
    %2015 = vmatprep.subr.mxu0 0.0
    %2016 = vmatpush1.msra.mxu0 %v1868
    %2017 = vmatprep.subr.mxu0 0.0
    %2018 = vmatpush1.msra.mxu0 0.0
    %2019 = vmatprep.subr.mxu0 0.0
    %2020 = vmatpush1.msra.mxu0 0.0
    %2021 = vmatprep.subr.mxu0 0.0
    %2022 = vmatpush1.msra.mxu0 0.0
    %2023 = vmatprep.subr.mxu0 0.0
    %2024 = vmatpush1.msra.mxu0 0.0
    %2025 = vmatprep.subr.mxu0 0.0
    %2026 = vmatpush1.msra.mxu0 0.0
    %2027 = vmatprep.subr.mxu0 0.0
    %2028 = vmatpush1.msra.mxu0 0.0
    %2029 = vmatprep.subr.mxu0 0.0
    %2030 = vmatpush1.msra.mxu0 0.0
    %2031 = vmatprep.subr.mxu0 0.0
    %2032 = vmatpush1.msra.mxu0 0.0
    %2033 = vmatprep.subr.mxu0 0.0
    %2034 = vmatpush1.msra.mxu0 0.0
    %2035 = vmatprep.subr.mxu0 0.0
    %2036 = vmatpush1.msra.mxu0 0.0
    %2037 = vmatprep.subr.mxu0 0.0
    %2038 = vmatpush1.msra.mxu0 0.0
    %2039 = vmatprep.subr.mxu0 0.0
    %2040 = vmatpush1.msra.mxu0 0.0
    %2041 = vmatprep.subr.mxu0 0.0
    %2042 = vmatpush1.msra.mxu0 0.0
    %2043 = vmatprep.subr.mxu0 0.0
    %2044 = vmatpush1.msra.mxu0 0.0
    %2045 = vmatprep.subr.mxu0 0.0
    %2046 = vmatpush1.msra.mxu0 0.0
    %2047 = vmatprep.subr.mxu0 0.0
    %2048 = vmatpush1.msra.mxu0 0.0
    %2049 = vmatprep.subr.mxu0 0.0
    %2050 = vmatpush1.msra.mxu0 0.0
    %2051 = vmatprep.subr.mxu0 0.0
    %2052 = vmatpush1.msra.mxu0 0.0
    %2053 = vmatprep.subr.mxu0 0.0
    %2054 = vmatpush1.msra.mxu0 0.0
    %2055 = vmatprep.subr.mxu0 0.0
    %2056 = vmatpush1.msra.mxu0 0.0
    %2057 = vmatprep.subr.mxu0 0.0
    %2058 = vmatpush1.msra.mxu0 0.0
    %2059 = vmatprep.subr.mxu0 0.0
    %2060 = vmatpush1.msra.mxu0 0.0
    %2061 = vmatprep.subr.mxu0 0.0
    %2062 = vmatpush1.msra.mxu0 0.0
    %2063 = vmatprep.subr.mxu0 0.0
    %2064 = vmatpush1.msra.mxu0 0.0
    %2065 = vmatprep.subr.mxu0 0.0
    %2066 = vmatpush1.msra.mxu0 0.0
    %2067 = vmatprep.subr.mxu0 0.0
    %2068 = vmatpush1.msra.mxu0 0.0
    %2069 = vmatprep.subr.mxu0 0.0
    %2070 = vmatpush1.msra.mxu0 0.0
    %2071 = vmatprep.subr.mxu0 0.0
    %2072 = vmatpush1.msra.mxu0 0.0
    %2073 = vmatprep.mubr.f32.mxu0 0.0
    %2074 = vmatmul.mubr.f32.gmra.mrb[0].mxu0 %v1998
    %v2075 = vpop.f32.mrb[0].mxu0
    %v2076 = vadd.f32 %v1980, %v2075
    %v2077 = vpop.f32.mrb[0].mxu0
    %2078 = vmatprep.mubr.f32.mxu0 0.0
    %2079 = vmatmul.mubr.f32.gmra.mrb[0].mxu0 %v2001
    %v2080 = vpop.f32.mrb[0].mxu0
    %v2081 = vadd.f32 %v1984, %v2080
    %v2082 = vpop.f32.mrb[0].mxu0
    %2083 = vmatprep.mubr.f32.mxu0 0.0
    %2084 = vmatmul.mubr.f32.gmra.mrb[0].mxu0 %v2004
    %v2085 = vpop.f32.mrb[0].mxu0
    %v2086 = vadd.f32 %v1988, %v2085
    %v2087 = vpop.f32.mrb[0].mxu0
    %2088 = vmatprep.mubr.f32.mxu0 0.0
    %2089 = vmatmul.mubr.f32.gmra.mrb[0].mxu0 %v2007
    %v2090 = vpop.f32.mrb[0].mxu0
    %v2091 = vadd.f32 %v1992, %v2090
    %v2092 = vpop.f32.mrb[0].mxu0
    %2093 = vdwg.mxu0
    %v2094 = vadd.f32 %v2076, %v1847
    %v2095 = vadd.f32 %v2081, %v1852
    %v2096 = vadd.f32 %v2086, %v1857
    %v2097 = vadd.f32 %v2091, %v1862
    %v2098 = vsel %vm650, %v2094, -inf
    %v2099 = vrot.slane %v2098, 4
    %v2100 = vmax.f32 %v2098, %v2099
    %v2101 = vrot.slane %v2100, 2
    %v2102 = vmax.f32 %v2100, %v2101
    %v2103 = vrot.slane %v2102, 1
    %v2104 = vmax.f32 %v2102, %v2103
    %v2105 = vsel %vm650, %v2095, -inf
    %v2106 = vrot.slane %v2105, 4
    %v2107 = vmax.f32 %v2105, %v2106
    %v2108 = vrot.slane %v2107, 2
    %v2109 = vmax.f32 %v2107, %v2108
    %v2110 = vrot.slane %v2109, 1
    %v2111 = vmax.f32 %v2109, %v2110
    %v2112 = vsel %vm650, %v2096, -inf
    %v2113 = vrot.slane %v2112, 4
    %v2114 = vmax.f32 %v2112, %v2113
    %v2115 = vrot.slane %v2114, 2
    %v2116 = vmax.f32 %v2114, %v2115
    %v2117 = vrot.slane %v2116, 1
    %v2118 = vmax.f32 %v2116, %v2117
    %v2119 = vsel %vm650, %v2097, -inf
    %v2120 = vrot.slane %v2119, 4
    %v2121 = vmax.f32 %v2119, %v2120
    %v2122 = vrot.slane %v2121, 2
    %v2123 = vmax.f32 %v2121, %v2122
    %v2124 = vrot.slane %v2123, 1
    %v2125 = vmax.f32 %v2123, %v2124
    %v2126 = vmax.f32 %v2094, 0.0
    %v2127 = vmax.f32 %v2095, 0.0
    %v2128 = vmax.f32 %v2096, 0.0
    %v2129 = vmax.f32 %v2097, 0.0
    %v2130 = vld [vmem:[%s45] sm:$0xff]
    %v2131 = vld [vmem:[%s45 + $0x8] sm:$0xff]
    %v2132 = vld [vmem:[%s45 + $0x10] sm:$0xff]
    %v2133 = vld [vmem:[%s45 + $0x18] sm:$0xff]
    %v2134 = vld [vmem:[#allocation17] sm:$0x1]
    %v2136 = vlaneseq
    %v2137 = vshrl.u32 %v2136, 7
    %v2138 = vsub.s32 0, %v2137
    %v2139 = vrot.slane %v2134, %v2138
    %v2142 = vsel %vm650, %v2126, 0
    %v2145 = vsel %vm650, %v2127, 0
    %v2148 = vsel %vm650, %v2128, 0
    %v2151 = vsel %vm650, %v2129, 0
    %2153 = vmatprep.subr.mxu0 0.0
    %2154 = vmatpush1.msra.mxu0 %v2130
    %2155 = vmatprep.subr.mxu0 0.0
    %2156 = vmatpush1.msra.mxu0 %v2131
    %2157 = vmatprep.subr.mxu0 0.0
    %2158 = vmatpush1.msra.mxu0 %v2132
    %2159 = vmatprep.subr.mxu0 0.0
    %2160 = vmatpush1.msra.mxu0 %v2133
    %2161 = vmatprep.subr.mxu0 0.0
    %2162 = vmatpush1.msra.mxu0 0.0
    %2163 = vmatprep.subr.mxu0 0.0
    %2164 = vmatpush1.msra.mxu0 0.0
    %2165 = vmatprep.subr.mxu0 0.0
    %2166 = vmatpush1.msra.mxu0 0.0
    %2167 = vmatprep.subr.mxu0 0.0
    %2168 = vmatpush1.msra.mxu0 0.0
    %2169 = vmatprep.subr.mxu0 0.0
    %2170 = vmatpush1.msra.mxu0 0.0
    %2171 = vmatprep.subr.mxu0 0.0
    %2172 = vmatpush1.msra.mxu0 0.0
    %2173 = vmatprep.subr.mxu0 0.0
    %2174 = vmatpush1.msra.mxu0 0.0
    %2175 = vmatprep.subr.mxu0 0.0
    %2176 = vmatpush1.msra.mxu0 0.0
    %2177 = vmatprep.subr.mxu0 0.0
    %2178 = vmatpush1.msra.mxu0 0.0
    %2179 = vmatprep.subr.mxu0 0.0
    %2180 = vmatpush1.msra.mxu0 0.0
    %2181 = vmatprep.subr.mxu0 0.0
    %2182 = vmatpush1.msra.mxu0 0.0
    %2183 = vmatprep.subr.mxu0 0.0
    %2184 = vmatpush1.msra.mxu0 0.0
    %2185 = vmatprep.subr.mxu0 0.0
    %2186 = vmatpush1.msra.mxu0 0.0
    %2187 = vmatprep.subr.mxu0 0.0
    %2188 = vmatpush1.msra.mxu0 0.0
    %2189 = vmatprep.subr.mxu0 0.0
    %2190 = vmatpush1.msra.mxu0 0.0
    %2191 = vmatprep.subr.mxu0 0.0
    %2192 = vmatpush1.msra.mxu0 0.0
    %2193 = vmatprep.subr.mxu0 0.0
    %2194 = vmatpush1.msra.mxu0 0.0
    %2195 = vmatprep.subr.mxu0 0.0
    %2196 = vmatpush1.msra.mxu0 0.0
    %2197 = vmatprep.subr.mxu0 0.0
    %2198 = vmatpush1.msra.mxu0 0.0
    %2199 = vmatprep.subr.mxu0 0.0
    %2200 = vmatpush1.msra.mxu0 0.0
    %2201 = vmatprep.subr.mxu0 0.0
    %2202 = vmatpush1.msra.mxu0 0.0
    %2203 = vmatprep.subr.mxu0 0.0
    %2204 = vmatpush1.msra.mxu0 0.0
    %2205 = vmatprep.subr.mxu0 0.0
    %2206 = vmatpush1.msra.mxu0 0.0
    %2207 = vmatprep.subr.mxu0 0.0
    %2208 = vmatpush1.msra.mxu0 0.0
    %2209 = vmatprep.subr.mxu0 0.0
    %2210 = vmatpush1.msra.mxu0 0.0
    %2211 = vmatprep.subr.mxu0 0.0
    %2212 = vmatpush1.msra.mxu0 0.0
    %2213 = vmatprep.subr.mxu0 0.0
    %2214 = vmatpush1.msra.mxu0 0.0
    %2215 = vmatprep.subr.mxu0 0.0
    %2216 = vmatpush1.msra.mxu0 0.0
    %2217 = vmatprep.mubr.f32.mxu0 0.0
    %2218 = vmatmul.mubr.f32.gmra.mrb[0].mxu0 %v2142
    %v2219 = vpop.f32.mrb[0].mxu0
    %v2220 = vadd.f32 %v2139, %v2219
    %v2221 = vpop.f32.mrb[0].mxu0
    %2222 = vmatprep.mubr.f32.mxu0 0.0
    %2223 = vmatmul.mubr.f32.gmra.mrb[0].mxu0 %v2145
    %v2224 = vpop.f32.mrb[0].mxu0
    %v2225 = vadd.f32 %v2139, %v2224
    %v2226 = vpop.f32.mrb[0].mxu0
    %2227 = vmatprep.mubr.f32.mxu0 0.0
    %2228 = vmatmul.mubr.f32.gmra.mrb[0].mxu0 %v2148
    %v2229 = vpop.f32.mrb[0].mxu0
    %v2230 = vadd.f32 %v2139, %v2229
    %v2231 = vpop.f32.mrb[0].mxu0
    %2232 = vmatprep.mubr.f32.mxu0 0.0
    %2233 = vmatmul.mubr.f32.gmra.mrb[0].mxu0 %v2151
    %v2234 = vpop.f32.mrb[0].mxu0
    %v2235 = vadd.f32 %v2139, %v2234
    %v2236 = vpop.f32.mrb[0].mxu0
    %2237 = vdwg.mxu0
    %v2238 = vmax.f32 %v2104, 0.0
    %v2239 = vmax.f32 %v2111, 0.0
    %v2240 = vmax.f32 %v2118, 0.0
    %v2241 = vmax.f32 %v2125, 0.0
    %v2242 = vld [vmem:[#allocation16] sm:$0xff]
    %v2243 = vld [vmem:[#allocation16 + $0x8] sm:$0xff]
    %v2244 = vld [vmem:[#allocation16 + $0x10] sm:$0xff]
    %v2245 = vld [vmem:[#allocation16 + $0x18] sm:$0xff]
    %v2250 = vsel %vm1005, %v2239, %v2238
    %v2251 = vsel %vm1007, %v2240, %v2250
    %v2252 = vsel %vm1009, %v2241, %v2251
    %v2253 = vsel %vm650, %v2252, 0
    %2255 = vmatprep.subr.mxu0 0.0
    %2256 = vmatpush1.msra.mxu0 %v2242
    %2257 = vmatprep.subr.mxu0 0.0
    %2258 = vmatpush1.msra.mxu0 %v2243
    %2259 = vmatprep.subr.mxu0 0.0
    %2260 = vmatpush1.msra.mxu0 %v2244
    %2261 = vmatprep.subr.mxu0 0.0
    %2262 = vmatpush1.msra.mxu0 %v2245
    %2263 = vmatprep.subr.mxu0 0.0
    %2264 = vmatpush1.msra.mxu0 0.0
    %2265 = vmatprep.subr.mxu0 0.0
    %2266 = vmatpush1.msra.mxu0 0.0
    %2267 = vmatprep.subr.mxu0 0.0
    %2268 = vmatpush1.msra.mxu0 0.0
    %2269 = vmatprep.subr.mxu0 0.0
    %2270 = vmatpush1.msra.mxu0 0.0
    %2271 = vmatprep.subr.mxu0 0.0
    %2272 = vmatpush1.msra.mxu0 0.0
    %2273 = vmatprep.subr.mxu0 0.0
    %2274 = vmatpush1.msra.mxu0 0.0
    %2275 = vmatprep.subr.mxu0 0.0
    %2276 = vmatpush1.msra.mxu0 0.0
    %2277 = vmatprep.subr.mxu0 0.0
    %2278 = vmatpush1.msra.mxu0 0.0
    %2279 = vmatprep.subr.mxu0 0.0
    %2280 = vmatpush1.msra.mxu0 0.0
    %2281 = vmatprep.subr.mxu0 0.0
    %2282 = vmatpush1.msra.mxu0 0.0
    %2283 = vmatprep.subr.mxu0 0.0
    %2284 = vmatpush1.msra.mxu0 0.0
    %2285 = vmatprep.subr.mxu0 0.0
    %2286 = vmatpush1.msra.mxu0 0.0
    %2287 = vmatprep.subr.mxu0 0.0
    %2288 = vmatpush1.msra.mxu0 0.0
    %2289 = vmatprep.subr.mxu0 0.0
    %2290 = vmatpush1.msra.mxu0 0.0
    %2291 = vmatprep.subr.mxu0 0.0
    %2292 = vmatpush1.msra.mxu0 0.0
    %2293 = vmatprep.subr.mxu0 0.0
    %2294 = vmatpush1.msra.mxu0 0.0
    %2295 = vmatprep.subr.mxu0 0.0
    %2296 = vmatpush1.msra.mxu0 0.0
    %2297 = vmatprep.subr.mxu0 0.0
    %2298 = vmatpush1.msra.mxu0 0.0
    %2299 = vmatprep.subr.mxu0 0.0
    %2300 = vmatpush1.msra.mxu0 0.0
    %2301 = vmatprep.subr.mxu0 0.0
    %2302 = vmatpush1.msra.mxu0 0.0
    %2303 = vmatprep.subr.mxu0 0.0
    %2304 = vmatpush1.msra.mxu0 0.0
    %2305 = vmatprep.subr.mxu0 0.0
    %2306 = vmatpush1.msra.mxu0 0.0
    %2307 = vmatprep.subr.mxu0 0.0
    %2308 = vmatpush1.msra.mxu0 0.0
    %2309 = vmatprep.subr.mxu0 0.0
    %2310 = vmatpush1.msra.mxu0 0.0
    %2311 = vmatprep.subr.mxu0 0.0
    %2312 = vmatpush1.msra.mxu0 0.0
    %2313 = vmatprep.subr.mxu0 0.0
    %2314 = vmatpush1.msra.mxu0 0.0
    %2315 = vmatprep.subr.mxu0 0.0
    %2316 = vmatpush1.msra.mxu0 0.0
    %2317 = vmatprep.subr.mxu0 0.0
    %2318 = vmatpush1.msra.mxu0 0.0
    %2319 = vmatprep.mubr.f32.mxu0 0.0
    %2320 = vmatmul.mubr.f32.gmra.mrb[0].mxu0 %v2253
    %v2321 = vpop.f32.mrb[0].mxu0
    %v2322 = vadd.f32 0.0, %v2321
    %v2323 = vpop.f32.mrb[0].mxu0
    %2324 = vdwg.mxu0
    %v2327 = vunpack.c.l.s4 1966171168
    %v2328 = vunpack.c.0.s8 %v2327
    %v2329 = vlaneseq
    %v2330 = vshrl.u32 %v2329, 7
    %v2331 = vsub.s32 %v2328, %v2330
    %v2332 = vrot.slane %v2322, %v2331
    %v2333 = vcombine.high %v2332, %v2332
    %v2335 = vunpack.c.l.s4 1966171168
    %v2336 = vunpack.c.0.s8 %v2335
    %v2337 = vlaneseq
    %v2338 = vshrl.u32 %v2337, 7
    %v2339 = vsub.s32 %v2336, %v2338
    %v2340 = vrot.slane %v2332, %v2339
    %v2342 = vunpack.c.l.s4 1966171168
    %v2343 = vunpack.c.0.s8 %v2342
    %v2344 = vlaneseq
    %v2345 = vshrl.u32 %v2344, 7
    %v2346 = vsub.s32 %v2343, %v2345
    %v2347 = vrot.slane %v2333, %v2346
    %v2348 = vcombine.high %v2340, %v2340
    %v2349 = vcombine.high %v2347, %v2347
    %v2350 = vlaneseq
    %v2351 = vshrl.u32 %v2350, 7
    %v2352 = vsub.s32 0, %v2351
    %v2353 = vrot.slane %v2340, %v2352
    %v2354 = vlaneseq
    %v2355 = vshrl.u32 %v2354, 7
    %v2356 = vsub.s32 0, %v2355
    %v2357 = vrot.slane %v2347, %v2356
    %v2358 = vlaneseq
    %v2359 = vshrl.u32 %v2358, 7
    %v2360 = vsub.s32 0, %v2359
    %v2361 = vrot.slane %v2348, %v2360
    %v2362 = vlaneseq
    %v2363 = vshrl.u32 %v2362, 7
    %v2364 = vsub.s32 0, %v2363
    %v2365 = vrot.slane %v2349, %v2364
    %v2370 = vadd.f32 %v2220, %v2353
    %v2371 = vadd.f32 %v2225, %v2357
    %v2372 = vadd.f32 %v2230, %v2361
    %v2373 = vadd.f32 %v2235, %v2365
    %v2374 = vmax.f32 %v2370, 0.0
    %v2375 = vmax.f32 %v2371, 0.0
    %v2376 = vmax.f32 %v2372, 0.0
    %v2377 = vmax.f32 %v2373, 0.0
    %v2378 = vld [vmem:[#allocation19] sm:$0xff]
    %v2379 = vld [vmem:[#allocation19 + $0x8] sm:$0xff]
    %v2380 = vld [vmem:[#allocation19 + $0x10] sm:$0xff]
    %v2381 = vld [vmem:[#allocation19 + $0x18] sm:$0xff]
    %v2382 = vld [vmem:[#allocation20] sm:$0x1]
    %v2384 = vlaneseq
    %v2385 = vshrl.u32 %v2384, 7
    %v2386 = vsub.s32 0, %v2385
    %v2387 = vrot.slane %v2382, %v2386
    %v2390 = vsel %vm650, %v2374, 0
    %v2393 = vsel %vm650, %v2375, 0
    %v2396 = vsel %vm650, %v2376, 0
    %v2399 = vsel %vm650, %v2377, 0
    %2401 = vmatprep.subr.mxu0 0.0
    %2402 = vmatpush1.msra.mxu0 %v2378
    %2403 = vmatprep.subr.mxu0 0.0
    %2404 = vmatpush1.msra.mxu0 %v2379
    %2405 = vmatprep.subr.mxu0 0.0
    %2406 = vmatpush1.msra.mxu0 %v2380
    %2407 = vmatprep.subr.mxu0 0.0
    %2408 = vmatpush1.msra.mxu0 %v2381
    %2409 = vmatprep.subr.mxu0 0.0
    %2410 = vmatpush1.msra.mxu0 0.0
    %2411 = vmatprep.subr.mxu0 0.0
    %2412 = vmatpush1.msra.mxu0 0.0
    %2413 = vmatprep.subr.mxu0 0.0
    %2414 = vmatpush1.msra.mxu0 0.0
    %2415 = vmatprep.subr.mxu0 0.0
    %2416 = vmatpush1.msra.mxu0 0.0
    %2417 = vmatprep.subr.mxu0 0.0
    %2418 = vmatpush1.msra.mxu0 0.0
    %2419 = vmatprep.subr.mxu0 0.0
    %2420 = vmatpush1.msra.mxu0 0.0
    %2421 = vmatprep.subr.mxu0 0.0
    %2422 = vmatpush1.msra.mxu0 0.0
    %2423 = vmatprep.subr.mxu0 0.0
    %2424 = vmatpush1.msra.mxu0 0.0
    %2425 = vmatprep.subr.mxu0 0.0
    %2426 = vmatpush1.msra.mxu0 0.0
    %2427 = vmatprep.subr.mxu0 0.0
    %2428 = vmatpush1.msra.mxu0 0.0
    %2429 = vmatprep.subr.mxu0 0.0
    %2430 = vmatpush1.msra.mxu0 0.0
    %2431 = vmatprep.subr.mxu0 0.0
    %2432 = vmatpush1.msra.mxu0 0.0
    %2433 = vmatprep.subr.mxu0 0.0
    %2434 = vmatpush1.msra.mxu0 0.0
    %2435 = vmatprep.subr.mxu0 0.0
    %2436 = vmatpush1.msra.mxu0 0.0
    %2437 = vmatprep.subr.mxu0 0.0
    %2438 = vmatpush1.msra.mxu0 0.0
    %2439 = vmatprep.subr.mxu0 0.0
    %2440 = vmatpush1.msra.mxu0 0.0
    %2441 = vmatprep.subr.mxu0 0.0
    %2442 = vmatpush1.msra.mxu0 0.0
    %2443 = vmatprep.subr.mxu0 0.0
    %2444 = vmatpush1.msra.mxu0 0.0
    %2445 = vmatprep.subr.mxu0 0.0
    %2446 = vmatpush1.msra.mxu0 0.0
    %2447 = vmatprep.subr.mxu0 0.0
    %2448 = vmatpush1.msra.mxu0 0.0
    %2449 = vmatprep.subr.mxu0 0.0
    %2450 = vmatpush1.msra.mxu0 0.0
    %2451 = vmatprep.subr.mxu0 0.0
    %2452 = vmatpush1.msra.mxu0 0.0
    %2453 = vmatprep.subr.mxu0 0.0
    %2454 = vmatpush1.msra.mxu0 0.0
    %2455 = vmatprep.subr.mxu0 0.0
    %2456 = vmatpush1.msra.mxu0 0.0
    %2457 = vmatprep.subr.mxu0 0.0
    %2458 = vmatpush1.msra.mxu0 0.0
    %2459 = vmatprep.subr.mxu0 0.0
    %2460 = vmatpush1.msra.mxu0 0.0
    %2461 = vmatprep.subr.mxu0 0.0
    %2462 = vmatpush1.msra.mxu0 0.0
    %2463 = vmatprep.subr.mxu0 0.0
    %2464 = vmatpush1.msra.mxu0 0.0
    %2465 = vmatprep.mubr.f32.mxu0 0.0
    %2466 = vmatmul.mubr.f32.gmra.mrb[0].mxu0 %v2390
    %v2467 = vpop.f32.mrb[0].mxu0
    %v2468 = vadd.f32 %v2387, %v2467
    %v2469 = vpop.f32.mrb[0].mxu0
    %2470 = vmatprep.mubr.f32.mxu0 0.0
    %2471 = vmatmul.mubr.f32.gmra.mrb[0].mxu0 %v2393
    %v2472 = vpop.f32.mrb[0].mxu0
    %v2473 = vadd.f32 %v2387, %v2472
    %v2474 = vpop.f32.mrb[0].mxu0
    %2475 = vmatprep.mubr.f32.mxu0 0.0
    %2476 = vmatmul.mubr.f32.gmra.mrb[0].mxu0 %v2396
    %v2477 = vpop.f32.mrb[0].mxu0
    %v2478 = vadd.f32 %v2387, %v2477
    %v2479 = vpop.f32.mrb[0].mxu0
    %2480 = vmatprep.mubr.f32.mxu0 0.0
    %2481 = vmatmul.mubr.f32.gmra.mrb[0].mxu0 %v2399
    %v2482 = vpop.f32.mrb[0].mxu0
    %v2483 = vadd.f32 %v2387, %v2482
    %v2484 = vpop.f32.mrb[0].mxu0
    %2485 = vdwg.mxu0
    %v2486 = vld [vmem:[#allocation22] sm:$0xff]
    %v2487 = vld [vmem:[#allocation22 + $0x8] sm:$0xff]
    %v2488 = vld [vmem:[#allocation22 + $0x10] sm:$0xff]
    %v2489 = vld [vmem:[#allocation22 + $0x18] sm:$0xff]
    %v2490 = vld [vmem:[#allocation23] sm:$0xff]
    %v2491 = vld [vmem:[#allocation23 + $0x8] sm:$0xff]
    %v2492 = vld [vmem:[#allocation23 + $0x10] sm:$0xff]
    %v2493 = vld [vmem:[#allocation23 + $0x18] sm:$0xff]
    %v2498 = vsel %vm1005, %v2111, %v2104
    %v2499 = vsel %vm1007, %v2118, %v2498
    %v2500 = vsel %vm1009, %v2125, %v2499
    %v2501 = vsel %vm650, %v2500, 0
    %2503 = vmatprep.subr.mxu0 0.0
    %2504 = vmatpush1.msra.mxu0 %v2490
    %2505 = vmatprep.subr.mxu0 0.0
    %2506 = vmatpush1.msra.mxu0 %v2491
    %2507 = vmatprep.subr.mxu0 0.0
    %2508 = vmatpush1.msra.mxu0 %v2492
    %2509 = vmatprep.subr.mxu0 0.0
    %2510 = vmatpush1.msra.mxu0 %v2493
    %2511 = vmatprep.subr.mxu0 0.0
    %2512 = vmatpush1.msra.mxu0 0.0
    %2513 = vmatprep.subr.mxu0 0.0
    %2514 = vmatpush1.msra.mxu0 0.0
    %2515 = vmatprep.subr.mxu0 0.0
    %2516 = vmatpush1.msra.mxu0 0.0
    %2517 = vmatprep.subr.mxu0 0.0
    %2518 = vmatpush1.msra.mxu0 0.0
    %2519 = vmatprep.subr.mxu0 0.0
    %2520 = vmatpush1.msra.mxu0 0.0
    %2521 = vmatprep.subr.mxu0 0.0
    %2522 = vmatpush1.msra.mxu0 0.0
    %2523 = vmatprep.subr.mxu0 0.0
    %2524 = vmatpush1.msra.mxu0 0.0
    %2525 = vmatprep.subr.mxu0 0.0
    %2526 = vmatpush1.msra.mxu0 0.0
    %2527 = vmatprep.subr.mxu0 0.0
    %2528 = vmatpush1.msra.mxu0 0.0
    %2529 = vmatprep.subr.mxu0 0.0
    %2530 = vmatpush1.msra.mxu0 0.0
    %2531 = vmatprep.subr.mxu0 0.0
    %2532 = vmatpush1.msra.mxu0 0.0
    %2533 = vmatprep.subr.mxu0 0.0
    %2534 = vmatpush1.msra.mxu0 0.0
    %2535 = vmatprep.subr.mxu0 0.0
    %2536 = vmatpush1.msra.mxu0 0.0
    %2537 = vmatprep.subr.mxu0 0.0
    %2538 = vmatpush1.msra.mxu0 0.0
    %2539 = vmatprep.subr.mxu0 0.0
    %2540 = vmatpush1.msra.mxu0 0.0
    %2541 = vmatprep.subr.mxu0 0.0
    %2542 = vmatpush1.msra.mxu0 0.0
    %2543 = vmatprep.subr.mxu0 0.0
    %2544 = vmatpush1.msra.mxu0 0.0
    %2545 = vmatprep.subr.mxu0 0.0
    %2546 = vmatpush1.msra.mxu0 0.0
    %2547 = vmatprep.subr.mxu0 0.0
    %2548 = vmatpush1.msra.mxu0 0.0
    %2549 = vmatprep.subr.mxu0 0.0
    %2550 = vmatpush1.msra.mxu0 0.0
    %2551 = vmatprep.subr.mxu0 0.0
    %2552 = vmatpush1.msra.mxu0 0.0
    %2553 = vmatprep.subr.mxu0 0.0
    %2554 = vmatpush1.msra.mxu0 0.0
    %2555 = vmatprep.subr.mxu0 0.0
    %2556 = vmatpush1.msra.mxu0 0.0
    %2557 = vmatprep.subr.mxu0 0.0
    %2558 = vmatpush1.msra.mxu0 0.0
    %2559 = vmatprep.subr.mxu0 0.0
    %2560 = vmatpush1.msra.mxu0 0.0
    %2561 = vmatprep.subr.mxu0 0.0
    %2562 = vmatpush1.msra.mxu0 0.0
    %2563 = vmatprep.subr.mxu0 0.0
    %2564 = vmatpush1.msra.mxu0 0.0
    %2565 = vmatprep.subr.mxu0 0.0
    %2566 = vmatpush1.msra.mxu0 0.0
    %2567 = vmatprep.mubr.f32.mxu0 0.0
    %2568 = vmatmul.mubr.f32.gmra.mrb[0].mxu0 %v2501
    %v2569 = vpop.f32.mrb[0].mxu0
    %v2570 = vadd.f32 0.0, %v2569
    %v2571 = vpop.f32.mrb[0].mxu0
    %2572 = vdwg.mxu0
    %v2575 = vunpack.c.l.s4 1966171168
    %v2576 = vunpack.c.0.s8 %v2575
    %v2577 = vlaneseq
    %v2578 = vshrl.u32 %v2577, 7
    %v2579 = vsub.s32 %v2576, %v2578
    %v2580 = vrot.slane %v2570, %v2579
    %v2581 = vcombine.high %v2580, %v2580
    %v2583 = vunpack.c.l.s4 1966171168
    %v2584 = vunpack.c.0.s8 %v2583
    %v2585 = vlaneseq
    %v2586 = vshrl.u32 %v2585, 7
    %v2587 = vsub.s32 %v2584, %v2586
    %v2588 = vrot.slane %v2580, %v2587
    %v2590 = vunpack.c.l.s4 1966171168
    %v2591 = vunpack.c.0.s8 %v2590
    %v2592 = vlaneseq
    %v2593 = vshrl.u32 %v2592, 7
    %v2594 = vsub.s32 %v2591, %v2593
    %v2595 = vrot.slane %v2581, %v2594
    %v2596 = vcombine.high %v2588, %v2588
    %v2597 = vcombine.high %v2595, %v2595
    %v2598 = vlaneseq
    %v2599 = vshrl.u32 %v2598, 7
    %v2600 = vsub.s32 0, %v2599
    %v2601 = vrot.slane %v2588, %v2600
    %v2602 = vlaneseq
    %v2603 = vshrl.u32 %v2602, 7
    %v2604 = vsub.s32 0, %v2603
    %v2605 = vrot.slane %v2595, %v2604
    %v2606 = vlaneseq
    %v2607 = vshrl.u32 %v2606, 7
    %v2608 = vsub.s32 0, %v2607
    %v2609 = vrot.slane %v2596, %v2608
    %v2610 = vlaneseq
    %v2611 = vshrl.u32 %v2610, 7
    %v2612 = vsub.s32 0, %v2611
    %v2613 = vrot.slane %v2597, %v2612
    %v2619 = vsel %vm650, %v2094, 0
    %v2622 = vsel %vm650, %v2095, 0
    %v2625 = vsel %vm650, %v2096, 0
    %v2628 = vsel %vm650, %v2097, 0
    %2630 = vmatprep.subr.mxu0 0.0
    %2631 = vmatpush1.msra.mxu0 %v2486
    %2632 = vmatprep.subr.mxu0 0.0
    %2633 = vmatpush1.msra.mxu0 %v2487
    %2634 = vmatprep.subr.mxu0 0.0
    %2635 = vmatpush1.msra.mxu0 %v2488
    %2636 = vmatprep.subr.mxu0 0.0
    %2637 = vmatpush1.msra.mxu0 %v2489
    %2638 = vmatprep.subr.mxu0 0.0
    %2639 = vmatpush1.msra.mxu0 0.0
    %2640 = vmatprep.subr.mxu0 0.0
    %2641 = vmatpush1.msra.mxu0 0.0
    %2642 = vmatprep.subr.mxu0 0.0
    %2643 = vmatpush1.msra.mxu0 0.0
    %2644 = vmatprep.subr.mxu0 0.0
    %2645 = vmatpush1.msra.mxu0 0.0
    %2646 = vmatprep.subr.mxu0 0.0
    %2647 = vmatpush1.msra.mxu0 0.0
    %2648 = vmatprep.subr.mxu0 0.0
    %2649 = vmatpush1.msra.mxu0 0.0
    %2650 = vmatprep.subr.mxu0 0.0
    %2651 = vmatpush1.msra.mxu0 0.0
    %2652 = vmatprep.subr.mxu0 0.0
    %2653 = vmatpush1.msra.mxu0 0.0
    %2654 = vmatprep.subr.mxu0 0.0
    %2655 = vmatpush1.msra.mxu0 0.0
    %2656 = vmatprep.subr.mxu0 0.0
    %2657 = vmatpush1.msra.mxu0 0.0
    %2658 = vmatprep.subr.mxu0 0.0
    %2659 = vmatpush1.msra.mxu0 0.0
    %2660 = vmatprep.subr.mxu0 0.0
    %2661 = vmatpush1.msra.mxu0 0.0
    %2662 = vmatprep.subr.mxu0 0.0
    %2663 = vmatpush1.msra.mxu0 0.0
    %2664 = vmatprep.subr.mxu0 0.0
    %2665 = vmatpush1.msra.mxu0 0.0
    %2666 = vmatprep.subr.mxu0 0.0
    %2667 = vmatpush1.msra.mxu0 0.0
    %2668 = vmatprep.subr.mxu0 0.0
    %2669 = vmatpush1.msra.mxu0 0.0
    %2670 = vmatprep.subr.mxu0 0.0
    %2671 = vmatpush1.msra.mxu0 0.0
    %2672 = vmatprep.subr.mxu0 0.0
    %2673 = vmatpush1.msra.mxu0 0.0
    %2674 = vmatprep.subr.mxu0 0.0
    %2675 = vmatpush1.msra.mxu0 0.0
    %2676 = vmatprep.subr.mxu0 0.0
    %2677 = vmatpush1.msra.mxu0 0.0
    %2678 = vmatprep.subr.mxu0 0.0
    %2679 = vmatpush1.msra.mxu0 0.0
    %2680 = vmatprep.subr.mxu0 0.0
    %2681 = vmatpush1.msra.mxu0 0.0
    %2682 = vmatprep.subr.mxu0 0.0
    %2683 = vmatpush1.msra.mxu0 0.0
    %2684 = vmatprep.subr.mxu0 0.0
    %2685 = vmatpush1.msra.mxu0 0.0
    %2686 = vmatprep.subr.mxu0 0.0
    %2687 = vmatpush1.msra.mxu0 0.0
    %2688 = vmatprep.subr.mxu0 0.0
    %2689 = vmatpush1.msra.mxu0 0.0
    %2690 = vmatprep.subr.mxu0 0.0
    %2691 = vmatpush1.msra.mxu0 0.0
    %2692 = vmatprep.subr.mxu0 0.0
    %2693 = vmatpush1.msra.mxu0 0.0
    %2694 = vmatprep.mubr.f32.mxu0 0.0
    %2695 = vmatmul.mubr.f32.gmra.mrb[0].mxu0 %v2619
    %v2696 = vpop.f32.mrb[0].mxu0
    %v2697 = vadd.f32 %v2601, %v2696
    %v2698 = vpop.f32.mrb[0].mxu0
    %2699 = vmatprep.mubr.f32.mxu0 0.0
    %2700 = vmatmul.mubr.f32.gmra.mrb[0].mxu0 %v2622
    %v2701 = vpop.f32.mrb[0].mxu0
    %v2702 = vadd.f32 %v2605, %v2701
    %v2703 = vpop.f32.mrb[0].mxu0
    %2704 = vmatprep.mubr.f32.mxu0 0.0
    %2705 = vmatmul.mubr.f32.gmra.mrb[0].mxu0 %v2625
    %v2706 = vpop.f32.mrb[0].mxu0
    %v2707 = vadd.f32 %v2609, %v2706
    %v2708 = vpop.f32.mrb[0].mxu0
    %2709 = vmatprep.mubr.f32.mxu0 0.0
    %2710 = vmatmul.mubr.f32.gmra.mrb[0].mxu0 %v2628
    %v2711 = vpop.f32.mrb[0].mxu0
    %v2712 = vadd.f32 %v2613, %v2711
    %v2713 = vpop.f32.mrb[0].mxu0
    %2714 = vdwg.mxu0
    %v2715 = vadd.f32 %v2697, %v2468
    %v2716 = vadd.f32 %v2702, %v2473
    %v2717 = vadd.f32 %v2707, %v2478
    %v2718 = vadd.f32 %v2712, %v2483
    %v2719 = vsel %vm650, %v2715, -inf
    %v2720 = vrot.slane %v2719, 4
    %v2721 = vmax.f32 %v2719, %v2720
    %v2722 = vrot.slane %v2721, 2
    %v2723 = vmax.f32 %v2721, %v2722
    %v2724 = vrot.slane %v2723, 1
    %v2725 = vmax.f32 %v2723, %v2724
    %v2726 = vsel %vm650, %v2716, -inf
    %v2727 = vrot.slane %v2726, 4
    %v2728 = vmax.f32 %v2726, %v2727
    %v2729 = vrot.slane %v2728, 2
    %v2730 = vmax.f32 %v2728, %v2729
    %v2731 = vrot.slane %v2730, 1
    %v2732 = vmax.f32 %v2730, %v2731
    %v2733 = vsel %vm650, %v2717, -inf
    %v2734 = vrot.slane %v2733, 4
    %v2735 = vmax.f32 %v2733, %v2734
    %v2736 = vrot.slane %v2735, 2
    %v2737 = vmax.f32 %v2735, %v2736
    %v2738 = vrot.slane %v2737, 1
    %v2739 = vmax.f32 %v2737, %v2738
    %v2740 = vsel %vm650, %v2718, -inf
    %v2741 = vrot.slane %v2740, 4
    %v2742 = vmax.f32 %v2740, %v2741
    %v2743 = vrot.slane %v2742, 2
    %v2744 = vmax.f32 %v2742, %v2743
    %v2745 = vrot.slane %v2744, 1
    %v2746 = vmax.f32 %v2744, %v2745
    %v2747 = vmax.f32 %v2715, 0.0
    %v2748 = vmax.f32 %v2716, 0.0
    %v2749 = vmax.f32 %v2717, 0.0
    %v2750 = vmax.f32 %v2718, 0.0
    %v2751 = vld [vmem:[#allocation25] sm:$0xff]
    %v2752 = vld [vmem:[#allocation25 + $0x8] sm:$0xff]
    %v2753 = vld [vmem:[#allocation25 + $0x10] sm:$0xff]
    %v2754 = vld [vmem:[#allocation25 + $0x18] sm:$0xff]
    %v2755 = vld [vmem:[#allocation26] sm:$0x1]
    %v2757 = vlaneseq
    %v2758 = vshrl.u32 %v2757, 7
    %v2759 = vsub.s32 0, %v2758
    %v2760 = vrot.slane %v2755, %v2759
    %v2763 = vsel %vm650, %v2747, 0
    %v2766 = vsel %vm650, %v2748, 0
    %v2769 = vsel %vm650, %v2749, 0
    %v2772 = vsel %vm650, %v2750, 0
    %2774 = vmatprep.subr.mxu0 0.0
    %2775 = vmatpush1.msra.mxu0 %v2751
    %2776 = vmatprep.subr.mxu0 0.0
    %2777 = vmatpush1.msra.mxu0 %v2752
    %2778 = vmatprep.subr.mxu0 0.0
    %2779 = vmatpush1.msra.mxu0 %v2753
    %2780 = vmatprep.subr.mxu0 0.0
    %2781 = vmatpush1.msra.mxu0 %v2754
    %2782 = vmatprep.subr.mxu0 0.0
    %2783 = vmatpush1.msra.mxu0 0.0
    %2784 = vmatprep.subr.mxu0 0.0
    %2785 = vmatpush1.msra.mxu0 0.0
    %2786 = vmatprep.subr.mxu0 0.0
    %2787 = vmatpush1.msra.mxu0 0.0
    %2788 = vmatprep.subr.mxu0 0.0
    %2789 = vmatpush1.msra.mxu0 0.0
    %2790 = vmatprep.subr.mxu0 0.0
    %2791 = vmatpush1.msra.mxu0 0.0
    %2792 = vmatprep.subr.mxu0 0.0
    %2793 = vmatpush1.msra.mxu0 0.0
    %2794 = vmatprep.subr.mxu0 0.0
    %2795 = vmatpush1.msra.mxu0 0.0
    %2796 = vmatprep.subr.mxu0 0.0
    %2797 = vmatpush1.msra.mxu0 0.0
    %2798 = vmatprep.subr.mxu0 0.0
    %2799 = vmatpush1.msra.mxu0 0.0
    %2800 = vmatprep.subr.mxu0 0.0
    %2801 = vmatpush1.msra.mxu0 0.0
    %2802 = vmatprep.subr.mxu0 0.0
    %2803 = vmatpush1.msra.mxu0 0.0
    %2804 = vmatprep.subr.mxu0 0.0
    %2805 = vmatpush1.msra.mxu0 0.0
    %2806 = vmatprep.subr.mxu0 0.0
    %2807 = vmatpush1.msra.mxu0 0.0
    %2808 = vmatprep.subr.mxu0 0.0
    %2809 = vmatpush1.msra.mxu0 0.0
    %2810 = vmatprep.subr.mxu0 0.0
    %2811 = vmatpush1.msra.mxu0 0.0
    %2812 = vmatprep.subr.mxu0 0.0
    %2813 = vmatpush1.msra.mxu0 0.0
    %2814 = vmatprep.subr.mxu0 0.0
    %2815 = vmatpush1.msra.mxu0 0.0
    %2816 = vmatprep.subr.mxu0 0.0
    %2817 = vmatpush1.msra.mxu0 0.0
    %2818 = vmatprep.subr.mxu0 0.0
    %2819 = vmatpush1.msra.mxu0 0.0
    %2820 = vmatprep.subr.mxu0 0.0
    %2821 = vmatpush1.msra.mxu0 0.0
    %2822 = vmatprep.subr.mxu0 0.0
    %2823 = vmatpush1.msra.mxu0 0.0
    %2824 = vmatprep.subr.mxu0 0.0
    %2825 = vmatpush1.msra.mxu0 0.0
    %2826 = vmatprep.subr.mxu0 0.0
    %2827 = vmatpush1.msra.mxu0 0.0
    %2828 = vmatprep.subr.mxu0 0.0
    %2829 = vmatpush1.msra.mxu0 0.0
    %2830 = vmatprep.subr.mxu0 0.0
    %2831 = vmatpush1.msra.mxu0 0.0
    %2832 = vmatprep.subr.mxu0 0.0
    %2833 = vmatpush1.msra.mxu0 0.0
    %2834 = vmatprep.subr.mxu0 0.0
    %2835 = vmatpush1.msra.mxu0 0.0
    %2836 = vmatprep.subr.mxu0 0.0
    %2837 = vmatpush1.msra.mxu0 0.0
    %2838 = vmatprep.mubr.f32.mxu0 0.0
    %2839 = vmatmul.mubr.f32.gmra.mrb[0].mxu0 %v2763
    %v2840 = vpop.f32.mrb[0].mxu0
    %v2841 = vadd.f32 %v2760, %v2840
    %v2842 = vpop.f32.mrb[0].mxu0
    %2843 = vmatprep.mubr.f32.mxu0 0.0
    %2844 = vmatmul.mubr.f32.gmra.mrb[0].mxu0 %v2766
    %v2845 = vpop.f32.mrb[0].mxu0
    %v2846 = vadd.f32 %v2760, %v2845
    %v2847 = vpop.f32.mrb[0].mxu0
    %2848 = vmatprep.mubr.f32.mxu0 0.0
    %2849 = vmatmul.mubr.f32.gmra.mrb[0].mxu0 %v2769
    %v2850 = vpop.f32.mrb[0].mxu0
    %v2851 = vadd.f32 %v2760, %v2850
    %v2852 = vpop.f32.mrb[0].mxu0
    %2853 = vmatprep.mubr.f32.mxu0 0.0
    %2854 = vmatmul.mubr.f32.gmra.mrb[0].mxu0 %v2772
    %v2855 = vpop.f32.mrb[0].mxu0
    %v2856 = vadd.f32 %v2760, %v2855
    %v2857 = vpop.f32.mrb[0].mxu0
    %2858 = vdwg.mxu0
    %v2859 = vmax.f32 %v2725, 0.0
    %v2860 = vmax.f32 %v2732, 0.0
    %v2861 = vmax.f32 %v2739, 0.0
    %v2862 = vmax.f32 %v2746, 0.0
    %v2863 = vld [vmem:[%s61] sm:$0xff]
    %v2864 = vld [vmem:[%s61 + $0x8] sm:$0xff]
    %v2865 = vld [vmem:[%s61 + $0x10] sm:$0xff]
    %v2866 = vld [vmem:[%s61 + $0x18] sm:$0xff]
    %v2871 = vsel %vm1005, %v2860, %v2859
    %v2872 = vsel %vm1007, %v2861, %v2871
    %v2873 = vsel %vm1009, %v2862, %v2872
    %v2874 = vsel %vm650, %v2873, 0
    %2876 = vmatprep.subr.mxu0 0.0
    %2877 = vmatpush1.msra.mxu0 %v2863
    %2878 = vmatprep.subr.mxu0 0.0
    %2879 = vmatpush1.msra.mxu0 %v2864
    %2880 = vmatprep.subr.mxu0 0.0
    %2881 = vmatpush1.msra.mxu0 %v2865
    %2882 = vmatprep.subr.mxu0 0.0
    %2883 = vmatpush1.msra.mxu0 %v2866
    %2884 = vmatprep.subr.mxu0 0.0
    %2885 = vmatpush1.msra.mxu0 0.0
    %2886 = vmatprep.subr.mxu0 0.0
    %2887 = vmatpush1.msra.mxu0 0.0
    %2888 = vmatprep.subr.mxu0 0.0
    %2889 = vmatpush1.msra.mxu0 0.0
    %2890 = vmatprep.subr.mxu0 0.0
    %2891 = vmatpush1.msra.mxu0 0.0
    %2892 = vmatprep.subr.mxu0 0.0
    %2893 = vmatpush1.msra.mxu0 0.0
    %2894 = vmatprep.subr.mxu0 0.0
    %2895 = vmatpush1.msra.mxu0 0.0
    %2896 = vmatprep.subr.mxu0 0.0
    %2897 = vmatpush1.msra.mxu0 0.0
    %2898 = vmatprep.subr.mxu0 0.0
    %2899 = vmatpush1.msra.mxu0 0.0
    %2900 = vmatprep.subr.mxu0 0.0
    %2901 = vmatpush1.msra.mxu0 0.0
    %2902 = vmatprep.subr.mxu0 0.0
    %2903 = vmatpush1.msra.mxu0 0.0
    %2904 = vmatprep.subr.mxu0 0.0
    %2905 = vmatpush1.msra.mxu0 0.0
    %2906 = vmatprep.subr.mxu0 0.0
    %2907 = vmatpush1.msra.mxu0 0.0
    %2908 = vmatprep.subr.mxu0 0.0
    %2909 = vmatpush1.msra.mxu0 0.0
    %2910 = vmatprep.subr.mxu0 0.0
    %2911 = vmatpush1.msra.mxu0 0.0
    %2912 = vmatprep.subr.mxu0 0.0
    %2913 = vmatpush1.msra.mxu0 0.0
    %2914 = vmatprep.subr.mxu0 0.0
    %2915 = vmatpush1.msra.mxu0 0.0
    %2916 = vmatprep.subr.mxu0 0.0
    %2917 = vmatpush1.msra.mxu0 0.0
    %2918 = vmatprep.subr.mxu0 0.0
    %2919 = vmatpush1.msra.mxu0 0.0
    %2920 = vmatprep.subr.mxu0 0.0
    %2921 = vmatpush1.msra.mxu0 0.0
    %2922 = vmatprep.subr.mxu0 0.0
    %2923 = vmatpush1.msra.mxu0 0.0
    %2924 = vmatprep.subr.mxu0 0.0
    %2925 = vmatpush1.msra.mxu0 0.0
    %2926 = vmatprep.subr.mxu0 0.0
    %2927 = vmatpush1.msra.mxu0 0.0
    %2928 = vmatprep.subr.mxu0 0.0
    %2929 = vmatpush1.msra.mxu0 0.0
    %2930 = vmatprep.subr.mxu0 0.0
    %2931 = vmatpush1.msra.mxu0 0.0
    %2932 = vmatprep.subr.mxu0 0.0
    %2933 = vmatpush1.msra.mxu0 0.0
    %2934 = vmatprep.subr.mxu0 0.0
    %2935 = vmatpush1.msra.mxu0 0.0
    %2936 = vmatprep.subr.mxu0 0.0
    %2937 = vmatpush1.msra.mxu0 0.0
    %2938 = vmatprep.subr.mxu0 0.0
    %2939 = vmatpush1.msra.mxu0 0.0
    %2940 = vmatprep.mubr.f32.mxu0 0.0
    %2941 = vmatmul.mubr.f32.gmra.mrb[0].mxu0 %v2874
    %v2942 = vpop.f32.mrb[0].mxu0
    %v2943 = vadd.f32 0.0, %v2942
    %v2944 = vpop.f32.mrb[0].mxu0
    %2945 = vdwg.mxu0
    %v2948 = vunpack.c.l.s4 1966171168
    %v2949 = vunpack.c.0.s8 %v2948
    %v2950 = vlaneseq
    %v2951 = vshrl.u32 %v2950, 7
    %v2952 = vsub.s32 %v2949, %v2951
    %v2953 = vrot.slane %v2943, %v2952
    %v2954 = vcombine.high %v2953, %v2953
    %v2956 = vunpack.c.l.s4 1966171168
    %v2957 = vunpack.c.0.s8 %v2956
    %v2958 = vlaneseq
    %v2959 = vshrl.u32 %v2958, 7
    %v2960 = vsub.s32 %v2957, %v2959
    %v2961 = vrot.slane %v2953, %v2960
    %v2963 = vunpack.c.l.s4 1966171168
    %v2964 = vunpack.c.0.s8 %v2963
    %v2965 = vlaneseq
    %v2966 = vshrl.u32 %v2965, 7
    %v2967 = vsub.s32 %v2964, %v2966
    %v2968 = vrot.slane %v2954, %v2967
    %v2969 = vcombine.high %v2961, %v2961
    %v2970 = vcombine.high %v2968, %v2968
    %v2971 = vlaneseq
    %v2972 = vshrl.u32 %v2971, 7
    %v2973 = vsub.s32 0, %v2972
    %v2974 = vrot.slane %v2961, %v2973
    %v2975 = vlaneseq
    %v2976 = vshrl.u32 %v2975, 7
    %v2977 = vsub.s32 0, %v2976
    %v2978 = vrot.slane %v2968, %v2977
    %v2979 = vlaneseq
    %v2980 = vshrl.u32 %v2979, 7
    %v2981 = vsub.s32 0, %v2980
    %v2982 = vrot.slane %v2969, %v2981
    %v2983 = vlaneseq
    %v2984 = vshrl.u32 %v2983, 7
    %v2985 = vsub.s32 0, %v2984
    %v2986 = vrot.slane %v2970, %v2985
    %v2991 = vadd.f32 %v2841, %v2974
    %v2992 = vadd.f32 %v2846, %v2978
    %v2993 = vadd.f32 %v2851, %v2982
    %v2994 = vadd.f32 %v2856, %v2986
    %v2995 = vmax.f32 %v2991, 0.0
    %v2996 = vmax.f32 %v2992, 0.0
    %v2997 = vmax.f32 %v2993, 0.0
    %v2998 = vmax.f32 %v2994, 0.0
    %v2999 = vld [vmem:[#allocation28] sm:$0xff]
    %v3000 = vld [vmem:[#allocation28 + $0x8] sm:$0xff]
    %v3001 = vld [vmem:[#allocation28 + $0x10] sm:$0xff]
    %v3002 = vld [vmem:[#allocation28 + $0x18] sm:$0xff]
    %v3003 = vld [vmem:[#allocation29] sm:$0x1]
    %v3005 = vlaneseq
    %v3006 = vshrl.u32 %v3005, 7
    %v3007 = vsub.s32 0, %v3006
    %v3008 = vrot.slane %v3003, %v3007
    %v3011 = vsel %vm650, %v2995, 0
    %v3014 = vsel %vm650, %v2996, 0
    %v3017 = vsel %vm650, %v2997, 0
    %v3020 = vsel %vm650, %v2998, 0
    %3022 = vmatprep.subr.mxu0 0.0
    %3023 = vmatpush1.msra.mxu0 %v2999
    %3024 = vmatprep.subr.mxu0 0.0
    %3025 = vmatpush1.msra.mxu0 %v3000
    %3026 = vmatprep.subr.mxu0 0.0
    %3027 = vmatpush1.msra.mxu0 %v3001
    %3028 = vmatprep.subr.mxu0 0.0
    %3029 = vmatpush1.msra.mxu0 %v3002
    %3030 = vmatprep.subr.mxu0 0.0
    %3031 = vmatpush1.msra.mxu0 0.0
    %3032 = vmatprep.subr.mxu0 0.0
    %3033 = vmatpush1.msra.mxu0 0.0
    %3034 = vmatprep.subr.mxu0 0.0
    %3035 = vmatpush1.msra.mxu0 0.0
    %3036 = vmatprep.subr.mxu0 0.0
    %3037 = vmatpush1.msra.mxu0 0.0
    %3038 = vmatprep.subr.mxu0 0.0
    %3039 = vmatpush1.msra.mxu0 0.0
    %3040 = vmatprep.subr.mxu0 0.0
    %3041 = vmatpush1.msra.mxu0 0.0
    %3042 = vmatprep.subr.mxu0 0.0
    %3043 = vmatpush1.msra.mxu0 0.0
    %3044 = vmatprep.subr.mxu0 0.0
    %3045 = vmatpush1.msra.mxu0 0.0
    %3046 = vmatprep.subr.mxu0 0.0
    %3047 = vmatpush1.msra.mxu0 0.0
    %3048 = vmatprep.subr.mxu0 0.0
    %3049 = vmatpush1.msra.mxu0 0.0
    %3050 = vmatprep.subr.mxu0 0.0
    %3051 = vmatpush1.msra.mxu0 0.0
    %3052 = vmatprep.subr.mxu0 0.0
    %3053 = vmatpush1.msra.mxu0 0.0
    %3054 = vmatprep.subr.mxu0 0.0
    %3055 = vmatpush1.msra.mxu0 0.0
    %3056 = vmatprep.subr.mxu0 0.0
    %3057 = vmatpush1.msra.mxu0 0.0
    %3058 = vmatprep.subr.mxu0 0.0
    %3059 = vmatpush1.msra.mxu0 0.0
    %3060 = vmatprep.subr.mxu0 0.0
    %3061 = vmatpush1.msra.mxu0 0.0
    %3062 = vmatprep.subr.mxu0 0.0
    %3063 = vmatpush1.msra.mxu0 0.0
    %3064 = vmatprep.subr.mxu0 0.0
    %3065 = vmatpush1.msra.mxu0 0.0
    %3066 = vmatprep.subr.mxu0 0.0
    %3067 = vmatpush1.msra.mxu0 0.0
    %3068 = vmatprep.subr.mxu0 0.0
    %3069 = vmatpush1.msra.mxu0 0.0
    %3070 = vmatprep.subr.mxu0 0.0
    %3071 = vmatpush1.msra.mxu0 0.0
    %3072 = vmatprep.subr.mxu0 0.0
    %3073 = vmatpush1.msra.mxu0 0.0
    %3074 = vmatprep.subr.mxu0 0.0
    %3075 = vmatpush1.msra.mxu0 0.0
    %3076 = vmatprep.subr.mxu0 0.0
    %3077 = vmatpush1.msra.mxu0 0.0
    %3078 = vmatprep.subr.mxu0 0.0
    %3079 = vmatpush1.msra.mxu0 0.0
    %3080 = vmatprep.subr.mxu0 0.0
    %3081 = vmatpush1.msra.mxu0 0.0
    %3082 = vmatprep.subr.mxu0 0.0
    %3083 = vmatpush1.msra.mxu0 0.0
    %3084 = vmatprep.subr.mxu0 0.0
    %3085 = vmatpush1.msra.mxu0 0.0
    %3086 = vmatprep.mubr.f32.mxu0 0.0
    %3087 = vmatmul.mubr.f32.gmra.mrb[0].mxu0 %v3011
    %v3088 = vpop.f32.mrb[0].mxu0
    %v3089 = vadd.f32 %v3008, %v3088
    %v3090 = vpop.f32.mrb[0].mxu0
    %3091 = vmatprep.mubr.f32.mxu0 0.0
    %3092 = vmatmul.mubr.f32.gmra.mrb[0].mxu0 %v3014
    %v3093 = vpop.f32.mrb[0].mxu0
    %v3094 = vadd.f32 %v3008, %v3093
    %v3095 = vpop.f32.mrb[0].mxu0
    %3096 = vmatprep.mubr.f32.mxu0 0.0
    %3097 = vmatmul.mubr.f32.gmra.mrb[0].mxu0 %v3017
    %v3098 = vpop.f32.mrb[0].mxu0
    %v3099 = vadd.f32 %v3008, %v3098
    %v3100 = vpop.f32.mrb[0].mxu0
    %3101 = vmatprep.mubr.f32.mxu0 0.0
    %3102 = vmatmul.mubr.f32.gmra.mrb[0].mxu0 %v3020
    %v3103 = vpop.f32.mrb[0].mxu0
    %v3104 = vadd.f32 %v3008, %v3103
    %v3105 = vpop.f32.mrb[0].mxu0
    %3106 = vdwg.mxu0
    %v3107 = vld [vmem:[#allocation31] sm:$0xff]
    %v3108 = vld [vmem:[#allocation31 + $0x8] sm:$0xff]
    %v3109 = vld [vmem:[#allocation31 + $0x10] sm:$0xff]
    %v3110 = vld [vmem:[#allocation31 + $0x18] sm:$0xff]
    %v3111 = vld [vmem:[#allocation32] sm:$0xff]
    %v3112 = vld [vmem:[#allocation32 + $0x8] sm:$0xff]
    %v3113 = vld [vmem:[#allocation32 + $0x10] sm:$0xff]
    %v3114 = vld [vmem:[#allocation32 + $0x18] sm:$0xff]
    %v3119 = vsel %vm1005, %v2732, %v2725
    %v3120 = vsel %vm1007, %v2739, %v3119
    %v3121 = vsel %vm1009, %v2746, %v3120
    %v3122 = vsel %vm650, %v3121, 0
    %3124 = vmatprep.subr.mxu0 0.0
    %3125 = vmatpush1.msra.mxu0 %v3111
    %3126 = vmatprep.subr.mxu0 0.0
    %3127 = vmatpush1.msra.mxu0 %v3112
    %3128 = vmatprep.subr.mxu0 0.0
    %3129 = vmatpush1.msra.mxu0 %v3113
    %3130 = vmatprep.subr.mxu0 0.0
    %3131 = vmatpush1.msra.mxu0 %v3114
    %3132 = vmatprep.subr.mxu0 0.0
    %3133 = vmatpush1.msra.mxu0 0.0
    %3134 = vmatprep.subr.mxu0 0.0
    %3135 = vmatpush1.msra.mxu0 0.0
    %3136 = vmatprep.subr.mxu0 0.0
    %3137 = vmatpush1.msra.mxu0 0.0
    %3138 = vmatprep.subr.mxu0 0.0
    %3139 = vmatpush1.msra.mxu0 0.0
    %3140 = vmatprep.subr.mxu0 0.0
    %3141 = vmatpush1.msra.mxu0 0.0
    %3142 = vmatprep.subr.mxu0 0.0
    %3143 = vmatpush1.msra.mxu0 0.0
    %3144 = vmatprep.subr.mxu0 0.0
    %3145 = vmatpush1.msra.mxu0 0.0
    %3146 = vmatprep.subr.mxu0 0.0
    %3147 = vmatpush1.msra.mxu0 0.0
    %3148 = vmatprep.subr.mxu0 0.0
    %3149 = vmatpush1.msra.mxu0 0.0
    %3150 = vmatprep.subr.mxu0 0.0
    %3151 = vmatpush1.msra.mxu0 0.0
    %3152 = vmatprep.subr.mxu0 0.0
    %3153 = vmatpush1.msra.mxu0 0.0
    %3154 = vmatprep.subr.mxu0 0.0
    %3155 = vmatpush1.msra.mxu0 0.0
    %3156 = vmatprep.subr.mxu0 0.0
    %3157 = vmatpush1.msra.mxu0 0.0
    %3158 = vmatprep.subr.mxu0 0.0
    %3159 = vmatpush1.msra.mxu0 0.0
    %3160 = vmatprep.subr.mxu0 0.0
    %3161 = vmatpush1.msra.mxu0 0.0
    %3162 = vmatprep.subr.mxu0 0.0
    %3163 = vmatpush1.msra.mxu0 0.0
    %3164 = vmatprep.subr.mxu0 0.0
    %3165 = vmatpush1.msra.mxu0 0.0
    %3166 = vmatprep.subr.mxu0 0.0
    %3167 = vmatpush1.msra.mxu0 0.0
    %3168 = vmatprep.subr.mxu0 0.0
    %3169 = vmatpush1.msra.mxu0 0.0
    %3170 = vmatprep.subr.mxu0 0.0
    %3171 = vmatpush1.msra.mxu0 0.0
    %3172 = vmatprep.subr.mxu0 0.0
    %3173 = vmatpush1.msra.mxu0 0.0
    %3174 = vmatprep.subr.mxu0 0.0
    %3175 = vmatpush1.msra.mxu0 0.0
    %3176 = vmatprep.subr.mxu0 0.0
    %3177 = vmatpush1.msra.mxu0 0.0
    %3178 = vmatprep.subr.mxu0 0.0
    %3179 = vmatpush1.msra.mxu0 0.0
    %3180 = vmatprep.subr.mxu0 0.0
    %3181 = vmatpush1.msra.mxu0 0.0
    %3182 = vmatprep.subr.mxu0 0.0
    %3183 = vmatpush1.msra.mxu0 0.0
    %3184 = vmatprep.subr.mxu0 0.0
    %3185 = vmatpush1.msra.mxu0 0.0
    %3186 = vmatprep.subr.mxu0 0.0
    %3187 = vmatpush1.msra.mxu0 0.0
    %3188 = vmatprep.mubr.f32.mxu0 0.0
    %3189 = vmatmul.mubr.f32.gmra.mrb[0].mxu0 %v3122
    %v3190 = vpop.f32.mrb[0].mxu0
    %v3191 = vadd.f32 0.0, %v3190
    %v3192 = vpop.f32.mrb[0].mxu0
    %3193 = vdwg.mxu0
    %v3196 = vunpack.c.l.s4 1966171168
    %v3197 = vunpack.c.0.s8 %v3196
    %v3198 = vlaneseq
    %v3199 = vshrl.u32 %v3198, 7
    %v3200 = vsub.s32 %v3197, %v3199
    %v3201 = vrot.slane %v3191, %v3200
    %v3202 = vcombine.high %v3201, %v3201
    %v3204 = vunpack.c.l.s4 1966171168
    %v3205 = vunpack.c.0.s8 %v3204
    %v3206 = vlaneseq
    %v3207 = vshrl.u32 %v3206, 7
    %v3208 = vsub.s32 %v3205, %v3207
    %v3209 = vrot.slane %v3201, %v3208
    %v3211 = vunpack.c.l.s4 1966171168
    %v3212 = vunpack.c.0.s8 %v3211
    %v3213 = vlaneseq
    %v3214 = vshrl.u32 %v3213, 7
    %v3215 = vsub.s32 %v3212, %v3214
    %v3216 = vrot.slane %v3202, %v3215
    %v3217 = vcombine.high %v3209, %v3209
    %v3218 = vcombine.high %v3216, %v3216
    %v3219 = vlaneseq
    %v3220 = vshrl.u32 %v3219, 7
    %v3221 = vsub.s32 0, %v3220
    %v3222 = vrot.slane %v3209, %v3221
    %v3223 = vlaneseq
    %v3224 = vshrl.u32 %v3223, 7
    %v3225 = vsub.s32 0, %v3224
    %v3226 = vrot.slane %v3216, %v3225
    %v3227 = vlaneseq
    %v3228 = vshrl.u32 %v3227, 7
    %v3229 = vsub.s32 0, %v3228
    %v3230 = vrot.slane %v3217, %v3229
    %v3231 = vlaneseq
    %v3232 = vshrl.u32 %v3231, 7
    %v3233 = vsub.s32 0, %v3232
    %v3234 = vrot.slane %v3218, %v3233
    %v3240 = vsel %vm650, %v2715, 0
    %v3243 = vsel %vm650, %v2716, 0
    %v3246 = vsel %vm650, %v2717, 0
    %v3249 = vsel %vm650, %v2718, 0
    %3251 = vmatprep.subr.mxu0 0.0
    %3252 = vmatpush1.msra.mxu0 %v3107
    %3253 = vmatprep.subr.mxu0 0.0
    %3254 = vmatpush1.msra.mxu0 %v3108
    %3255 = vmatprep.subr.mxu0 0.0
    %3256 = vmatpush1.msra.mxu0 %v3109
    %3257 = vmatprep.subr.mxu0 0.0
    %3258 = vmatpush1.msra.mxu0 %v3110
    %3259 = vmatprep.subr.mxu0 0.0
    %3260 = vmatpush1.msra.mxu0 0.0
    %3261 = vmatprep.subr.mxu0 0.0
    %3262 = vmatpush1.msra.mxu0 0.0
    %3263 = vmatprep.subr.mxu0 0.0
    %3264 = vmatpush1.msra.mxu0 0.0
    %3265 = vmatprep.subr.mxu0 0.0
    %3266 = vmatpush1.msra.mxu0 0.0
    %3267 = vmatprep.subr.mxu0 0.0
    %3268 = vmatpush1.msra.mxu0 0.0
    %3269 = vmatprep.subr.mxu0 0.0
    %3270 = vmatpush1.msra.mxu0 0.0
    %3271 = vmatprep.subr.mxu0 0.0
    %3272 = vmatpush1.msra.mxu0 0.0
    %3273 = vmatprep.subr.mxu0 0.0
    %3274 = vmatpush1.msra.mxu0 0.0
    %3275 = vmatprep.subr.mxu0 0.0
    %3276 = vmatpush1.msra.mxu0 0.0
    %3277 = vmatprep.subr.mxu0 0.0
    %3278 = vmatpush1.msra.mxu0 0.0
    %3279 = vmatprep.subr.mxu0 0.0
    %3280 = vmatpush1.msra.mxu0 0.0
    %3281 = vmatprep.subr.mxu0 0.0
    %3282 = vmatpush1.msra.mxu0 0.0
    %3283 = vmatprep.subr.mxu0 0.0
    %3284 = vmatpush1.msra.mxu0 0.0
    %3285 = vmatprep.subr.mxu0 0.0
    %3286 = vmatpush1.msra.mxu0 0.0
    %3287 = vmatprep.subr.mxu0 0.0
    %3288 = vmatpush1.msra.mxu0 0.0
    %3289 = vmatprep.subr.mxu0 0.0
    %3290 = vmatpush1.msra.mxu0 0.0
    %3291 = vmatprep.subr.mxu0 0.0
    %3292 = vmatpush1.msra.mxu0 0.0
    %3293 = vmatprep.subr.mxu0 0.0
    %3294 = vmatpush1.msra.mxu0 0.0
    %3295 = vmatprep.subr.mxu0 0.0
    %3296 = vmatpush1.msra.mxu0 0.0
    %3297 = vmatprep.subr.mxu0 0.0
    %3298 = vmatpush1.msra.mxu0 0.0
    %3299 = vmatprep.subr.mxu0 0.0
    %3300 = vmatpush1.msra.mxu0 0.0
    %3301 = vmatprep.subr.mxu0 0.0
    %3302 = vmatpush1.msra.mxu0 0.0
    %3303 = vmatprep.subr.mxu0 0.0
    %3304 = vmatpush1.msra.mxu0 0.0
    %3305 = vmatprep.subr.mxu0 0.0
    %3306 = vmatpush1.msra.mxu0 0.0
    %3307 = vmatprep.subr.mxu0 0.0
    %3308 = vmatpush1.msra.mxu0 0.0
    %3309 = vmatprep.subr.mxu0 0.0
    %3310 = vmatpush1.msra.mxu0 0.0
    %3311 = vmatprep.subr.mxu0 0.0
    %3312 = vmatpush1.msra.mxu0 0.0
    %3313 = vmatprep.subr.mxu0 0.0
    %3314 = vmatpush1.msra.mxu0 0.0
    %3315 = vmatprep.mubr.f32.mxu0 0.0
    %3316 = vmatmul.mubr.f32.gmra.mrb[0].mxu0 %v3240
    %v3317 = vpop.f32.mrb[0].mxu0
    %v3318 = vadd.f32 %v3222, %v3317
    %v3319 = vpop.f32.mrb[0].mxu0
    %3320 = vmatprep.mubr.f32.mxu0 0.0
    %3321 = vmatmul.mubr.f32.gmra.mrb[0].mxu0 %v3243
    %v3322 = vpop.f32.mrb[0].mxu0
    %v3323 = vadd.f32 %v3226, %v3322
    %v3324 = vpop.f32.mrb[0].mxu0
    %3325 = vmatprep.mubr.f32.mxu0 0.0
    %3326 = vmatmul.mubr.f32.gmra.mrb[0].mxu0 %v3246
    %v3327 = vpop.f32.mrb[0].mxu0
    %v3328 = vadd.f32 %v3230, %v3327
    %v3329 = vpop.f32.mrb[0].mxu0
    %3330 = vmatprep.mubr.f32.mxu0 0.0
    %3331 = vmatmul.mubr.f32.gmra.mrb[0].mxu0 %v3249
    %v3332 = vpop.f32.mrb[0].mxu0
    %v3333 = vadd.f32 %v3234, %v3332
    %v3334 = vpop.f32.mrb[0].mxu0
    %3335 = vdwg.mxu0
    %v3336 = vadd.f32 %v3318, %v3089
    %v3337 = vadd.f32 %v3323, %v3094
    %v3338 = vadd.f32 %v3328, %v3099
    %v3339 = vadd.f32 %v3333, %v3104
    %v3340 = vsel %vm650, %v3336, -inf
    %v3341 = vrot.slane %v3340, 4
    %v3342 = vmax.f32 %v3340, %v3341
    %v3343 = vrot.slane %v3342, 2
    %v3344 = vmax.f32 %v3342, %v3343
    %v3345 = vrot.slane %v3344, 1
    %v3346 = vmax.f32 %v3344, %v3345
    %v3347 = vsel %vm650, %v3337, -inf
    %v3348 = vrot.slane %v3347, 4
    %v3349 = vmax.f32 %v3347, %v3348
    %v3350 = vrot.slane %v3349, 2
    %v3351 = vmax.f32 %v3349, %v3350
    %v3352 = vrot.slane %v3351, 1
    %v3353 = vmax.f32 %v3351, %v3352
    %v3354 = vsel %vm650, %v3338, -inf
    %v3355 = vrot.slane %v3354, 4
    %v3356 = vmax.f32 %v3354, %v3355
    %v3357 = vrot.slane %v3356, 2
    %v3358 = vmax.f32 %v3356, %v3357
    %v3359 = vrot.slane %v3358, 1
    %v3360 = vmax.f32 %v3358, %v3359
    %v3361 = vsel %vm650, %v3339, -inf
    %v3362 = vrot.slane %v3361, 4
    %v3363 = vmax.f32 %v3361, %v3362
    %v3364 = vrot.slane %v3363, 2
    %v3365 = vmax.f32 %v3363, %v3364
    %v3366 = vrot.slane %v3365, 1
    %v3367 = vmax.f32 %v3365, %v3366
    %v3368 = vmax.f32 %v3346, 0.0
    %v3369 = vmax.f32 %v3353, 0.0
    %v3370 = vmax.f32 %v3360, 0.0
    %v3371 = vmax.f32 %v3367, 0.0
    %v3372 = vld [vmem:[%s73] sm:$0xff]
    %v3373 = vld [vmem:[%s73 + $0x8] sm:$0xff]
    %v3374 = vld [vmem:[%s73 + $0x10] sm:$0xff]
    %v3375 = vld [vmem:[%s73 + $0x18] sm:$0xff]
    %v3376 = vld [vmem:[%s75] sm:$0x1]
    %v3378 = vlaneseq
    %v3379 = vshrl.u32 %v3378, 7
    %v3380 = vsub.s32 0, %v3379
    %v3381 = vrot.slane %v3376, %v3380
    %v3387 = vsel %vm1005, %v3369, %v3368
    %v3388 = vsel %vm1007, %v3370, %v3387
    %v3389 = vsel %vm1009, %v3371, %v3388
    %v3390 = vsel %vm650, %v3389, 0
    %3392 = vmatprep.subr.mxu0 0.0
    %3393 = vmatpush1.msra.mxu0 %v3372
    %3394 = vmatprep.subr.mxu0 0.0
    %3395 = vmatpush1.msra.mxu0 %v3373
    %3396 = vmatprep.subr.mxu0 0.0
    %3397 = vmatpush1.msra.mxu0 %v3374
    %3398 = vmatprep.subr.mxu0 0.0
    %3399 = vmatpush1.msra.mxu0 %v3375
    %3400 = vmatprep.subr.mxu0 0.0
    %3401 = vmatpush1.msra.mxu0 0.0
    %3402 = vmatprep.subr.mxu0 0.0
    %3403 = vmatpush1.msra.mxu0 0.0
    %3404 = vmatprep.subr.mxu0 0.0
    %3405 = vmatpush1.msra.mxu0 0.0
    %3406 = vmatprep.subr.mxu0 0.0
    %3407 = vmatpush1.msra.mxu0 0.0
    %3408 = vmatprep.subr.mxu0 0.0
    %3409 = vmatpush1.msra.mxu0 0.0
    %3410 = vmatprep.subr.mxu0 0.0
    %3411 = vmatpush1.msra.mxu0 0.0
    %3412 = vmatprep.subr.mxu0 0.0
    %3413 = vmatpush1.msra.mxu0 0.0
    %3414 = vmatprep.subr.mxu0 0.0
    %3415 = vmatpush1.msra.mxu0 0.0
    %3416 = vmatprep.subr.mxu0 0.0
    %3417 = vmatpush1.msra.mxu0 0.0
    %3418 = vmatprep.subr.mxu0 0.0
    %3419 = vmatpush1.msra.mxu0 0.0
    %3420 = vmatprep.subr.mxu0 0.0
    %3421 = vmatpush1.msra.mxu0 0.0
    %3422 = vmatprep.subr.mxu0 0.0
    %3423 = vmatpush1.msra.mxu0 0.0
    %3424 = vmatprep.subr.mxu0 0.0
    %3425 = vmatpush1.msra.mxu0 0.0
    %3426 = vmatprep.subr.mxu0 0.0
    %3427 = vmatpush1.msra.mxu0 0.0
    %3428 = vmatprep.subr.mxu0 0.0
    %3429 = vmatpush1.msra.mxu0 0.0
    %3430 = vmatprep.subr.mxu0 0.0
    %3431 = vmatpush1.msra.mxu0 0.0
    %3432 = vmatprep.subr.mxu0 0.0
    %3433 = vmatpush1.msra.mxu0 0.0
    %3434 = vmatprep.subr.mxu0 0.0
    %3435 = vmatpush1.msra.mxu0 0.0
    %3436 = vmatprep.subr.mxu0 0.0
    %3437 = vmatpush1.msra.mxu0 0.0
    %3438 = vmatprep.subr.mxu0 0.0
    %3439 = vmatpush1.msra.mxu0 0.0
    %3440 = vmatprep.subr.mxu0 0.0
    %3441 = vmatpush1.msra.mxu0 0.0
    %3442 = vmatprep.subr.mxu0 0.0
    %3443 = vmatpush1.msra.mxu0 0.0
    %3444 = vmatprep.subr.mxu0 0.0
    %3445 = vmatpush1.msra.mxu0 0.0
    %3446 = vmatprep.subr.mxu0 0.0
    %3447 = vmatpush1.msra.mxu0 0.0
    %3448 = vmatprep.subr.mxu0 0.0
    %3449 = vmatpush1.msra.mxu0 0.0
    %3450 = vmatprep.subr.mxu0 0.0
    %3451 = vmatpush1.msra.mxu0 0.0
    %3452 = vmatprep.subr.mxu0 0.0
    %3453 = vmatpush1.msra.mxu0 0.0
    %3454 = vmatprep.subr.mxu0 0.0
    %3455 = vmatpush1.msra.mxu0 0.0
    %3456 = vmatprep.mubr.f32.mxu0 0.0
    %3457 = vmatmul.mubr.f32.gmra.mrb[0].mxu0 %v3390
    %v3458 = vpop.f32.mrb[0].mxu0
    %v3459 = vadd.f32 %v3381, %v3458
    %v3460 = vpop.f32.mrb[0].mxu0
    %3461 = vdwg.mxu0
    %vm3462 = vcmask 60416
    %3463 = vst.msk [vmem:[#allocation34] sm:$0xf] %vm3462, %v3459
    // Predicated region
    $region234: #{tpu_custom_call.1} parent=1 // pred_check
      _
    $region235: #{tpu_custom_call.1} parent=1 // pred_check_branch
      %3465 = sbr.rel (0) target = $region237
    $region236: #{tpu_custom_call.1} parent=1 // pred_region
      %s3467 = ssub.s32 64, 64
      %3468 = vsyncadd [#allocation4], %s3467
      %s3470 = sshll.u32 [#allocation34], 4
      %s3471 = int_to_ptr.vmem [resolvable:$true] %s3470
      %3473 = dma.vmem_to_hbm [thread:$0]  %s3471, 64, %s77, [#allocation4]
    $region237: #{tpu_custom_call.1} parent=1 // pred_fallthru
      _
    // Predicated region
    $region238: #{tpu_custom_call.1} parent=1 // pred_check
      _
    $region239: #{tpu_custom_call.1} parent=1 // pred_check_branch
      %3475 = sbr.rel (0) target = $region241
    $region240: #{tpu_custom_call.1} parent=1 // pred_region
      %3476 = dma.done [#allocation4], 64
    $region241: #{tpu_custom_call.1} parent=1 // pred_fallthru
      _
    %3477 = vsyncpa [#allocation3], 1
    %3478 = vsyncpa [#allocation6], 1
    %3479 = vsyncpa [#allocation9], 1
    %3480 = vsyncpa [#allocation12], 1
    %3481 = vsyncpa [#allocation15], 1
    %3482 = vsyncpa [#allocation18], 1
    %3483 = vsyncpa [#allocation21], 1
    %3484 = vsyncpa [#allocation24], 1
    %3485 = vsyncpa [#allocation27], 1
    %3486 = vsyncpa [#allocation30], 1
    %3487 = vsyncpa [#allocation33], 1
    %3488 = vsyncpa [#allocation4], 1

</llo_original>
